<compile_context>
chip_gen: v5e
topology: v5e:2x2
jax: 0.10.0
libtpu: 0.0.40
codegen_flags: <defaults>
</compile_context>

<pallas_src>
import functools

import jax
import jax.numpy as jnp
from jax.experimental import pallas as pl
from jax.experimental.pallas import tpu as pltpu

EPS = 1e-5


def _round_up(v, m):
    return (v + m - 1) // m * m


# ----------------------------------------------------------------------------
# Fused Pallas kernel: one grid step == one batch image
# ----------------------------------------------------------------------------
def _bottleneck_kernel(*refs, h, w, cb, pad, dilation, wp, hp_buf,
                       separate_residual):
    if separate_residual:
        (x_ref, res_ref, w1_ref, s1_ref, b1_ref, w2_ref, s2_ref, b2_ref,
         w3_ref, s3_ref, b3_ref, o_ref, o1p_ref) = refs
    else:
        (x_ref, w1_ref, s1_ref, b1_ref, w2_ref, s2_ref, b2_ref,
         w3_ref, s3_ref, b3_ref, o_ref, o1p_ref) = refs
        res_ref = None

    # ---- conv1 (1x1) + bn1 + relu  (bf16 cast happens in-kernel) -----------
    x = x_ref[0]                                              # (h*w, cin) f32
    y1 = jnp.dot(x.astype(jnp.bfloat16), w1_ref[...],
                 preferred_element_type=jnp.float32)
    y1 = jnp.maximum(y1 * s1_ref[...] + b1_ref[...], 0.0)     # (h*w, cb) f32

    # ---- refresh only the halo of the padded conv2 buffer ------------------
    # Scratch persists across grid steps and the interior is fully rewritten
    # below, so only the thin zero border needs (re)establishing.  Re-zeroing
    # it every step (instead of once at program_id==0) stays correct even if
    # the "parallel" batch axis is split across TensorCores.
    zdt = o1p_ref.dtype
    o1p_ref[0:pad, :, :] = jnp.zeros((pad, wp, cb), zdt)
    o1p_ref[pad + h:hp_buf, :, :] = jnp.zeros((hp_buf - pad - h, wp, cb), zdt)
    o1p_ref[:, 0:pad, :] = jnp.zeros((hp_buf, pad, cb), zdt)
    o1p_ref[:, pad + w:wp, :] = jnp.zeros((hp_buf, wp - pad - w, cb), zdt)

    # interior = relu(bn1(conv1(x))), cast to bf16 for the MXU
    o1p_ref[pad:pad + h, pad:pad + w, :] = y1.reshape(h, w, cb).astype(zdt)

    # ---- conv2 (3x3, stride 1, dilation) as 9 shifted matmuls --------------
    # The padded buffer is flattened to (hp_buf*wp, cb); wp % 8 == 0, so the
    # flatten and every ky row shift are tile-aligned (free) slices.  Only the
    # kx = 1, 2 column shifts cost one unaligned flat slice each.  Outputs are
    # computed over the full padded width and the valid columns are extracted
    # once at the end.  Accumulation is a local f32 value (no scratch RMW).
    # TODO(synk): for cb <= 64 the nine K=cb matmuls could be merged into one
    # K=9*cb matmul (better MXU depth on v6e/v7x); on v7x the MRB could
    # accumulate the taps in the matmul result buffer directly.
    buf = o1p_ref[...].reshape(hp_buf * wp, cb)               # cheap: wp 8-aligned
    n_rows = h * wp
    span = (h + 2 * pad) * wp
    acc = jnp.zeros((n_rows, cb), jnp.float32)
    for kx in range(3):
        s = kx * dilation
        shifted = buf if s == 0 else buf[s:s + span, :]
        for ky in range(3):
            start = ky * dilation * wp                        # multiple of wp
            tap = shifted[start:start + n_rows, :]
            acc = acc + jnp.dot(tap, w2_ref[ky * 3 + kx],
                                preferred_element_type=jnp.float32)

    # keep the valid output columns, then bn2 + relu
    acc = acc.reshape(h, wp, cb)[:, :w, :].reshape(h * w, cb)
    y2 = jnp.maximum(acc * s2_ref[...] + b2_ref[...], 0.0)

    # ---- conv3 (1x1) + bn3 + residual + relu --------------------------------
    y3 = jnp.dot(y2.astype(jnp.bfloat16), w3_ref[...],
                 preferred_element_type=jnp.float32)
    res = x if res_ref is None else res_ref[0]                # f32, no extra DMA
    out = jnp.maximum(y3 * s3_ref[...] + b3_ref[...] + res, 0.0)
    # NOTE: output kept f32 for parity with the PyTorch module; emit bf16 here
    # (keeping the add/relu in f32) if downstream tolerates it.
    o_ref[0] = out.astype(o_ref.dtype)


def _tile_batch(shape):
    """Block = one batch image; last two dims are full extents (layout rule)."""
    zeros = (0,) * (len(shape) - 1)
    return pl.BlockSpec((1,) + tuple(shape[1:]), lambda i: (i,) + zeros)


def _replicated(shape):
    """Whole (small) array, identical for every grid step (weights / BN)."""
    zeros = (0,) * len(shape)
    return pl.BlockSpec(tuple(shape), lambda i: zeros)


# ----------------------------------------------------------------------------
# Module: parameters + forward
# ----------------------------------------------------------------------------
def _fold_bn(gamma, beta, mean, var, eps=EPS):
    scale = gamma / jnp.sqrt(var + eps)
    return scale, beta - mean * scale


def init_bottleneck_params(key, inplanes, planes):
    """Deterministic synthetic parameters (shapes match the PyTorch __init__)."""
    bottle = planes // 2  # expansion = 2
    ks = jax.random.split(key, 6)

    def bn_params(k, c):
        k1, k2, k3, k4 = jax.random.split(k, 4)
        gamma = 1.0 + 0.1 * jax.random.normal(k1, (c,), jnp.float32)
        beta = 0.1 * jax.random.normal(k2, (c,), jnp.float32)
        mean = 0.1 * jax.random.normal(k3, (c,), jnp.float32)
        var = jax.random.uniform(k4, (c,), jnp.float32, minval=0.5, maxval=1.5)
        return gamma, beta, mean, var

    # Weights stored in HWIO layout (JAX convention).
    w1 = 0.2 * jax.random.normal(ks[0], (1, 1, inplanes, bottle), jnp.float32)
    w2 = 0.2 * jax.random.normal(ks[1], (3, 3, bottle, bottle), jnp.float32)
    w3 = 0.2 * jax.random.normal(ks[2], (1, 1, bottle, planes), jnp.float32)
    return dict(w1=w1, bn1=bn_params(ks[3], bottle),
                w2=w2, bn2=bn_params(ks[4], bottle),
                w3=w3, bn3=bn_params(ks[5], planes))


def bottleneck_forward(x_nchw, params, stride=1, dilation=1, residual=None):
    """Pallas implementation of Bottleneck.forward.  Input/output are NCHW."""
    if stride != 1:
        # TODO(synk): stride>1 (DLA's downsampling bottlenecks with projected
        # residual) is not implemented in the Pallas path.
        raise NotImplementedError("Pallas Bottleneck kernel supports stride=1 only")

    x = jnp.transpose(x_nchw, (0, 2, 3, 1)).astype(jnp.float32)  # NHWC f32
    n, h, w, cin = x.shape
    w1, w2, w3 = params["w1"], params["w2"], params["w3"]
    cb, cout = w1.shape[-1], w3.shape[-1]

    pad = dilation
    ho, wo = h, w                           # stride == 1, padding == dilation
    wp = _round_up(w + 2 * pad, 8)          # padded width, 8-aligned sublanes
    hp_buf = h + 2 * pad + 1                # +1 guard row for flat kx shifts

    separate_residual = residual is not None
    if not separate_residual and cin != cout:
        raise ValueError("default residual (= input) requires inplanes == planes")

    s1, b1 = _fold_bn(*params["bn1"])
    s2, b2 = _fold_bn(*params["bn2"])
    s3, b3 = _fold_bn(*params["bn3"])

    # Activation goes in ONCE, as f32; the bf16 MXU cast happens in-kernel.
    x_in = x.reshape(n, h * w, cin)
    w1m = w1.reshape(cin, cb).astype(jnp.bfloat16)
    w2m = w2.reshape(9, cb, cb).astype(jnp.bfloat16)            # [ky*3+kx, ci, co]
    w3m = w3.reshape(cb, cout).astype(jnp.bfloat16)
    s1, b1 = s1.reshape(1, cb), b1.reshape(1, cb)
    s2, b2 = s2.reshape(1, cb), b2.reshape(1, cb)
    s3, b3 = s3.reshape(1, cout), b3.reshape(1, cout)

    operands = [x_in]
    in_specs = [_tile_batch(x_in.shape)]
    if separate_residual:
        res = jnp.transpose(residual, (0, 2, 3, 1)).astype(jnp.float32)
        res = res.reshape(n, ho * wo, cout)
        operands.append(res)
        in_specs.append(_tile_batch(res.shape))
    small = (w1m, s1, b1, w2m, s2, b2, w3m, s3, b3)
    operands += list(small)
    in_specs += [_replicated(a.shape) for a in small]

    # Generation-aware VMEM budget (<= 3/4 of physical, capped at 96 MiB):
    # ~48 MiB on v7x (64 MiB physical), 96 MiB on v5e/v6e (128 MiB physical).
    try:
        vmem_cap = int(pltpu.get_tpu_info().vmem_capacity_bytes)
    except Exception:
        vmem_cap = 64 * 1024 * 1024
    vmem_limit = int(min(vmem_cap * 3 // 4, 96 * 1024 * 1024))
    # TODO(synk): very large stages (e.g. 112x112x128 on v7x) should add a
    # spatial row-block grid axis with a `dilation`-row halo instead of holding
    # the whole image per grid step.

    kernel = functools.partial(
        _bottleneck_kernel, h=h, w=w, cb=cb, pad=pad, dilation=dilation,
        wp=wp, hp_buf=hp_buf, separate_residual=separate_residual)

    out_flat = pl.pallas_call(
        kernel,
        out_shape=jax.ShapeDtypeStruct((n, ho * wo, cout), jnp.float32),
        grid=(n,),
        in_specs=in_specs,
        out_specs=_tile_batch((n, ho * wo, cout)),
        scratch_shapes=[pltpu.VMEM((hp_buf, wp, cb), jnp.bfloat16)],
        compiler_params=pltpu.CompilerParams(
            dimension_semantics=("parallel",),
            vmem_limit_bytes=vmem_limit),
    )(*operands)

    out = out_flat.reshape(n, ho, wo, cout)
    return jnp.transpose(out, (0, 3, 1, 2))  # back to NCHW


# ----------------------------------------------------------------------------
# Pure-JAX f32 reference (for correctness check only)
# ----------------------------------------------------------------------------
def bottleneck_reference(x_nchw, params, stride=1, dilation=1):
    x = jnp.transpose(x_nchw, (0, 2, 3, 1)).astype(jnp.float32)

    def bn(y, p):
        g, b, m, v = p
        return (y - m) / jnp.sqrt(v + EPS) * g + b

    def conv(y, w, s=1, d=1, pad=0):
        return jax.lax.conv_general_dilated(
            y, w, (s, s), [(pad, pad), (pad, pad)], rhs_dilation=(d, d),
            dimension_numbers=("NHWC", "HWIO", "NHWC"))

    out = jax.nn.relu(bn(conv(x, params["w1"]), params["bn1"]))
    out = jax.nn.relu(bn(conv(out, params["w2"], stride, dilation, dilation),
                         params["bn2"]))
    out = bn(conv(out, params["w3"]), params["bn3"]) + x
    return jnp.transpose(jax.nn.relu(out), (0, 3, 1, 2))


# ----------------------------------------------------------------------------
if __name__ == "__main__":
    key = jax.random.PRNGKey(0)
    k_x, k_p = jax.random.split(key)

    # Small shapes consistent with the module: NCHW, inplanes == planes so the
    # default residual (= feat) add is well-defined; stride=1, dilation=1.
    N, C, H, W = 2, 4, 16, 16
    x = jax.random.normal(k_x, (N, C, H, W), jnp.float32)
    params = init_bottleneck_params(k_p, inplanes=C, planes=C)

    out = jax.block_until_ready(bottleneck_forward(x, params, stride=1, dilation=1))
    ref = jax.block_until_ready(bottleneck_reference(x, params, stride=1, dilation=1))

    assert out.shape == (N, C, H, W), out.shape
    err = jnp.max(jnp.abs(out - ref))
    # bf16 MXU operands (f32 accumulation) -> relaxed tolerance vs f32 reference
    assert jnp.allclose(out, ref, atol=5e-2, rtol=5e-2), f"max abs err {err}"

    print("KERNEL_OK")
</pallas_src>

<mosaic_0001>
module attributes {stable_mosaic.version = 11 : i64} {
  func.func @_bottleneck_kernel(%arg0: i32, %arg1: memref<1x256x4xf32, #tpu.memory_space<vmem>>, %arg2: memref<4x2xbf16, #tpu.memory_space<vmem>>, %arg3: memref<1x2xf32, #tpu.memory_space<vmem>>, %arg4: memref<1x2xf32, #tpu.memory_space<vmem>>, %arg5: memref<9x2x2xbf16, #tpu.memory_space<vmem>>, %arg6: memref<1x2xf32, #tpu.memory_space<vmem>>, %arg7: memref<1x2xf32, #tpu.memory_space<vmem>>, %arg8: memref<2x4xbf16, #tpu.memory_space<vmem>>, %arg9: memref<1x4xf32, #tpu.memory_space<vmem>>, %arg10: memref<1x4xf32, #tpu.memory_space<vmem>>, %arg11: memref<1x256x4xf32, #tpu.memory_space<vmem>>, %arg12: memref<19x24x2xbf16, #tpu.memory_space<vmem>>) attributes {dimension_semantics = [#tpu.dimension_semantics<parallel>], iteration_bounds = array<i64: 2>, scalar_prefetch = 0 : i64, scratch_operands = 1 : i64, tpu.core_type = #tpu.core_type<tc>, window_params = [{transform_indices = @transform_0, window_bounds = array<i64: 1, 256, 4>}, {pipeline_mode = #tpu.pipeline_mode<synchronous>, transform_indices = @transform_1, window_bounds = array<i64: 4, 2>}, {pipeline_mode = #tpu.pipeline_mode<synchronous>, transform_indices = @transform_2, window_bounds = array<i64: 1, 2>}, {pipeline_mode = #tpu.pipeline_mode<synchronous>, transform_indices = @transform_3, window_bounds = array<i64: 1, 2>}, {pipeline_mode = #tpu.pipeline_mode<synchronous>, transform_indices = @transform_4, window_bounds = array<i64: 9, 2, 2>}, {pipeline_mode = #tpu.pipeline_mode<synchronous>, transform_indices = @transform_5, window_bounds = array<i64: 1, 2>}, {pipeline_mode = #tpu.pipeline_mode<synchronous>, transform_indices = @transform_6, window_bounds = array<i64: 1, 2>}, {pipeline_mode = #tpu.pipeline_mode<synchronous>, transform_indices = @transform_7, window_bounds = array<i64: 2, 4>}, {pipeline_mode = #tpu.pipeline_mode<synchronous>, transform_indices = @transform_8, window_bounds = array<i64: 1, 4>}, {pipeline_mode = #tpu.pipeline_mode<synchronous>, transform_indices = @transform_9, window_bounds = array<i64: 1, 4>}, {transform_indices = @transform_10, window_bounds = array<i64: 1, 256, 4>}]} {
    %c0 = arith.constant 0 : index
    %c0_0 = arith.constant 0 : index
    %c0_1 = arith.constant 0 : index
    %0 = vector.load %arg1[%c0, %c0_0, %c0_1] : memref<1x256x4xf32, #tpu.memory_space<vmem>>, vector<1x256x4xf32>
    %1 = vector.shape_cast %0 : vector<1x256x4xf32> to vector<256x4xf32>
    %2 = arith.truncf %1 : vector<256x4xf32> to vector<256x4xbf16>
    %c0_2 = arith.constant 0 : index
    %c0_3 = arith.constant 0 : index
    %3 = vector.load %arg2[%c0_2, %c0_3] : memref<4x2xbf16, #tpu.memory_space<vmem>>, vector<4x2xbf16>
    %cst = arith.constant dense<0.000000e+00> : vector<256x2xf32>
    %4 = tpu.matmul %2, %3, %cst {dimension_numbers = #tpu.dot_dimension_numbers<[1], [0], [0], [1], [0, 0, 1, 1], [], []>} : vector<256x4xbf16>, vector<4x2xbf16>, vector<256x2xf32> -> vector<256x2xf32>
    %c0_4 = arith.constant 0 : index
    %c0_5 = arith.constant 0 : index
    %5 = vector.load %arg3[%c0_4, %c0_5] : memref<1x2xf32, #tpu.memory_space<vmem>>, vector<1x2xf32>
    %6 = vector.broadcast %5 : vector<1x2xf32> to vector<256x2xf32>
    %7 = arith.mulf %4, %6 : vector<256x2xf32>
    %c0_6 = arith.constant 0 : index
    %c0_7 = arith.constant 0 : index
    %8 = vector.load %arg4[%c0_6, %c0_7] : memref<1x2xf32, #tpu.memory_space<vmem>>, vector<1x2xf32>
    %9 = vector.broadcast %8 : vector<1x2xf32> to vector<256x2xf32>
    %10 = arith.addf %7, %9 : vector<256x2xf32>
    %cst_8 = arith.constant 0.000000e+00 : f32
    %11 = vector.broadcast %cst_8 : f32 to vector<256x2xf32>
    %12 = arith.maximumf %10, %11 : vector<256x2xf32>
    %cst_9 = arith.constant 0.000000e+00 : bf16
    %13 = vector.broadcast %cst_9 : bf16 to vector<1x24x2xbf16>
    %c0_10 = arith.constant 0 : index
    %c0_11 = arith.constant 0 : index
    %c0_12 = arith.constant 0 : index
    %14 = vector.load %arg12[%c0_10, %c0_11, %c0_12] : memref<19x24x2xbf16, #tpu.memory_space<vmem>>, vector<1x24x2xbf16>
    tpu.vector_store %arg12[%c0_10, %c0_11, %c0_12], %13 {strides = array<i32>} : memref<19x24x2xbf16, #tpu.memory_space<vmem>>, vector<1x24x2xbf16>,
    %cst_13 = arith.constant 0.000000e+00 : bf16
    %15 = vector.broadcast %cst_13 : bf16 to vector<2x24x2xbf16>
    %c17 = arith.constant 17 : index
    %c0_14 = arith.constant 0 : index
    %c0_15 = arith.constant 0 : index
    %16 = vector.load %arg12[%c17, %c0_14, %c0_15] : memref<19x24x2xbf16, #tpu.memory_space<vmem>>, vector<2x24x2xbf16>
    tpu.vector_store %arg12[%c17, %c0_14, %c0_15], %15 {strides = array<i32>} : memref<19x24x2xbf16, #tpu.memory_space<vmem>>, vector<2x24x2xbf16>,
    %cst_16 = arith.constant 0.000000e+00 : bf16
    %17 = vector.broadcast %cst_16 : bf16 to vector<19x1x2xbf16>
    %c0_17 = arith.constant 0 : index
    %c0_18 = arith.constant 0 : index
    %c0_19 = arith.constant 0 : index
    %18 = vector.load %arg12[%c0_17, %c0_18, %c0_19] : memref<19x24x2xbf16, #tpu.memory_space<vmem>>, vector<19x1x2xbf16>
    tpu.vector_store %arg12[%c0_17, %c0_18, %c0_19], %17 {strides = array<i32>} : memref<19x24x2xbf16, #tpu.memory_space<vmem>>, vector<19x1x2xbf16>,
    %cst_20 = arith.constant 0.000000e+00 : bf16
    %19 = vector.broadcast %cst_20 : bf16 to vector<19x7x2xbf16>
    %c0_21 = arith.constant 0 : index
    %c17_22 = arith.constant 17 : index
    %c0_23 = arith.constant 0 : index
    %20 = vector.load %arg12[%c0_21, %c17_22, %c0_23] : memref<19x24x2xbf16, #tpu.memory_space<vmem>>, vector<19x7x2xbf16>
    tpu.vector_store %arg12[%c0_21, %c17_22, %c0_23], %19 {strides = array<i32>} : memref<19x24x2xbf16, #tpu.memory_space<vmem>>, vector<19x7x2xbf16>,
    %21 = vector.shape_cast %12 : vector<256x2xf32> to vector<16x16x2xf32>
    %22 = arith.truncf %21 : vector<16x16x2xf32> to vector<16x16x2xbf16>
    %c1 = arith.constant 1 : index
    %c1_24 = arith.constant 1 : index
    %c0_25 = arith.constant 0 : index
    %23 = vector.load %arg12[%c1, %c1_24, %c0_25] : memref<19x24x2xbf16, #tpu.memory_space<vmem>>, vector<16x16x2xbf16>
    tpu.vector_store %arg12[%c1, %c1_24, %c0_25], %22 {strides = array<i32>} : memref<19x24x2xbf16, #tpu.memory_space<vmem>>, vector<16x16x2xbf16>,
    %c0_26 = arith.constant 0 : index
    %c0_27 = arith.constant 0 : index
    %c0_28 = arith.constant 0 : index
    %24 = vector.load %arg12[%c0_26, %c0_27, %c0_28] : memref<19x24x2xbf16, #tpu.memory_space<vmem>>, vector<19x24x2xbf16>
    %25 = vector.shape_cast %24 : vector<19x24x2xbf16> to vector<456x2xbf16>
    %cst_29 = arith.constant 0.000000e+00 : f32
    %26 = vector.broadcast %cst_29 : f32 to vector<384x2xf32>
    %27 = vector.extract_strided_slice %25 {offsets = [0, 0], sizes = [384, 2], strides = [1, 1]} : vector<456x2xbf16> to vector<384x2xbf16>
    %c0_30 = arith.constant 0 : index
    %c0_31 = arith.constant 0 : index
    %c0_32 = arith.constant 0 : index
    %28 = vector.load %arg5[%c0_30, %c0_31, %c0_32] : memref<9x2x2xbf16, #tpu.memory_space<vmem>>, vector<1x2x2xbf16>
    %29 = vector.shape_cast %28 : vector<1x2x2xbf16> to vector<2x2xbf16>
    %cst_33 = arith.constant dense<0.000000e+00> : vector<384x2xf32>
    %30 = tpu.matmul %27, %29, %cst_33 {dimension_numbers = #tpu.dot_dimension_numbers<[1], [0], [0], [1], [0, 0, 1, 1], [], []>} : vector<384x2xbf16>, vector<2x2xbf16>, vector<384x2xf32> -> vector<384x2xf32>
    %31 = arith.addf %26, %30 : vector<384x2xf32>
    %32 = vector.extract_strided_slice %25 {offsets = [24, 0], sizes = [384, 2], strides = [1, 1]} : vector<456x2xbf16> to vector<384x2xbf16>
    %c3 = arith.constant 3 : index
    %c0_34 = arith.constant 0 : index
    %c0_35 = arith.constant 0 : index
    %33 = vector.load %arg5[%c3, %c0_34, %c0_35] : memref<9x2x2xbf16, #tpu.memory_space<vmem>>, vector<1x2x2xbf16>
    %34 = vector.shape_cast %33 : vector<1x2x2xbf16> to vector<2x2xbf16>
    %cst_36 = arith.constant dense<0.000000e+00> : vector<384x2xf32>
    %35 = tpu.matmul %32, %34, %cst_36 {dimension_numbers = #tpu.dot_dimension_numbers<[1], [0], [0], [1], [0, 0, 1, 1], [], []>} : vector<384x2xbf16>, vector<2x2xbf16>, vector<384x2xf32> -> vector<384x2xf32>
    %36 = arith.addf %31, %35 : vector<384x2xf32>
    %37 = vector.extract_strided_slice %25 {offsets = [48, 0], sizes = [384, 2], strides = [1, 1]} : vector<456x2xbf16> to vector<384x2xbf16>
    %c6 = arith.constant 6 : index
    %c0_37 = arith.constant 0 : index
    %c0_38 = arith.constant 0 : index
    %38 = vector.load %arg5[%c6, %c0_37, %c0_38] : memref<9x2x2xbf16, #tpu.memory_space<vmem>>, vector<1x2x2xbf16>
    %39 = vector.shape_cast %38 : vector<1x2x2xbf16> to vector<2x2xbf16>
    %cst_39 = arith.constant dense<0.000000e+00> : vector<384x2xf32>
    %40 = tpu.matmul %37, %39, %cst_39 {dimension_numbers = #tpu.dot_dimension_numbers<[1], [0], [0], [1], [0, 0, 1, 1], [], []>} : vector<384x2xbf16>, vector<2x2xbf16>, vector<384x2xf32> -> vector<384x2xf32>
    %41 = arith.addf %36, %40 : vector<384x2xf32>
    %42 = vector.extract_strided_slice %25 {offsets = [1, 0], sizes = [432, 2], strides = [1, 1]} : vector<456x2xbf16> to vector<432x2xbf16>
    %43 = vector.extract_strided_slice %42 {offsets = [0, 0], sizes = [384, 2], strides = [1, 1]} : vector<432x2xbf16> to vector<384x2xbf16>
    %c1_40 = arith.constant 1 : index
    %c0_41 = arith.constant 0 : index
    %c0_42 = arith.constant 0 : index
    %44 = vector.load %arg5[%c1_40, %c0_41, %c0_42] : memref<9x2x2xbf16, #tpu.memory_space<vmem>>, vector<1x2x2xbf16>
    %45 = vector.shape_cast %44 : vector<1x2x2xbf16> to vector<2x2xbf16>
    %cst_43 = arith.constant dense<0.000000e+00> : vector<384x2xf32>
    %46 = tpu.matmul %43, %45, %cst_43 {dimension_numbers = #tpu.dot_dimension_numbers<[1], [0], [0], [1], [0, 0, 1, 1], [], []>} : vector<384x2xbf16>, vector<2x2xbf16>, vector<384x2xf32> -> vector<384x2xf32>
    %47 = arith.addf %41, %46 : vector<384x2xf32>
    %48 = vector.extract_strided_slice %42 {offsets = [24, 0], sizes = [384, 2], strides = [1, 1]} : vector<432x2xbf16> to vector<384x2xbf16>
    %c4 = arith.constant 4 : index
    %c0_44 = arith.constant 0 : index
    %c0_45 = arith.constant 0 : index
    %49 = vector.load %arg5[%c4, %c0_44, %c0_45] : memref<9x2x2xbf16, #tpu.memory_space<vmem>>, vector<1x2x2xbf16>
    %50 = vector.shape_cast %49 : vector<1x2x2xbf16> to vector<2x2xbf16>
    %cst_46 = arith.constant dense<0.000000e+00> : vector<384x2xf32>
    %51 = tpu.matmul %48, %50, %cst_46 {dimension_numbers = #tpu.dot_dimension_numbers<[1], [0], [0], [1], [0, 0, 1, 1], [], []>} : vector<384x2xbf16>, vector<2x2xbf16>, vector<384x2xf32> -> vector<384x2xf32>
    %52 = arith.addf %47, %51 : vector<384x2xf32>
    %53 = vector.extract_strided_slice %42 {offsets = [48, 0], sizes = [384, 2], strides = [1, 1]} : vector<432x2xbf16> to vector<384x2xbf16>
    %c7 = arith.constant 7 : index
    %c0_47 = arith.constant 0 : index
    %c0_48 = arith.constant 0 : index
    %54 = vector.load %arg5[%c7, %c0_47, %c0_48] : memref<9x2x2xbf16, #tpu.memory_space<vmem>>, vector<1x2x2xbf16>
    %55 = vector.shape_cast %54 : vector<1x2x2xbf16> to vector<2x2xbf16>
    %cst_49 = arith.constant dense<0.000000e+00> : vector<384x2xf32>
    %56 = tpu.matmul %53, %55, %cst_49 {dimension_numbers = #tpu.dot_dimension_numbers<[1], [0], [0], [1], [0, 0, 1, 1], [], []>} : vector<384x2xbf16>, vector<2x2xbf16>, vector<384x2xf32> -> vector<384x2xf32>
    %57 = arith.addf %52, %56 : vector<384x2xf32>
    %58 = vector.extract_strided_slice %25 {offsets = [2, 0], sizes = [432, 2], strides = [1, 1]} : vector<456x2xbf16> to vector<432x2xbf16>
    %59 = vector.extract_strided_slice %58 {offsets = [0, 0], sizes = [384, 2], strides = [1, 1]} : vector<432x2xbf16> to vector<384x2xbf16>
    %c2 = arith.constant 2 : index
    %c0_50 = arith.constant 0 : index
    %c0_51 = arith.constant 0 : index
    %60 = vector.load %arg5[%c2, %c0_50, %c0_51] : memref<9x2x2xbf16, #tpu.memory_space<vmem>>, vector<1x2x2xbf16>
    %61 = vector.shape_cast %60 : vector<1x2x2xbf16> to vector<2x2xbf16>
    %cst_52 = arith.constant dense<0.000000e+00> : vector<384x2xf32>
    %62 = tpu.matmul %59, %61, %cst_52 {dimension_numbers = #tpu.dot_dimension_numbers<[1], [0], [0], [1], [0, 0, 1, 1], [], []>} : vector<384x2xbf16>, vector<2x2xbf16>, vector<384x2xf32> -> vector<384x2xf32>
    %63 = arith.addf %57, %62 : vector<384x2xf32>
    %64 = vector.extract_strided_slice %58 {offsets = [24, 0], sizes = [384, 2], strides = [1, 1]} : vector<432x2xbf16> to vector<384x2xbf16>
    %c5 = arith.constant 5 : index
    %c0_53 = arith.constant 0 : index
    %c0_54 = arith.constant 0 : index
    %65 = vector.load %arg5[%c5, %c0_53, %c0_54] : memref<9x2x2xbf16, #tpu.memory_space<vmem>>, vector<1x2x2xbf16>
    %66 = vector.shape_cast %65 : vector<1x2x2xbf16> to vector<2x2xbf16>
    %cst_55 = arith.constant dense<0.000000e+00> : vector<384x2xf32>
    %67 = tpu.matmul %64, %66, %cst_55 {dimension_numbers = #tpu.dot_dimension_numbers<[1], [0], [0], [1], [0, 0, 1, 1], [], []>} : vector<384x2xbf16>, vector<2x2xbf16>, vector<384x2xf32> -> vector<384x2xf32>
    %68 = arith.addf %63, %67 : vector<384x2xf32>
    %69 = vector.extract_strided_slice %58 {offsets = [48, 0], sizes = [384, 2], strides = [1, 1]} : vector<432x2xbf16> to vector<384x2xbf16>
    %c8 = arith.constant 8 : index
    %c0_56 = arith.constant 0 : index
    %c0_57 = arith.constant 0 : index
    %70 = vector.load %arg5[%c8, %c0_56, %c0_57] : memref<9x2x2xbf16, #tpu.memory_space<vmem>>, vector<1x2x2xbf16>
    %71 = vector.shape_cast %70 : vector<1x2x2xbf16> to vector<2x2xbf16>
    %cst_58 = arith.constant dense<0.000000e+00> : vector<384x2xf32>
    %72 = tpu.matmul %69, %71, %cst_58 {dimension_numbers = #tpu.dot_dimension_numbers<[1], [0], [0], [1], [0, 0, 1, 1], [], []>} : vector<384x2xbf16>, vector<2x2xbf16>, vector<384x2xf32> -> vector<384x2xf32>
    %73 = arith.addf %68, %72 : vector<384x2xf32>
    %74 = vector.shape_cast %73 : vector<384x2xf32> to vector<16x24x2xf32>
    %75 = vector.extract_strided_slice %74 {offsets = [0, 0, 0], sizes = [16, 16, 2], strides = [1, 1, 1]} : vector<16x24x2xf32> to vector<16x16x2xf32>
    %76 = vector.shape_cast %75 : vector<16x16x2xf32> to vector<256x2xf32>
    %c0_59 = arith.constant 0 : index
    %c0_60 = arith.constant 0 : index
    %77 = vector.load %arg6[%c0_59, %c0_60] : memref<1x2xf32, #tpu.memory_space<vmem>>, vector<1x2xf32>
    %78 = vector.broadcast %77 : vector<1x2xf32> to vector<256x2xf32>
    %79 = arith.mulf %76, %78 : vector<256x2xf32>
    %c0_61 = arith.constant 0 : index
    %c0_62 = arith.constant 0 : index
    %80 = vector.load %arg7[%c0_61, %c0_62] : memref<1x2xf32, #tpu.memory_space<vmem>>, vector<1x2xf32>
    %81 = vector.broadcast %80 : vector<1x2xf32> to vector<256x2xf32>
    %82 = arith.addf %79, %81 : vector<256x2xf32>
    %cst_63 = arith.constant 0.000000e+00 : f32
    %83 = vector.broadcast %cst_63 : f32 to vector<256x2xf32>
    %84 = arith.maximumf %82, %83 : vector<256x2xf32>
    %85 = arith.truncf %84 : vector<256x2xf32> to vector<256x2xbf16>
    %c0_64 = arith.constant 0 : index
    %c0_65 = arith.constant 0 : index
    %86 = vector.load %arg8[%c0_64, %c0_65] : memref<2x4xbf16, #tpu.memory_space<vmem>>, vector<2x4xbf16>
    %cst_66 = arith.constant dense<0.000000e+00> : vector<256x4xf32>
    %87 = tpu.matmul %85, %86, %cst_66 {dimension_numbers = #tpu.dot_dimension_numbers<[1], [0], [0], [1], [0, 0, 1, 1], [], []>} : vector<256x2xbf16>, vector<2x4xbf16>, vector<256x4xf32> -> vector<256x4xf32>
    %c0_67 = arith.constant 0 : index
    %c0_68 = arith.constant 0 : index
    %88 = vector.load %arg9[%c0_67, %c0_68] : memref<1x4xf32, #tpu.memory_space<vmem>>, vector<1x4xf32>
    %89 = vector.broadcast %88 : vector<1x4xf32> to vector<256x4xf32>
    %90 = arith.mulf %87, %89 : vector<256x4xf32>
    %c0_69 = arith.constant 0 : index
    %c0_70 = arith.constant 0 : index
    %91 = vector.load %arg10[%c0_69, %c0_70] : memref<1x4xf32, #tpu.memory_space<vmem>>, vector<1x4xf32>
    %92 = vector.broadcast %91 : vector<1x4xf32> to vector<256x4xf32>
    %93 = arith.addf %90, %92 : vector<256x4xf32>
    %94 = arith.addf %93, %1 : vector<256x4xf32>
    %cst_71 = arith.constant 0.000000e+00 : f32
    %95 = vector.broadcast %cst_71 : f32 to vector<256x4xf32>
    %96 = arith.maximumf %94, %95 : vector<256x4xf32>
    %c0_72 = arith.constant 0 : index
    %c0_73 = arith.constant 0 : index
    %c0_74 = arith.constant 0 : index
    %97 = vector.load %arg11[%c0_72, %c0_73, %c0_74] : memref<1x256x4xf32, #tpu.memory_space<vmem>>, vector<1x256x4xf32>
    %98 = vector.shape_cast %97 : vector<1x256x4xf32> to vector<256x4xf32>
    %99 = vector.shape_cast %96 : vector<256x4xf32> to vector<1x256x4xf32>
    tpu.vector_store %arg11[%c0_72, %c0_73, %c0_74], %99 {strides = array<i32>} : memref<1x256x4xf32, #tpu.memory_space<vmem>>, vector<1x256x4xf32>,
    return
  }
  func.func @transform_0(%arg0: i32) -> (i32, i32, i32) {
    %c0_i32 = arith.constant 0 : i32
    %c0_i32_0 = arith.constant 0 : i32
    %c0_i32_1 = arith.constant 0 : i32
    return %arg0, %c0_i32, %c0_i32_0 : i32, i32, i32
  }
  func.func @transform_1(%arg0: i32) -> (i32, i32) {
    %c0_i32 = arith.constant 0 : i32
    %c0_i32_0 = arith.constant 0 : i32
    %c0_i32_1 = arith.constant 0 : i32
    return %c0_i32, %c0_i32_0 : i32, i32
  }
  func.func @transform_2(%arg0: i32) -> (i32, i32) {
    %c0_i32 = arith.constant 0 : i32
    %c0_i32_0 = arith.constant 0 : i32
    %c0_i32_1 = arith.constant 0 : i32
    return %c0_i32, %c0_i32_0 : i32, i32
  }
  func.func @transform_3(%arg0: i32) -> (i32, i32) {
    %c0_i32 = arith.constant 0 : i32
    %c0_i32_0 = arith.constant 0 : i32
    %c0_i32_1 = arith.constant 0 : i32
    return %c0_i32, %c0_i32_0 : i32, i32
  }
  func.func @transform_4(%arg0: i32) -> (i32, i32, i32) {
    %c0_i32 = arith.constant 0 : i32
    %c0_i32_0 = arith.constant 0 : i32
    %c0_i32_1 = arith.constant 0 : i32
    %c0_i32_2 = arith.constant 0 : i32
    return %c0_i32, %c0_i32_0, %c0_i32_1 : i32, i32, i32
  }
  func.func @transform_5(%arg0: i32) -> (i32, i32) {
    %c0_i32 = arith.constant 0 : i32
    %c0_i32_0 = arith.constant 0 : i32
    %c0_i32_1 = arith.constant 0 : i32
    return %c0_i32, %c0_i32_0 : i32, i32
  }
  func.func @transform_6(%arg0: i32) -> (i32, i32) {
    %c0_i32 = arith.constant 0 : i32
    %c0_i32_0 = arith.constant 0 : i32
    %c0_i32_1 = arith.constant 0 : i32
    return %c0_i32, %c0_i32_0 : i32, i32
  }
  func.func @transform_7(%arg0: i32) -> (i32, i32) {
    %c0_i32 = arith.constant 0 : i32
    %c0_i32_0 = arith.constant 0 : i32
    %c0_i32_1 = arith.constant 0 : i32
    return %c0_i32, %c0_i32_0 : i32, i32
  }
  func.func @transform_8(%arg0: i32) -> (i32, i32) {
    %c0_i32 = arith.constant 0 : i32
    %c0_i32_0 = arith.constant 0 : i32
    %c0_i32_1 = arith.constant 0 : i32
    return %c0_i32, %c0_i32_0 : i32, i32
  }
  func.func @transform_9(%arg0: i32) -> (i32, i32) {
    %c0_i32 = arith.constant 0 : i32
    %c0_i32_0 = arith.constant 0 : i32
    %c0_i32_1 = arith.constant 0 : i32
    return %c0_i32, %c0_i32_0 : i32, i32
  }
  func.func @transform_10(%arg0: i32) -> (i32, i32, i32) {
    %c0_i32 = arith.constant 0 : i32
    %c0_i32_0 = arith.constant 0 : i32
    %c0_i32_1 = arith.constant 0 : i32
    return %arg0, %c0_i32, %c0_i32_0 : i32, i32, i32
  }
}

</mosaic_0001>

<llo_original>
// kernel: tpu_custom_call.1
$region0: #{tpu_custom_call.1}
  #allocation0 [shape = 'u32[]', space=smem, size = 0x4, offset = 0x4, fixed_abs, tag = 'smem constant byte address 0x4 - core index']
  #allocation1 [shape = 'u32[72,128]{1,0:T(1,128)}', space=vmem, size = 0x9000, scoped, tag = 'internal scratch']
  #allocation2 [shape = 'bf16[19,24,2]{2,1,0:T(8,128)(2,1)}', space=vmem, size = 0x1c800, scoped, tag = 'scratch operand']
  %s0 = inlined_call_operand.vmem [shape: f32[2,256,4], index: 0, kind: input, shape index: {}]
  %s1 = inlined_call_operand.vmem [shape: bf16[4,2], index: 1, kind: input, shape index: {}]
  %s2 = inlined_call_operand.vmem [shape: f32[1,2], index: 2, kind: input, shape index: {}]
  %s3 = inlined_call_operand.vmem [shape: f32[1,2], index: 3, kind: input, shape index: {}]
  %s4 = inlined_call_operand.vmem [shape: bf16[9,2,2], index: 4, kind: input, shape index: {}]
  %s5 = inlined_call_operand.vmem [shape: f32[1,2], index: 5, kind: input, shape index: {}]
  %s6 = inlined_call_operand.vmem [shape: f32[1,2], index: 6, kind: input, shape index: {}]
  %s7 = inlined_call_operand.vmem [shape: bf16[2,4], index: 7, kind: input, shape index: {}]
  %s8 = inlined_call_operand.vmem [shape: f32[1,4], index: 8, kind: input, shape index: {}]
  %s9 = inlined_call_operand.vmem [shape: f32[1,4], index: 9, kind: input, shape index: {}]
  %s10 = inlined_call_operand.vmem [shape: f32[2,256,4], index: 10, kind: output, shape index: {}]
  %s11 = sld [smem:[#allocation0]]
  $region73: #{tpu_custom_call.1} parent=0
    _
  %s13 = ssub.s32 1, %s11
  %s14 = scalar_select 0, %s13, %s11
  loop: start=0, step=1, limit=4
  $region2: #{tpu_custom_call.1} parent=0 // loop_pre_header
    _
  $region3: #{tpu_custom_call.1} parent=0 // loop_header
    %s16 = sphi 0, %s20
    %p17 = scmp.ge.s32.totalorder %s16, 4
    %s26 = sphi 0, %s28
    %s29 = sphi 0, %s26
    %s30 = sphi 0, %s29
    %s46 = sphi 0, %s30
    %s50 = sphi 0, %s50
    %s52 = sphi 0, %s50
    %s53 = sphi 0, %s52
    %s67 = sphi 0, %s53
    %s71 = sphi 0, %s71
    %s73 = sphi 0, %s71
    %s74 = sphi 0, %s73
    %s88 = sphi 0, %s74
    %s92 = sphi 0, %s92
    %s94 = sphi 0, %s92
    %s95 = sphi 0, %s94
    %s109 = sphi 0, %s95
    %s113 = sphi 0, %s113
    %s115 = sphi 0, %s113
    %s116 = sphi 0, %s115
    %s130 = sphi 0, %s116
    %s134 = sphi 0, %s134
    %s136 = sphi 0, %s134
    %s137 = sphi 0, %s136
    %s151 = sphi 0, %s137
    %s155 = sphi 0, %s155
    %s157 = sphi 0, %s155
    %s158 = sphi 0, %s157
    %s172 = sphi 0, %s158
    %s176 = sphi 0, %s176
    %s178 = sphi 0, %s176
    %s179 = sphi 0, %s178
    %s193 = sphi 0, %s179
    %s197 = sphi 0, %s197
    %s199 = sphi 0, %s197
    %s200 = sphi 0, %s199
    %s214 = sphi 0, %s200
    %s218 = sphi 0, %s218
    %s220 = sphi 0, %s218
    %s221 = sphi 0, %s220
    %s235 = sphi 0, %s221
    %s241 = sphi 0, %s243
    %s244 = sphi 0, %s241
    %s245 = sphi 0, %s244
    %s261 = sphi 0, %s245
  $region4: #{tpu_custom_call.1} parent=0 // loop_header_branch
    %19 = sbr.rel (%p17) target = $region8
  $region5: #{tpu_custom_call.1} parent=0 // loop_body
    %s21 = ssub.s32 %s16, 1
    %s22 = ssub.s32 %s16, 2
    %s23 = sadd.s32 %s16, 1
    %s24 = ssub.s32 %s16, %s23
    %p25 = scmp.eq.s32.totalorder %s24, 0
    %s27 = sadd.s32 %s26, 1
    %s28 = scalar_select %p25, %s26, %s27
    %p31 = pneg %p25
    %p32 = scmp.eq.s32.totalorder %s16, 1
    %p33 = por %p31, %p32
    %p34 = scmp.ne.s32.totalorder %s26, %s29
    %p35 = scmp.eq.s32.totalorder %s16, 0
    %p36 = por %p34, %p35
    %p37 = scmp.ne.s32.totalorder %s26, %s29
    %p38 = scmp.eq.s32.totalorder %s21, 1
    %p39 = por %p37, %p38
    %p40 = scmp.ne.s32.totalorder %s29, %s30
    %p41 = scmp.eq.s32.totalorder %s21, 0
    %p42 = por %p40, %p41
    %p43 = scmp.ne.s32.totalorder %s29, %s30
    %p44 = scmp.eq.s32.totalorder %s22, 1
    %p45 = por %p43, %p44
    %p47 = scmp.ne.s32.totalorder %s30, %s46
    %p48 = scmp.eq.s32.totalorder %s22, 0
    %p49 = por %p47, %p48
    %s51 = sadd.s32 %s50, 1
    %p54 = scmp.eq.s32.totalorder %s16, 1
    %p55 = scmp.ne.s32.totalorder %s50, %s52
    %p56 = scmp.eq.s32.totalorder %s16, 0
    %p57 = por %p55, %p56
    %p58 = scmp.ne.s32.totalorder %s50, %s52
    %p59 = scmp.eq.s32.totalorder %s21, 1
    %p60 = por %p58, %p59
    %p61 = scmp.ne.s32.totalorder %s52, %s53
    %p62 = scmp.eq.s32.totalorder %s21, 0
    %p63 = por %p61, %p62
    %p64 = scmp.ne.s32.totalorder %s52, %s53
    %p65 = scmp.eq.s32.totalorder %s22, 1
    %p66 = por %p64, %p65
    %p68 = scmp.ne.s32.totalorder %s53, %s67
    %p69 = scmp.eq.s32.totalorder %s22, 0
    %p70 = por %p68, %p69
    %s72 = sadd.s32 %s71, 1
    %p75 = scmp.eq.s32.totalorder %s16, 1
    %p76 = scmp.ne.s32.totalorder %s71, %s73
    %p77 = scmp.eq.s32.totalorder %s16, 0
    %p78 = por %p76, %p77
    %p79 = scmp.ne.s32.totalorder %s71, %s73
    %p80 = scmp.eq.s32.totalorder %s21, 1
    %p81 = por %p79, %p80
    %p82 = scmp.ne.s32.totalorder %s73, %s74
    %p83 = scmp.eq.s32.totalorder %s21, 0
    %p84 = por %p82, %p83
    %p85 = scmp.ne.s32.totalorder %s73, %s74
    %p86 = scmp.eq.s32.totalorder %s22, 1
    %p87 = por %p85, %p86
    %p89 = scmp.ne.s32.totalorder %s74, %s88
    %p90 = scmp.eq.s32.totalorder %s22, 0
    %p91 = por %p89, %p90
    %s93 = sadd.s32 %s92, 1
    %p96 = scmp.eq.s32.totalorder %s16, 1
    %p97 = scmp.ne.s32.totalorder %s92, %s94
    %p98 = scmp.eq.s32.totalorder %s16, 0
    %p99 = por %p97, %p98
    %p100 = scmp.ne.s32.totalorder %s92, %s94
    %p101 = scmp.eq.s32.totalorder %s21, 1
    %p102 = por %p100, %p101
    %p103 = scmp.ne.s32.totalorder %s94, %s95
    %p104 = scmp.eq.s32.totalorder %s21, 0
    %p105 = por %p103, %p104
    %p106 = scmp.ne.s32.totalorder %s94, %s95
    %p107 = scmp.eq.s32.totalorder %s22, 1
    %p108 = por %p106, %p107
    %p110 = scmp.ne.s32.totalorder %s95, %s109
    %p111 = scmp.eq.s32.totalorder %s22, 0
    %p112 = por %p110, %p111
    %s114 = sadd.s32 %s113, 1
    %p117 = scmp.eq.s32.totalorder %s16, 1
    %p118 = scmp.ne.s32.totalorder %s113, %s115
    %p119 = scmp.eq.s32.totalorder %s16, 0
    %p120 = por %p118, %p119
    %p121 = scmp.ne.s32.totalorder %s113, %s115
    %p122 = scmp.eq.s32.totalorder %s21, 1
    %p123 = por %p121, %p122
    %p124 = scmp.ne.s32.totalorder %s115, %s116
    %p125 = scmp.eq.s32.totalorder %s21, 0
    %p126 = por %p124, %p125
    %p127 = scmp.ne.s32.totalorder %s115, %s116
    %p128 = scmp.eq.s32.totalorder %s22, 1
    %p129 = por %p127, %p128
    %p131 = scmp.ne.s32.totalorder %s116, %s130
    %p132 = scmp.eq.s32.totalorder %s22, 0
    %p133 = por %p131, %p132
    %s135 = sadd.s32 %s134, 1
    %p138 = scmp.eq.s32.totalorder %s16, 1
    %p139 = scmp.ne.s32.totalorder %s134, %s136
    %p140 = scmp.eq.s32.totalorder %s16, 0
    %p141 = por %p139, %p140
    %p142 = scmp.ne.s32.totalorder %s134, %s136
    %p143 = scmp.eq.s32.totalorder %s21, 1
    %p144 = por %p142, %p143
    %p145 = scmp.ne.s32.totalorder %s136, %s137
    %p146 = scmp.eq.s32.totalorder %s21, 0
    %p147 = por %p145, %p146
    %p148 = scmp.ne.s32.totalorder %s136, %s137
    %p149 = scmp.eq.s32.totalorder %s22, 1
    %p150 = por %p148, %p149
    %p152 = scmp.ne.s32.totalorder %s137, %s151
    %p153 = scmp.eq.s32.totalorder %s22, 0
    %p154 = por %p152, %p153
    %s156 = sadd.s32 %s155, 1
    %p159 = scmp.eq.s32.totalorder %s16, 1
    %p160 = scmp.ne.s32.totalorder %s155, %s157
    %p161 = scmp.eq.s32.totalorder %s16, 0
    %p162 = por %p160, %p161
    %p163 = scmp.ne.s32.totalorder %s155, %s157
    %p164 = scmp.eq.s32.totalorder %s21, 1
    %p165 = por %p163, %p164
    %p166 = scmp.ne.s32.totalorder %s157, %s158
    %p167 = scmp.eq.s32.totalorder %s21, 0
    %p168 = por %p166, %p167
    %p169 = scmp.ne.s32.totalorder %s157, %s158
    %p170 = scmp.eq.s32.totalorder %s22, 1
    %p171 = por %p169, %p170
    %p173 = scmp.ne.s32.totalorder %s158, %s172
    %p174 = scmp.eq.s32.totalorder %s22, 0
    %p175 = por %p173, %p174
    %s177 = sadd.s32 %s176, 1
    %p180 = scmp.eq.s32.totalorder %s16, 1
    %p181 = scmp.ne.s32.totalorder %s176, %s178
    %p182 = scmp.eq.s32.totalorder %s16, 0
    %p183 = por %p181, %p182
    %p184 = scmp.ne.s32.totalorder %s176, %s178
    %p185 = scmp.eq.s32.totalorder %s21, 1
    %p186 = por %p184, %p185
    %p187 = scmp.ne.s32.totalorder %s178, %s179
    %p188 = scmp.eq.s32.totalorder %s21, 0
    %p189 = por %p187, %p188
    %p190 = scmp.ne.s32.totalorder %s178, %s179
    %p191 = scmp.eq.s32.totalorder %s22, 1
    %p192 = por %p190, %p191
    %p194 = scmp.ne.s32.totalorder %s179, %s193
    %p195 = scmp.eq.s32.totalorder %s22, 0
    %p196 = por %p194, %p195
    %s198 = sadd.s32 %s197, 1
    %p201 = scmp.eq.s32.totalorder %s16, 1
    %p202 = scmp.ne.s32.totalorder %s197, %s199
    %p203 = scmp.eq.s32.totalorder %s16, 0
    %p204 = por %p202, %p203
    %p205 = scmp.ne.s32.totalorder %s197, %s199
    %p206 = scmp.eq.s32.totalorder %s21, 1
    %p207 = por %p205, %p206
    %p208 = scmp.ne.s32.totalorder %s199, %s200
    %p209 = scmp.eq.s32.totalorder %s21, 0
    %p210 = por %p208, %p209
    %p211 = scmp.ne.s32.totalorder %s199, %s200
    %p212 = scmp.eq.s32.totalorder %s22, 1
    %p213 = por %p211, %p212
    %p215 = scmp.ne.s32.totalorder %s200, %s214
    %p216 = scmp.eq.s32.totalorder %s22, 0
    %p217 = por %p215, %p216
    %s219 = sadd.s32 %s218, 1
    %p222 = scmp.eq.s32.totalorder %s16, 1
    %p223 = scmp.ne.s32.totalorder %s218, %s220
    %p224 = scmp.eq.s32.totalorder %s16, 0
    %p225 = por %p223, %p224
    %p226 = scmp.ne.s32.totalorder %s218, %s220
    %p227 = scmp.eq.s32.totalorder %s21, 1
    %p228 = por %p226, %p227
    %p229 = scmp.ne.s32.totalorder %s220, %s221
    %p230 = scmp.eq.s32.totalorder %s21, 0
    %p231 = por %p229, %p230
    %p232 = scmp.ne.s32.totalorder %s220, %s221
    %p233 = scmp.eq.s32.totalorder %s22, 1
    %p234 = por %p232, %p233
    %p236 = scmp.ne.s32.totalorder %s221, %s235
    %p237 = scmp.eq.s32.totalorder %s22, 0
    %p238 = por %p236, %p237
    %s239 = ssub.s32 %s16, %s23
    %p240 = scmp.eq.s32.totalorder %s239, 0
    %s242 = sadd.s32 %s241, 1
    %s243 = scalar_select %p240, %s241, %s242
    %p246 = pneg %p240
    %p247 = scmp.eq.s32.totalorder %s16, 1
    %p248 = por %p246, %p247
    %p249 = scmp.ne.s32.totalorder %s241, %s244
    %p250 = scmp.eq.s32.totalorder %s16, 0
    %p251 = por %p249, %p250
    %p252 = scmp.ne.s32.totalorder %s241, %s244
    %p253 = scmp.eq.s32.totalorder %s21, 1
    %p254 = por %p252, %p253
    %p255 = scmp.ne.s32.totalorder %s244, %s245
    %p256 = scmp.eq.s32.totalorder %s21, 0
    %p257 = por %p255, %p256
    %p258 = scmp.ne.s32.totalorder %s244, %s245
    %p259 = scmp.eq.s32.totalorder %s22, 1
    %p260 = por %p258, %p259
    %p262 = scmp.ne.s32.totalorder %s245, %s261
    %p263 = scmp.eq.s32.totalorder %s22, 0
    %p264 = por %p262, %p263
    %p265 = scmp.le.s32.totalorder 1, %s16
    %p266 = scmp.lt.s32.totalorder %s16, 3
    %p267 = pnand %p265, %p266
    %p268 = pneg %p267
    // Predicated region
    $region9: #{tpu_custom_call.1} parent=5 // pred_check
      _
    $region10: #{tpu_custom_call.1} parent=5 // pred_check_branch
      %270 = sbr.rel (%p267) target = $region12
    $region11: #{tpu_custom_call.1} parent=5 // pred_region
      %s271 = ssub.s32 %s16, 1
      // Predicated region
      $region13: #{tpu_custom_call.1} parent=11 // pred_check
        %p272 = pneg %p63
      $region14: #{tpu_custom_call.1} parent=11 // pred_check_branch
        %274 = sbr.rel (%p272) target = $region16
      $region15: #{tpu_custom_call.1} parent=11 // pred_region
        _
      $region16: #{tpu_custom_call.1} parent=11 // pred_fallthru
        _
      // Predicated region
      $region17: #{tpu_custom_call.1} parent=11 // pred_check
        %p275 = pneg %p84
      $region18: #{tpu_custom_call.1} parent=11 // pred_check_branch
        %277 = sbr.rel (%p275) target = $region20
      $region19: #{tpu_custom_call.1} parent=11 // pred_region
        _
      $region20: #{tpu_custom_call.1} parent=11 // pred_fallthru
        _
      // Predicated region
      $region21: #{tpu_custom_call.1} parent=11 // pred_check
        %p278 = pneg %p105
      $region22: #{tpu_custom_call.1} parent=11 // pred_check_branch
        %280 = sbr.rel (%p278) target = $region24
      $region23: #{tpu_custom_call.1} parent=11 // pred_region
        _
      $region24: #{tpu_custom_call.1} parent=11 // pred_fallthru
        _
      // Predicated region
      $region25: #{tpu_custom_call.1} parent=11 // pred_check
        %p281 = pneg %p126
      $region26: #{tpu_custom_call.1} parent=11 // pred_check_branch
        %283 = sbr.rel (%p281) target = $region28
      $region27: #{tpu_custom_call.1} parent=11 // pred_region
        _
      $region28: #{tpu_custom_call.1} parent=11 // pred_fallthru
        _
      // Predicated region
      $region29: #{tpu_custom_call.1} parent=11 // pred_check
        %p284 = pneg %p147
      $region30: #{tpu_custom_call.1} parent=11 // pred_check_branch
        %286 = sbr.rel (%p284) target = $region32
      $region31: #{tpu_custom_call.1} parent=11 // pred_region
        _
      $region32: #{tpu_custom_call.1} parent=11 // pred_fallthru
        _
      // Predicated region
      $region33: #{tpu_custom_call.1} parent=11 // pred_check
        %p287 = pneg %p168
      $region34: #{tpu_custom_call.1} parent=11 // pred_check_branch
        %289 = sbr.rel (%p287) target = $region36
      $region35: #{tpu_custom_call.1} parent=11 // pred_region
        _
      $region36: #{tpu_custom_call.1} parent=11 // pred_fallthru
        _
      // Predicated region
      $region37: #{tpu_custom_call.1} parent=11 // pred_check
        %p290 = pneg %p189
      $region38: #{tpu_custom_call.1} parent=11 // pred_check_branch
        %292 = sbr.rel (%p290) target = $region40
      $region39: #{tpu_custom_call.1} parent=11 // pred_region
        _
      $region40: #{tpu_custom_call.1} parent=11 // pred_fallthru
        _
      // Predicated region
      $region41: #{tpu_custom_call.1} parent=11 // pred_check
        %p293 = pneg %p210
      $region42: #{tpu_custom_call.1} parent=11 // pred_check_branch
        %295 = sbr.rel (%p293) target = $region44
      $region43: #{tpu_custom_call.1} parent=11 // pred_region
        _
      $region44: #{tpu_custom_call.1} parent=11 // pred_fallthru
        _
      // Predicated region
      $region45: #{tpu_custom_call.1} parent=11 // pred_check
        %p296 = pneg %p231
      $region46: #{tpu_custom_call.1} parent=11 // pred_check_branch
        %298 = sbr.rel (%p296) target = $region48
      $region47: #{tpu_custom_call.1} parent=11 // pred_region
        _
      $region48: #{tpu_custom_call.1} parent=11 // pred_fallthru
        _
    $region12: #{tpu_custom_call.1} parent=5 // pred_fallthru
      _
    %p299 = scmp.lt.s32.totalorder %s16, 2
    // Predicated region
    $region49: #{tpu_custom_call.1} parent=5 // pred_check
      %p300 = pneg %p299
    $region50: #{tpu_custom_call.1} parent=5 // pred_check_branch
      %302 = sbr.rel (%p300) target = $region52
    $region51: #{tpu_custom_call.1} parent=5 // pred_region
      // Predicated region
      $region53: #{tpu_custom_call.1} parent=51 // pred_check
        %p303 = pneg %p36
      $region54: #{tpu_custom_call.1} parent=51 // pred_check_branch
        %305 = sbr.rel (%p303) target = $region56
      $region55: #{tpu_custom_call.1} parent=51 // pred_region
        %p306 = scmp.lt.s32.totalorder %s16, 1
        %s307 = scalar_select %p306, %s16, 1
        %s308 = smul.addr %s307, 32
        %s309 = smul.addr %s308, 8
        %s310 = scalar_lea.vmem %s0, %s309
      $region56: #{tpu_custom_call.1} parent=51 // pred_fallthru
        _
    $region52: #{tpu_custom_call.1} parent=5 // pred_fallthru
      _
    %p311 = scmp.le.s32.totalorder 1, %s16
    %p312 = scmp.lt.s32.totalorder %s16, 3
    %p313 = pnand %p311, %p312
    %p314 = pneg %p313
    // Predicated region
    $region57: #{tpu_custom_call.1} parent=5 // pred_check
      _
    $region58: #{tpu_custom_call.1} parent=5 // pred_check_branch
      %316 = sbr.rel (%p313) target = $region60
    $region59: #{tpu_custom_call.1} parent=5 // pred_region
      %s317 = ssub.s32 %s16, 1
      %p318 = scmp.lt.s32.totalorder %s21, 1
      %s319 = scalar_select %p318, %s21, 1
      %s320 = smul.addr %s319, 32
      %s321 = smul.addr %s320, 8
      %s322 = scalar_lea.vmem %s0, %s321
      %p323 = pneg %p42
      %p324 = pneg %p39
      %p325 = pneg %p63
      %p326 = pneg %p60
      %p327 = pneg %p84
      %p328 = pneg %p81
      %p329 = pneg %p105
      %p330 = pneg %p102
      %p331 = pneg %p126
      %p332 = pneg %p123
      %p333 = pneg %p147
      %p334 = pneg %p144
      %p335 = pneg %p168
      %p336 = pneg %p165
      %p337 = pneg %p189
      %p338 = pneg %p186
      %p339 = pneg %p210
      %p340 = pneg %p207
      %p341 = pneg %p231
      %p342 = pneg %p228
      %p343 = pneg %p257
      %p344 = pneg %p254
      %p345 = scmp.lt.s32.totalorder %s21, 1
      %s346 = scalar_select %p345, %s21, 1
      %s347 = smul.addr %s346, 32
      %s348 = smul.addr %s347, 8
      %s349 = scalar_lea.vmem %s10, %s348
      %p350 = scmp.lt.s32.totalorder %s21, 1
      %s351 = scalar_select %p350, %s21, 1
      %s352 = smul.addr %s351, 32
      %s353 = smul.addr %s352, 8
      %s354 = scalar_lea.vmem %s0, %s353
      %p355 = scmp.lt.s32.totalorder %s21, 1
      %s356 = scalar_select %p355, %s21, 1
      %s357 = smul.addr %s356, 32
      %s358 = smul.addr %s357, 8
      %s359 = scalar_lea.vmem %s10, %s358
      %v361 = vld [vmem:[%s354] sm:$0xff]
      %v362 = vld [vmem:[%s354 + $0x8] sm:$0xff]
      %v363 = vld [vmem:[%s354 + $0x10] sm:$0xff]
      %v364 = vld [vmem:[%s354 + $0x18] sm:$0xff]
      %v365 = vld [vmem:[%s354 + $0x20] sm:$0xff]
      %v366 = vld [vmem:[%s354 + $0x28] sm:$0xff]
      %v367 = vld [vmem:[%s354 + $0x30] sm:$0xff]
      %v368 = vld [vmem:[%s354 + $0x38] sm:$0xff]
      %v369 = vld [vmem:[%s354 + $0x40] sm:$0xff]
      %v370 = vld [vmem:[%s354 + $0x48] sm:$0xff]
      %v371 = vld [vmem:[%s354 + $0x50] sm:$0xff]
      %v372 = vld [vmem:[%s354 + $0x58] sm:$0xff]
      %v373 = vld [vmem:[%s354 + $0x60] sm:$0xff]
      %v374 = vld [vmem:[%s354 + $0x68] sm:$0xff]
      %v375 = vld [vmem:[%s354 + $0x70] sm:$0xff]
      %v376 = vld [vmem:[%s354 + $0x78] sm:$0xff]
      %v377 = vld [vmem:[%s354 + $0x80] sm:$0xff]
      %v378 = vld [vmem:[%s354 + $0x88] sm:$0xff]
      %v379 = vld [vmem:[%s354 + $0x90] sm:$0xff]
      %v380 = vld [vmem:[%s354 + $0x98] sm:$0xff]
      %v381 = vld [vmem:[%s354 + $0xa0] sm:$0xff]
      %v382 = vld [vmem:[%s354 + $0xa8] sm:$0xff]
      %v383 = vld [vmem:[%s354 + $0xb0] sm:$0xff]
      %v384 = vld [vmem:[%s354 + $0xb8] sm:$0xff]
      %v385 = vld [vmem:[%s354 + $0xc0] sm:$0xff]
      %v386 = vld [vmem:[%s354 + $0xc8] sm:$0xff]
      %v387 = vld [vmem:[%s354 + $0xd0] sm:$0xff]
      %v388 = vld [vmem:[%s354 + $0xd8] sm:$0xff]
      %v389 = vld [vmem:[%s354 + $0xe0] sm:$0xff]
      %v390 = vld [vmem:[%s354 + $0xe8] sm:$0xff]
      %v391 = vld [vmem:[%s354 + $0xf0] sm:$0xff]
      %v392 = vld [vmem:[%s354 + $0xf8] sm:$0xff]
      %v393 = vpack.c.bf16 %v362, %v361
      %v394 = vpack.c.bf16 %v364, %v363
      %v395 = vpack.c.bf16 %v366, %v365
      %v396 = vpack.c.bf16 %v368, %v367
      %v397 = vpack.c.bf16 %v370, %v369
      %v398 = vpack.c.bf16 %v372, %v371
      %v399 = vpack.c.bf16 %v374, %v373
      %v400 = vpack.c.bf16 %v376, %v375
      %v401 = vpack.c.bf16 %v378, %v377
      %v402 = vpack.c.bf16 %v380, %v379
      %v403 = vpack.c.bf16 %v382, %v381
      %v404 = vpack.c.bf16 %v384, %v383
      %v405 = vpack.c.bf16 %v386, %v385
      %v406 = vpack.c.bf16 %v388, %v387
      %v407 = vpack.c.bf16 %v390, %v389
      %v408 = vpack.c.bf16 %v392, %v391
      %v409 = vld [vmem:[%s1] sm:$0x3]
      %vm410 = vcmask 31744
      %v412 = vsel %vm410, %v393, 0
      %v415 = vsel %vm410, %v394, 0
      %v418 = vsel %vm410, %v395, 0
      %v421 = vsel %vm410, %v396, 0
      %v424 = vsel %vm410, %v397, 0
      %v427 = vsel %vm410, %v398, 0
      %v430 = vsel %vm410, %v399, 0
      %v433 = vsel %vm410, %v400, 0
      %v436 = vsel %vm410, %v401, 0
      %v439 = vsel %vm410, %v402, 0
      %v442 = vsel %vm410, %v403, 0
      %v445 = vsel %vm410, %v404, 0
      %v448 = vsel %vm410, %v405, 0
      %v451 = vsel %vm410, %v406, 0
      %v454 = vsel %vm410, %v407, 0
      %v457 = vsel %vm410, %v408, 0
      %vm459 = vcmask 1041408
      %v461 = vsel %vm459, %v409, 0
      %463 = vmatpush.bf16.msra.mxu0 0
      %464 = vmatpush.bf16.msra.mxu0 0
      %465 = vmatpush.bf16.msra.mxu0 0
      %466 = vmatpush.bf16.msra.mxu0 0
      %467 = vmatpush.bf16.msra.mxu0 0
      %468 = vmatpush.bf16.msra.mxu0 0
      %469 = vmatpush.bf16.msra.mxu0 0
      %470 = vmatpush.bf16.msra.mxu0 %v461
      %471 = vmatmul.bf16.gmra.mxu0 %v412
      %v472 = vpop.f32.mrf.mxu0
      %v473 = vadd.f32 0.0, %v472
      %v474 = vpop.f32.mrf.mxu0
      %v475 = vadd.f32 0.0, %v474
      %476 = vmatmul.bf16.gmra.mxu0 %v415
      %v477 = vpop.f32.mrf.mxu0
      %v478 = vadd.f32 0.0, %v477
      %v479 = vpop.f32.mrf.mxu0
      %v480 = vadd.f32 0.0, %v479
      %481 = vmatmul.bf16.gmra.mxu0 %v418
      %v482 = vpop.f32.mrf.mxu0
      %v483 = vadd.f32 0.0, %v482
      %v484 = vpop.f32.mrf.mxu0
      %v485 = vadd.f32 0.0, %v484
      %486 = vmatmul.bf16.gmra.mxu0 %v421
      %v487 = vpop.f32.mrf.mxu0
      %v488 = vadd.f32 0.0, %v487
      %v489 = vpop.f32.mrf.mxu0
      %v490 = vadd.f32 0.0, %v489
      %491 = vmatmul.bf16.gmra.mxu0 %v424
      %v492 = vpop.f32.mrf.mxu0
      %v493 = vadd.f32 0.0, %v492
      %v494 = vpop.f32.mrf.mxu0
      %v495 = vadd.f32 0.0, %v494
      %496 = vmatmul.bf16.gmra.mxu0 %v427
      %v497 = vpop.f32.mrf.mxu0
      %v498 = vadd.f32 0.0, %v497
      %v499 = vpop.f32.mrf.mxu0
      %v500 = vadd.f32 0.0, %v499
      %501 = vmatmul.bf16.gmra.mxu0 %v430
      %v502 = vpop.f32.mrf.mxu0
      %v503 = vadd.f32 0.0, %v502
      %v504 = vpop.f32.mrf.mxu0
      %v505 = vadd.f32 0.0, %v504
      %506 = vmatmul.bf16.gmra.mxu0 %v433
      %v507 = vpop.f32.mrf.mxu0
      %v508 = vadd.f32 0.0, %v507
      %v509 = vpop.f32.mrf.mxu0
      %v510 = vadd.f32 0.0, %v509
      %511 = vmatmul.bf16.gmra.mxu0 %v436
      %v512 = vpop.f32.mrf.mxu0
      %v513 = vadd.f32 0.0, %v512
      %v514 = vpop.f32.mrf.mxu0
      %v515 = vadd.f32 0.0, %v514
      %516 = vmatmul.bf16.gmra.mxu0 %v439
      %v517 = vpop.f32.mrf.mxu0
      %v518 = vadd.f32 0.0, %v517
      %v519 = vpop.f32.mrf.mxu0
      %v520 = vadd.f32 0.0, %v519
      %521 = vmatmul.bf16.gmra.mxu0 %v442
      %v522 = vpop.f32.mrf.mxu0
      %v523 = vadd.f32 0.0, %v522
      %v524 = vpop.f32.mrf.mxu0
      %v525 = vadd.f32 0.0, %v524
      %526 = vmatmul.bf16.gmra.mxu0 %v445
      %v527 = vpop.f32.mrf.mxu0
      %v528 = vadd.f32 0.0, %v527
      %v529 = vpop.f32.mrf.mxu0
      %v530 = vadd.f32 0.0, %v529
      %531 = vmatmul.bf16.gmra.mxu0 %v448
      %v532 = vpop.f32.mrf.mxu0
      %v533 = vadd.f32 0.0, %v532
      %v534 = vpop.f32.mrf.mxu0
      %v535 = vadd.f32 0.0, %v534
      %536 = vmatmul.bf16.gmra.mxu0 %v451
      %v537 = vpop.f32.mrf.mxu0
      %v538 = vadd.f32 0.0, %v537
      %v539 = vpop.f32.mrf.mxu0
      %v540 = vadd.f32 0.0, %v539
      %541 = vmatmul.bf16.gmra.mxu0 %v454
      %v542 = vpop.f32.mrf.mxu0
      %v543 = vadd.f32 0.0, %v542
      %v544 = vpop.f32.mrf.mxu0
      %v545 = vadd.f32 0.0, %v544
      %546 = vmatmul.bf16.gmra.mxu0 %v457
      %v547 = vpop.f32.mrf.mxu0
      %v548 = vadd.f32 0.0, %v547
      %v549 = vpop.f32.mrf.mxu0
      %v550 = vadd.f32 0.0, %v549
      %551 = vdwg.mxu0
      %v552 = vld [vmem:[%s2] sm:$0x1]
      %v554 = vperm.slane %v552, 0
      %v556 = vmul.f32 %v473, %v554
      %v557 = vmul.f32 %v475, %v554
      %v558 = vmul.f32 %v478, %v554
      %v559 = vmul.f32 %v480, %v554
      %v560 = vmul.f32 %v483, %v554
      %v561 = vmul.f32 %v485, %v554
      %v562 = vmul.f32 %v488, %v554
      %v563 = vmul.f32 %v490, %v554
      %v564 = vmul.f32 %v493, %v554
      %v565 = vmul.f32 %v495, %v554
      %v566 = vmul.f32 %v498, %v554
      %v567 = vmul.f32 %v500, %v554
      %v568 = vmul.f32 %v503, %v554
      %v569 = vmul.f32 %v505, %v554
      %v570 = vmul.f32 %v508, %v554
      %v571 = vmul.f32 %v510, %v554
      %v572 = vmul.f32 %v513, %v554
      %v573 = vmul.f32 %v515, %v554
      %v574 = vmul.f32 %v518, %v554
      %v575 = vmul.f32 %v520, %v554
      %v576 = vmul.f32 %v523, %v554
      %v577 = vmul.f32 %v525, %v554
      %v578 = vmul.f32 %v528, %v554
      %v579 = vmul.f32 %v530, %v554
      %v580 = vmul.f32 %v533, %v554
      %v581 = vmul.f32 %v535, %v554
      %v582 = vmul.f32 %v538, %v554
      %v583 = vmul.f32 %v540, %v554
      %v584 = vmul.f32 %v543, %v554
      %v585 = vmul.f32 %v545, %v554
      %v586 = vmul.f32 %v548, %v554
      %v587 = vmul.f32 %v550, %v554
      %v588 = vld [vmem:[%s3] sm:$0x1]
      %v590 = vperm.slane %v588, 0
      %v592 = vadd.f32 %v556, %v590
      %v593 = vadd.f32 %v557, %v590
      %v594 = vadd.f32 %v558, %v590
      %v595 = vadd.f32 %v559, %v590
      %v596 = vadd.f32 %v560, %v590
      %v597 = vadd.f32 %v561, %v590
      %v598 = vadd.f32 %v562, %v590
      %v599 = vadd.f32 %v563, %v590
      %v600 = vadd.f32 %v564, %v590
      %v601 = vadd.f32 %v565, %v590
      %v602 = vadd.f32 %v566, %v590
      %v603 = vadd.f32 %v567, %v590
      %v604 = vadd.f32 %v568, %v590
      %v605 = vadd.f32 %v569, %v590
      %v606 = vadd.f32 %v570, %v590
      %v607 = vadd.f32 %v571, %v590
      %v608 = vadd.f32 %v572, %v590
      %v609 = vadd.f32 %v573, %v590
      %v610 = vadd.f32 %v574, %v590
      %v611 = vadd.f32 %v575, %v590
      %v612 = vadd.f32 %v576, %v590
      %v613 = vadd.f32 %v577, %v590
      %v614 = vadd.f32 %v578, %v590
      %v615 = vadd.f32 %v579, %v590
      %v616 = vadd.f32 %v580, %v590
      %v617 = vadd.f32 %v581, %v590
      %v618 = vadd.f32 %v582, %v590
      %v619 = vadd.f32 %v583, %v590
      %v620 = vadd.f32 %v584, %v590
      %v621 = vadd.f32 %v585, %v590
      %v622 = vadd.f32 %v586, %v590
      %v623 = vadd.f32 %v587, %v590
      %v624 = vmax.f32 %v592, 0.0
      %v625 = vmax.f32 %v593, 0.0
      %v626 = vmax.f32 %v594, 0.0
      %v627 = vmax.f32 %v595, 0.0
      %v628 = vmax.f32 %v596, 0.0
      %v629 = vmax.f32 %v597, 0.0
      %v630 = vmax.f32 %v598, 0.0
      %v631 = vmax.f32 %v599, 0.0
      %v632 = vmax.f32 %v600, 0.0
      %v633 = vmax.f32 %v601, 0.0
      %v634 = vmax.f32 %v602, 0.0
      %v635 = vmax.f32 %v603, 0.0
      %v636 = vmax.f32 %v604, 0.0
      %v637 = vmax.f32 %v605, 0.0
      %v638 = vmax.f32 %v606, 0.0
      %v639 = vmax.f32 %v607, 0.0
      %v640 = vmax.f32 %v608, 0.0
      %v641 = vmax.f32 %v609, 0.0
      %v642 = vmax.f32 %v610, 0.0
      %v643 = vmax.f32 %v611, 0.0
      %v644 = vmax.f32 %v612, 0.0
      %v645 = vmax.f32 %v613, 0.0
      %v646 = vmax.f32 %v614, 0.0
      %v647 = vmax.f32 %v615, 0.0
      %v648 = vmax.f32 %v616, 0.0
      %v649 = vmax.f32 %v617, 0.0
      %v650 = vmax.f32 %v618, 0.0
      %v651 = vmax.f32 %v619, 0.0
      %v652 = vmax.f32 %v620, 0.0
      %v653 = vmax.f32 %v621, 0.0
      %v654 = vmax.f32 %v622, 0.0
      %v655 = vmax.f32 %v623, 0.0
      %vm656 = vcmask 11264
      %657 = vst.msk [vmem:[#allocation2] sm:$0xf] %vm656, 0
      %658 = vst.msk [vmem:[#allocation2 + $0x4] sm:$0xf] %vm656, 0
      %659 = vst.msk [vmem:[#allocation2 + $0x8] sm:$0xf] %vm656, 0
      %s660 = scalar_lea.vmem [#allocation2], 204
      %661 = vst.msk [vmem:[%s660] sm:$0xf] %vm656, 0
      %662 = vst.msk [vmem:[%s660 + $0x4] sm:$0xf] %vm656, 0
      %663 = vst.msk [vmem:[%s660 + $0x8] sm:$0xf] %vm656, 0
      %664 = vst.msk [vmem:[%s660 + $0xc] sm:$0xf] %vm656, 0
      %665 = vst.msk [vmem:[%s660 + $0x10] sm:$0xf] %vm656, 0
      %666 = vst.msk [vmem:[%s660 + $0x14] sm:$0xf] %vm656, 0
      %vm667 = vcmask 8192
      %vm668 = vsmask.f32 256
      %vm669 = vmand %vm667, %vm668
      %v670 = vld [vmem:[#allocation2] sm:$0x1]
      %v671 = vsel %vm669, 0, %v670
      %672 = vst [vmem:[#allocation2] sm:$0x1] %v671
      %v673 = vld [vmem:[#allocation2 + $0xc] sm:$0x1]
      %v674 = vsel %vm669, 0, %v673
      %675 = vst [vmem:[#allocation2 + $0xc] sm:$0x1] %v674
      %v676 = vld [vmem:[#allocation2 + $0x18] sm:$0x1]
      %v677 = vsel %vm669, 0, %v676
      %678 = vst [vmem:[#allocation2 + $0x18] sm:$0x1] %v677
      %v679 = vld [vmem:[#allocation2 + $0x24] sm:$0x1]
      %v680 = vsel %vm669, 0, %v679
      %681 = vst [vmem:[#allocation2 + $0x24] sm:$0x1] %v680
      %v682 = vld [vmem:[#allocation2 + $0x30] sm:$0x1]
      %v683 = vsel %vm669, 0, %v682
      %684 = vst [vmem:[#allocation2 + $0x30] sm:$0x1] %v683
      %v685 = vld [vmem:[#allocation2 + $0x3c] sm:$0x1]
      %v686 = vsel %vm669, 0, %v685
      %687 = vst [vmem:[#allocation2 + $0x3c] sm:$0x1] %v686
      %v688 = vld [vmem:[#allocation2 + $0x48] sm:$0x1]
      %v689 = vsel %vm669, 0, %v688
      %690 = vst [vmem:[#allocation2 + $0x48] sm:$0x1] %v689
      %v691 = vld [vmem:[#allocation2 + $0x54] sm:$0x1]
      %v692 = vsel %vm669, 0, %v691
      %693 = vst [vmem:[#allocation2 + $0x54] sm:$0x1] %v692
      %v694 = vld [vmem:[#allocation2 + $0x60] sm:$0x1]
      %v695 = vsel %vm669, 0, %v694
      %696 = vst [vmem:[#allocation2 + $0x60] sm:$0x1] %v695
      %v697 = vld [vmem:[#allocation2 + $0x6c] sm:$0x1]
      %v698 = vsel %vm669, 0, %v697
      %699 = vst [vmem:[#allocation2 + $0x6c] sm:$0x1] %v698
      %v700 = vld [vmem:[#allocation2 + $0x78] sm:$0x1]
      %v701 = vsel %vm669, 0, %v700
      %702 = vst [vmem:[#allocation2 + $0x78] sm:$0x1] %v701
      %v703 = vld [vmem:[#allocation2 + $0x84] sm:$0x1]
      %v704 = vsel %vm669, 0, %v703
      %705 = vst [vmem:[#allocation2 + $0x84] sm:$0x1] %v704
      %v706 = vld [vmem:[#allocation2 + $0x90] sm:$0x1]
      %v707 = vsel %vm669, 0, %v706
      %708 = vst [vmem:[#allocation2 + $0x90] sm:$0x1] %v707
      %v709 = vld [vmem:[#allocation2 + $0x9c] sm:$0x1]
      %v710 = vsel %vm669, 0, %v709
      %711 = vst [vmem:[#allocation2 + $0x9c] sm:$0x1] %v710
      %v712 = vld [vmem:[#allocation2 + $0xa8] sm:$0x1]
      %v713 = vsel %vm669, 0, %v712
      %714 = vst [vmem:[#allocation2 + $0xa8] sm:$0x1] %v713
      %v715 = vld [vmem:[#allocation2 + $0xb4] sm:$0x1]
      %v716 = vsel %vm669, 0, %v715
      %717 = vst [vmem:[#allocation2 + $0xb4] sm:$0x1] %v716
      %v718 = vld [vmem:[#allocation2 + $0xc0] sm:$0x1]
      %v719 = vsel %vm669, 0, %v718
      %720 = vst [vmem:[#allocation2 + $0xc0] sm:$0x1] %v719
      %v721 = vld [vmem:[#allocation2 + $0xcc] sm:$0x1]
      %v722 = vsel %vm669, 0, %v721
      %723 = vst [vmem:[#allocation2 + $0xcc] sm:$0x1] %v722
      %v724 = vld [vmem:[#allocation2 + $0xd8] sm:$0x1]
      %v725 = vsel %vm669, 0, %v724
      %726 = vst [vmem:[#allocation2 + $0xd8] sm:$0x1] %v725
      %vm727 = vcmask 11264
      %vm728 = vsmask.f32 7938
      %vm729 = vmand %vm727, %vm728
      %v730 = vld [vmem:[#allocation2 + $0x8] sm:$0xf]
      %v731 = vsel %vm729, 0, %v730
      %732 = vst [vmem:[#allocation2 + $0x8] sm:$0xf] %v731
      %v733 = vld [vmem:[#allocation2 + $0x14] sm:$0xf]
      %v734 = vsel %vm729, 0, %v733
      %735 = vst [vmem:[#allocation2 + $0x14] sm:$0xf] %v734
      %v736 = vld [vmem:[#allocation2 + $0x20] sm:$0xf]
      %v737 = vsel %vm729, 0, %v736
      %738 = vst [vmem:[#allocation2 + $0x20] sm:$0xf] %v737
      %v739 = vld [vmem:[#allocation2 + $0x2c] sm:$0xf]
      %v740 = vsel %vm729, 0, %v739
      %741 = vst [vmem:[#allocation2 + $0x2c] sm:$0xf] %v740
      %v742 = vld [vmem:[#allocation2 + $0x38] sm:$0xf]
      %v743 = vsel %vm729, 0, %v742
      %744 = vst [vmem:[#allocation2 + $0x38] sm:$0xf] %v743
      %v745 = vld [vmem:[#allocation2 + $0x44] sm:$0xf]
      %v746 = vsel %vm729, 0, %v745
      %747 = vst [vmem:[#allocation2 + $0x44] sm:$0xf] %v746
      %v748 = vld [vmem:[#allocation2 + $0x50] sm:$0xf]
      %v749 = vsel %vm729, 0, %v748
      %750 = vst [vmem:[#allocation2 + $0x50] sm:$0xf] %v749
      %v751 = vld [vmem:[#allocation2 + $0x5c] sm:$0xf]
      %v752 = vsel %vm729, 0, %v751
      %753 = vst [vmem:[#allocation2 + $0x5c] sm:$0xf] %v752
      %v754 = vld [vmem:[#allocation2 + $0x68] sm:$0xf]
      %v755 = vsel %vm729, 0, %v754
      %756 = vst [vmem:[#allocation2 + $0x68] sm:$0xf] %v755
      %v757 = vld [vmem:[#allocation2 + $0x74] sm:$0xf]
      %v758 = vsel %vm729, 0, %v757
      %759 = vst [vmem:[#allocation2 + $0x74] sm:$0xf] %v758
      %v760 = vld [vmem:[#allocation2 + $0x80] sm:$0xf]
      %v761 = vsel %vm729, 0, %v760
      %762 = vst [vmem:[#allocation2 + $0x80] sm:$0xf] %v761
      %v763 = vld [vmem:[#allocation2 + $0x8c] sm:$0xf]
      %v764 = vsel %vm729, 0, %v763
      %765 = vst [vmem:[#allocation2 + $0x8c] sm:$0xf] %v764
      %v766 = vld [vmem:[#allocation2 + $0x98] sm:$0xf]
      %v767 = vsel %vm729, 0, %v766
      %768 = vst [vmem:[#allocation2 + $0x98] sm:$0xf] %v767
      %v769 = vld [vmem:[#allocation2 + $0xa4] sm:$0xf]
      %v770 = vsel %vm729, 0, %v769
      %771 = vst [vmem:[#allocation2 + $0xa4] sm:$0xf] %v770
      %v772 = vld [vmem:[#allocation2 + $0xb0] sm:$0xf]
      %v773 = vsel %vm729, 0, %v772
      %774 = vst [vmem:[#allocation2 + $0xb0] sm:$0xf] %v773
      %v775 = vld [vmem:[#allocation2 + $0xbc] sm:$0xf]
      %v776 = vsel %vm729, 0, %v775
      %777 = vst [vmem:[#allocation2 + $0xbc] sm:$0xf] %v776
      %v778 = vld [vmem:[#allocation2 + $0xc8] sm:$0xf]
      %v779 = vsel %vm729, 0, %v778
      %780 = vst [vmem:[#allocation2 + $0xc8] sm:$0xf] %v779
      %v781 = vld [vmem:[#allocation2 + $0xd4] sm:$0xf]
      %v782 = vsel %vm729, 0, %v781
      %783 = vst [vmem:[#allocation2 + $0xd4] sm:$0xf] %v782
      %v784 = vld [vmem:[#allocation2 + $0xe0] sm:$0xf]
      %v785 = vsel %vm729, 0, %v784
      %786 = vst [vmem:[#allocation2 + $0xe0] sm:$0xf] %v785
      %v787 = vpack.c.bf16 %v624, %v624
      %v788 = vpack.c.bf16 %v625, %v625
      %v789 = vpack.c.bf16 %v626, %v626
      %v790 = vpack.c.bf16 %v627, %v627
      %v791 = vpack.c.bf16 %v628, %v628
      %v792 = vpack.c.bf16 %v629, %v629
      %v793 = vpack.c.bf16 %v630, %v630
      %v794 = vpack.c.bf16 %v631, %v631
      %v795 = vpack.c.bf16 %v632, %v632
      %v796 = vpack.c.bf16 %v633, %v633
      %v797 = vpack.c.bf16 %v634, %v634
      %v798 = vpack.c.bf16 %v635, %v635
      %v799 = vpack.c.bf16 %v636, %v636
      %v800 = vpack.c.bf16 %v637, %v637
      %v801 = vpack.c.bf16 %v638, %v638
      %v802 = vpack.c.bf16 %v639, %v639
      %v803 = vpack.c.bf16 %v640, %v640
      %v804 = vpack.c.bf16 %v641, %v641
      %v805 = vpack.c.bf16 %v642, %v642
      %v806 = vpack.c.bf16 %v643, %v643
      %v807 = vpack.c.bf16 %v644, %v644
      %v808 = vpack.c.bf16 %v645, %v645
      %v809 = vpack.c.bf16 %v646, %v646
      %v810 = vpack.c.bf16 %v647, %v647
      %v811 = vpack.c.bf16 %v648, %v648
      %v812 = vpack.c.bf16 %v649, %v649
      %v813 = vpack.c.bf16 %v650, %v650
      %v814 = vpack.c.bf16 %v651, %v651
      %v815 = vpack.c.bf16 %v652, %v652
      %v816 = vpack.c.bf16 %v653, %v653
      %v817 = vpack.c.bf16 %v654, %v654
      %v818 = vpack.c.bf16 %v655, %v655
      %vm819 = vsmask.f32 4368
      %vm820 = vmor %vm668, %vm819
      %v822 = vshrl.u32 %v787, 16
      %v824 = vrot.slane %v822, 7
      %v825 = vshll.u32 %v787, 16
      %v827 = vor.u32 %v824, %v825
      %v828 = vrot.slane %v824, 4
      %v830 = vshrl.u32 %v788, 16
      %v832 = vrot.slane %v830, 7
      %v833 = vshll.u32 %v788, 16
      %v835 = vor.u32 %v832, %v833
      %v836 = vsel %vm820, %v828, %v835
      %v837 = vrot.slane %v832, 4
      %v839 = vshrl.u32 %v789, 16
      %v841 = vrot.slane %v839, 7
      %v842 = vshll.u32 %v789, 16
      %v844 = vor.u32 %v841, %v842
      %v845 = vrot.slane %v841, 4
      %v847 = vshrl.u32 %v790, 16
      %v849 = vrot.slane %v847, 7
      %v850 = vshll.u32 %v790, 16
      %v852 = vor.u32 %v849, %v850
      %v853 = vsel %vm820, %v845, %v852
      %v854 = vrot.slane %v849, 4
      %v856 = vshrl.u32 %v791, 16
      %v858 = vrot.slane %v856, 7
      %v859 = vshll.u32 %v791, 16
      %v861 = vor.u32 %v858, %v859
      %v862 = vrot.slane %v858, 4
      %v864 = vshrl.u32 %v792, 16
      %v866 = vrot.slane %v864, 7
      %v867 = vshll.u32 %v792, 16
      %v869 = vor.u32 %v866, %v867
      %v870 = vsel %vm820, %v862, %v869
      %v871 = vrot.slane %v866, 4
      %v873 = vshrl.u32 %v793, 16
      %v875 = vrot.slane %v873, 7
      %v876 = vshll.u32 %v793, 16
      %v878 = vor.u32 %v875, %v876
      %v879 = vrot.slane %v875, 4
      %v881 = vshrl.u32 %v794, 16
      %v883 = vrot.slane %v881, 7
      %v884 = vshll.u32 %v794, 16
      %v886 = vor.u32 %v883, %v884
      %v887 = vsel %vm820, %v879, %v886
      %v888 = vrot.slane %v883, 4
      %v890 = vshrl.u32 %v795, 16
      %v892 = vrot.slane %v890, 7
      %v893 = vshll.u32 %v795, 16
      %v895 = vor.u32 %v892, %v893
      %v896 = vrot.slane %v892, 4
      %v898 = vshrl.u32 %v796, 16
      %v900 = vrot.slane %v898, 7
      %v901 = vshll.u32 %v796, 16
      %v903 = vor.u32 %v900, %v901
      %v904 = vsel %vm820, %v896, %v903
      %v905 = vrot.slane %v900, 4
      %v907 = vshrl.u32 %v797, 16
      %v909 = vrot.slane %v907, 7
      %v910 = vshll.u32 %v797, 16
      %v912 = vor.u32 %v909, %v910
      %v913 = vrot.slane %v909, 4
      %v915 = vshrl.u32 %v798, 16
      %v917 = vrot.slane %v915, 7
      %v918 = vshll.u32 %v798, 16
      %v920 = vor.u32 %v917, %v918
      %v921 = vsel %vm820, %v913, %v920
      %v922 = vrot.slane %v917, 4
      %v924 = vshrl.u32 %v799, 16
      %v926 = vrot.slane %v924, 7
      %v927 = vshll.u32 %v799, 16
      %v929 = vor.u32 %v926, %v927
      %v930 = vrot.slane %v926, 4
      %v932 = vshrl.u32 %v800, 16
      %v934 = vrot.slane %v932, 7
      %v935 = vshll.u32 %v800, 16
      %v937 = vor.u32 %v934, %v935
      %v938 = vsel %vm820, %v930, %v937
      %v939 = vrot.slane %v934, 4
      %v941 = vshrl.u32 %v801, 16
      %v943 = vrot.slane %v941, 7
      %v944 = vshll.u32 %v801, 16
      %v946 = vor.u32 %v943, %v944
      %v947 = vrot.slane %v943, 4
      %v949 = vshrl.u32 %v802, 16
      %v951 = vrot.slane %v949, 7
      %v952 = vshll.u32 %v802, 16
      %v954 = vor.u32 %v951, %v952
      %v955 = vsel %vm820, %v947, %v954
      %v956 = vrot.slane %v951, 4
      %v958 = vshrl.u32 %v803, 16
      %v960 = vrot.slane %v958, 7
      %v961 = vshll.u32 %v803, 16
      %v963 = vor.u32 %v960, %v961
      %v964 = vrot.slane %v960, 4
      %v966 = vshrl.u32 %v804, 16
      %v968 = vrot.slane %v966, 7
      %v969 = vshll.u32 %v804, 16
      %v971 = vor.u32 %v968, %v969
      %v972 = vsel %vm820, %v964, %v971
      %v973 = vrot.slane %v968, 4
      %v975 = vshrl.u32 %v805, 16
      %v977 = vrot.slane %v975, 7
      %v978 = vshll.u32 %v805, 16
      %v980 = vor.u32 %v977, %v978
      %v981 = vrot.slane %v977, 4
      %v983 = vshrl.u32 %v806, 16
      %v985 = vrot.slane %v983, 7
      %v986 = vshll.u32 %v806, 16
      %v988 = vor.u32 %v985, %v986
      %v989 = vsel %vm820, %v981, %v988
      %v990 = vrot.slane %v985, 4
      %v992 = vshrl.u32 %v807, 16
      %v994 = vrot.slane %v992, 7
      %v995 = vshll.u32 %v807, 16
      %v997 = vor.u32 %v994, %v995
      %v998 = vrot.slane %v994, 4
      %v1000 = vshrl.u32 %v808, 16
      %v1002 = vrot.slane %v1000, 7
      %v1003 = vshll.u32 %v808, 16
      %v1005 = vor.u32 %v1002, %v1003
      %v1006 = vsel %vm820, %v998, %v1005
      %v1007 = vrot.slane %v1002, 4
      %v1009 = vshrl.u32 %v809, 16
      %v1011 = vrot.slane %v1009, 7
      %v1012 = vshll.u32 %v809, 16
      %v1014 = vor.u32 %v1011, %v1012
      %v1015 = vrot.slane %v1011, 4
      %v1017 = vshrl.u32 %v810, 16
      %v1019 = vrot.slane %v1017, 7
      %v1020 = vshll.u32 %v810, 16
      %v1022 = vor.u32 %v1019, %v1020
      %v1023 = vsel %vm820, %v1015, %v1022
      %v1024 = vrot.slane %v1019, 4
      %v1026 = vshrl.u32 %v811, 16
      %v1028 = vrot.slane %v1026, 7
      %v1029 = vshll.u32 %v811, 16
      %v1031 = vor.u32 %v1028, %v1029
      %v1032 = vrot.slane %v1028, 4
      %v1034 = vshrl.u32 %v812, 16
      %v1036 = vrot.slane %v1034, 7
      %v1037 = vshll.u32 %v812, 16
      %v1039 = vor.u32 %v1036, %v1037
      %v1040 = vsel %vm820, %v1032, %v1039
      %v1041 = vrot.slane %v1036, 4
      %v1043 = vshrl.u32 %v813, 16
      %v1045 = vrot.slane %v1043, 7
      %v1046 = vshll.u32 %v813, 16
      %v1048 = vor.u32 %v1045, %v1046
      %v1049 = vrot.slane %v1045, 4
      %v1051 = vshrl.u32 %v814, 16
      %v1053 = vrot.slane %v1051, 7
      %v1054 = vshll.u32 %v814, 16
      %v1056 = vor.u32 %v1053, %v1054
      %v1057 = vsel %vm820, %v1049, %v1056
      %v1058 = vrot.slane %v1053, 4
      %v1060 = vshrl.u32 %v815, 16
      %v1062 = vrot.slane %v1060, 7
      %v1063 = vshll.u32 %v815, 16
      %v1065 = vor.u32 %v1062, %v1063
      %v1066 = vrot.slane %v1062, 4
      %v1068 = vshrl.u32 %v816, 16
      %v1070 = vrot.slane %v1068, 7
      %v1071 = vshll.u32 %v816, 16
      %v1073 = vor.u32 %v1070, %v1071
      %v1074 = vsel %vm820, %v1066, %v1073
      %v1075 = vrot.slane %v1070, 4
      %v1077 = vshrl.u32 %v817, 16
      %v1079 = vrot.slane %v1077, 7
      %v1080 = vshll.u32 %v817, 16
      %v1082 = vor.u32 %v1079, %v1080
      %v1083 = vrot.slane %v1079, 4
      %v1085 = vshrl.u32 %v818, 16
      %v1087 = vrot.slane %v1085, 7
      %v1088 = vshll.u32 %v818, 16
      %v1090 = vor.u32 %v1087, %v1088
      %v1091 = vsel %vm820, %v1083, %v1090
      %v1092 = vrot.slane %v1087, 4
      %s1141 = scalar_lea.vmem [#allocation2], 12
      %v1142 = vld [vmem:[%s1141] sm:$0xf]
      %v1143 = vsel %vm729, %v827, %v1142
      %1144 = vst [vmem:[%s1141] sm:$0xf] %v1143
      %1145 = vst.msk [vmem:[%s1141 + $0x4] sm:$0xf] %vm656, %v836
      %v1146 = vld [vmem:[%s1141 + $0x8] sm:$0x1]
      %v1147 = vsel %vm669, %v837, %v1146
      %1148 = vst [vmem:[%s1141 + $0x8] sm:$0x1] %v1147
      %v1149 = vld [vmem:[%s1141 + $0xc] sm:$0xf]
      %v1150 = vsel %vm729, %v844, %v1149
      %1151 = vst [vmem:[%s1141 + $0xc] sm:$0xf] %v1150
      %1152 = vst.msk [vmem:[%s1141 + $0x10] sm:$0xf] %vm656, %v853
      %v1153 = vld [vmem:[%s1141 + $0x14] sm:$0x1]
      %v1154 = vsel %vm669, %v854, %v1153
      %1155 = vst [vmem:[%s1141 + $0x14] sm:$0x1] %v1154
      %v1156 = vld [vmem:[%s1141 + $0x18] sm:$0xf]
      %v1157 = vsel %vm729, %v861, %v1156
      %1158 = vst [vmem:[%s1141 + $0x18] sm:$0xf] %v1157
      %1159 = vst.msk [vmem:[%s1141 + $0x1c] sm:$0xf] %vm656, %v870
      %v1160 = vld [vmem:[%s1141 + $0x20] sm:$0x1]
      %v1161 = vsel %vm669, %v871, %v1160
      %1162 = vst [vmem:[%s1141 + $0x20] sm:$0x1] %v1161
      %v1163 = vld [vmem:[%s1141 + $0x24] sm:$0xf]
      %v1164 = vsel %vm729, %v878, %v1163
      %1165 = vst [vmem:[%s1141 + $0x24] sm:$0xf] %v1164
      %1166 = vst.msk [vmem:[%s1141 + $0x28] sm:$0xf] %vm656, %v887
      %v1167 = vld [vmem:[%s1141 + $0x2c] sm:$0x1]
      %v1168 = vsel %vm669, %v888, %v1167
      %1169 = vst [vmem:[%s1141 + $0x2c] sm:$0x1] %v1168
      %v1170 = vld [vmem:[%s1141 + $0x30] sm:$0xf]
      %v1171 = vsel %vm729, %v895, %v1170
      %1172 = vst [vmem:[%s1141 + $0x30] sm:$0xf] %v1171
      %1173 = vst.msk [vmem:[%s1141 + $0x34] sm:$0xf] %vm656, %v904
      %v1174 = vld [vmem:[%s1141 + $0x38] sm:$0x1]
      %v1175 = vsel %vm669, %v905, %v1174
      %1176 = vst [vmem:[%s1141 + $0x38] sm:$0x1] %v1175
      %v1177 = vld [vmem:[%s1141 + $0x3c] sm:$0xf]
      %v1178 = vsel %vm729, %v912, %v1177
      %1179 = vst [vmem:[%s1141 + $0x3c] sm:$0xf] %v1178
      %1180 = vst.msk [vmem:[%s1141 + $0x40] sm:$0xf] %vm656, %v921
      %v1181 = vld [vmem:[%s1141 + $0x44] sm:$0x1]
      %v1182 = vsel %vm669, %v922, %v1181
      %1183 = vst [vmem:[%s1141 + $0x44] sm:$0x1] %v1182
      %v1184 = vld [vmem:[%s1141 + $0x48] sm:$0xf]
      %v1185 = vsel %vm729, %v929, %v1184
      %1186 = vst [vmem:[%s1141 + $0x48] sm:$0xf] %v1185
      %1187 = vst.msk [vmem:[%s1141 + $0x4c] sm:$0xf] %vm656, %v938
      %v1188 = vld [vmem:[%s1141 + $0x50] sm:$0x1]
      %v1189 = vsel %vm669, %v939, %v1188
      %1190 = vst [vmem:[%s1141 + $0x50] sm:$0x1] %v1189
      %v1191 = vld [vmem:[%s1141 + $0x54] sm:$0xf]
      %v1192 = vsel %vm729, %v946, %v1191
      %1193 = vst [vmem:[%s1141 + $0x54] sm:$0xf] %v1192
      %1194 = vst.msk [vmem:[%s1141 + $0x58] sm:$0xf] %vm656, %v955
      %v1195 = vld [vmem:[%s1141 + $0x5c] sm:$0x1]
      %v1196 = vsel %vm669, %v956, %v1195
      %1197 = vst [vmem:[%s1141 + $0x5c] sm:$0x1] %v1196
      %v1198 = vld [vmem:[%s1141 + $0x60] sm:$0xf]
      %v1199 = vsel %vm729, %v963, %v1198
      %1200 = vst [vmem:[%s1141 + $0x60] sm:$0xf] %v1199
      %1201 = vst.msk [vmem:[%s1141 + $0x64] sm:$0xf] %vm656, %v972
      %v1202 = vld [vmem:[%s1141 + $0x68] sm:$0x1]
      %v1203 = vsel %vm669, %v973, %v1202
      %1204 = vst [vmem:[%s1141 + $0x68] sm:$0x1] %v1203
      %v1205 = vld [vmem:[%s1141 + $0x6c] sm:$0xf]
      %v1206 = vsel %vm729, %v980, %v1205
      %1207 = vst [vmem:[%s1141 + $0x6c] sm:$0xf] %v1206
      %1208 = vst.msk [vmem:[%s1141 + $0x70] sm:$0xf] %vm656, %v989
      %v1209 = vld [vmem:[%s1141 + $0x74] sm:$0x1]
      %v1210 = vsel %vm669, %v990, %v1209
      %1211 = vst [vmem:[%s1141 + $0x74] sm:$0x1] %v1210
      %v1212 = vld [vmem:[%s1141 + $0x78] sm:$0xf]
      %v1213 = vsel %vm729, %v997, %v1212
      %1214 = vst [vmem:[%s1141 + $0x78] sm:$0xf] %v1213
      %1215 = vst.msk [vmem:[%s1141 + $0x7c] sm:$0xf] %vm656, %v1006
      %v1216 = vld [vmem:[%s1141 + $0x80] sm:$0x1]
      %v1217 = vsel %vm669, %v1007, %v1216
      %1218 = vst [vmem:[%s1141 + $0x80] sm:$0x1] %v1217
      %v1219 = vld [vmem:[%s1141 + $0x84] sm:$0xf]
      %v1220 = vsel %vm729, %v1014, %v1219
      %1221 = vst [vmem:[%s1141 + $0x84] sm:$0xf] %v1220
      %1222 = vst.msk [vmem:[%s1141 + $0x88] sm:$0xf] %vm656, %v1023
      %v1223 = vld [vmem:[%s1141 + $0x8c] sm:$0x1]
      %v1224 = vsel %vm669, %v1024, %v1223
      %1225 = vst [vmem:[%s1141 + $0x8c] sm:$0x1] %v1224
      %v1226 = vld [vmem:[%s1141 + $0x90] sm:$0xf]
      %v1227 = vsel %vm729, %v1031, %v1226
      %1228 = vst [vmem:[%s1141 + $0x90] sm:$0xf] %v1227
      %1229 = vst.msk [vmem:[%s1141 + $0x94] sm:$0xf] %vm656, %v1040
      %v1230 = vld [vmem:[%s1141 + $0x98] sm:$0x1]
      %v1231 = vsel %vm669, %v1041, %v1230
      %1232 = vst [vmem:[%s1141 + $0x98] sm:$0x1] %v1231
      %v1233 = vld [vmem:[%s1141 + $0x9c] sm:$0xf]
      %v1234 = vsel %vm729, %v1048, %v1233
      %1235 = vst [vmem:[%s1141 + $0x9c] sm:$0xf] %v1234
      %1236 = vst.msk [vmem:[%s1141 + $0xa0] sm:$0xf] %vm656, %v1057
      %v1237 = vld [vmem:[%s1141 + $0xa4] sm:$0x1]
      %v1238 = vsel %vm669, %v1058, %v1237
      %1239 = vst [vmem:[%s1141 + $0xa4] sm:$0x1] %v1238
      %v1240 = vld [vmem:[%s1141 + $0xa8] sm:$0xf]
      %v1241 = vsel %vm729, %v1065, %v1240
      %1242 = vst [vmem:[%s1141 + $0xa8] sm:$0xf] %v1241
      %1243 = vst.msk [vmem:[%s1141 + $0xac] sm:$0xf] %vm656, %v1074
      %v1244 = vld [vmem:[%s1141 + $0xb0] sm:$0x1]
      %v1245 = vsel %vm669, %v1075, %v1244
      %1246 = vst [vmem:[%s1141 + $0xb0] sm:$0x1] %v1245
      %v1247 = vld [vmem:[%s1141 + $0xb4] sm:$0xf]
      %v1248 = vsel %vm729, %v1082, %v1247
      %1249 = vst [vmem:[%s1141 + $0xb4] sm:$0xf] %v1248
      %1250 = vst.msk [vmem:[%s1141 + $0xb8] sm:$0xf] %vm656, %v1091
      %v1251 = vld [vmem:[%s1141 + $0xbc] sm:$0x1]
      %v1252 = vsel %vm669, %v1092, %v1251
      %1253 = vst [vmem:[%s1141 + $0xbc] sm:$0x1] %v1252
      %v1254 = vld [vmem:[#allocation2] sm:$0xf]
      %v1255 = vld [vmem:[#allocation2 + $0x4] sm:$0xf]
      %v1256 = vld [vmem:[#allocation2 + $0x8] sm:$0xf]
      %v1257 = vld [vmem:[#allocation2 + $0xc] sm:$0xf]
      %v1258 = vld [vmem:[#allocation2 + $0x10] sm:$0xf]
      %v1259 = vld [vmem:[#allocation2 + $0x14] sm:$0xf]
      %v1260 = vld [vmem:[#allocation2 + $0x18] sm:$0xf]
      %v1261 = vld [vmem:[#allocation2 + $0x1c] sm:$0xf]
      %v1262 = vld [vmem:[#allocation2 + $0x20] sm:$0xf]
      %v1263 = vld [vmem:[#allocation2 + $0x24] sm:$0xf]
      %v1264 = vld [vmem:[#allocation2 + $0x28] sm:$0xf]
      %v1265 = vld [vmem:[#allocation2 + $0x2c] sm:$0xf]
      %v1266 = vld [vmem:[#allocation2 + $0x30] sm:$0xf]
      %v1267 = vld [vmem:[#allocation2 + $0x34] sm:$0xf]
      %v1268 = vld [vmem:[#allocation2 + $0x38] sm:$0xf]
      %v1269 = vld [vmem:[#allocation2 + $0x3c] sm:$0xf]
      %v1270 = vld [vmem:[#allocation2 + $0x40] sm:$0xf]
      %v1271 = vld [vmem:[#allocation2 + $0x44] sm:$0xf]
      %v1272 = vld [vmem:[#allocation2 + $0x48] sm:$0xf]
      %v1273 = vld [vmem:[#allocation2 + $0x4c] sm:$0xf]
      %v1274 = vld [vmem:[#allocation2 + $0x50] sm:$0xf]
      %v1275 = vld [vmem:[#allocation2 + $0x54] sm:$0xf]
      %v1276 = vld [vmem:[#allocation2 + $0x58] sm:$0xf]
      %v1277 = vld [vmem:[#allocation2 + $0x5c] sm:$0xf]
      %v1278 = vld [vmem:[#allocation2 + $0x60] sm:$0xf]
      %v1279 = vld [vmem:[#allocation2 + $0x64] sm:$0xf]
      %v1280 = vld [vmem:[#allocation2 + $0x68] sm:$0xf]
      %v1281 = vld [vmem:[#allocation2 + $0x6c] sm:$0xf]
      %v1282 = vld [vmem:[#allocation2 + $0x70] sm:$0xf]
      %v1283 = vld [vmem:[#allocation2 + $0x74] sm:$0xf]
      %v1284 = vld [vmem:[#allocation2 + $0x78] sm:$0xf]
      %v1285 = vld [vmem:[#allocation2 + $0x7c] sm:$0xf]
      %v1286 = vld [vmem:[#allocation2 + $0x80] sm:$0xf]
      %v1287 = vld [vmem:[#allocation2 + $0x84] sm:$0xf]
      %v1288 = vld [vmem:[#allocation2 + $0x88] sm:$0xf]
      %v1289 = vld [vmem:[#allocation2 + $0x8c] sm:$0xf]
      %v1290 = vld [vmem:[#allocation2 + $0x90] sm:$0xf]
      %v1291 = vld [vmem:[#allocation2 + $0x94] sm:$0xf]
      %v1292 = vld [vmem:[#allocation2 + $0x98] sm:$0xf]
      %v1293 = vld [vmem:[#allocation2 + $0x9c] sm:$0xf]
      %v1294 = vld [vmem:[#allocation2 + $0xa0] sm:$0xf]
      %v1295 = vld [vmem:[#allocation2 + $0xa4] sm:$0xf]
      %v1296 = vld [vmem:[#allocation2 + $0xa8] sm:$0xf]
      %v1297 = vld [vmem:[#allocation2 + $0xac] sm:$0xf]
      %v1298 = vld [vmem:[#allocation2 + $0xb0] sm:$0xf]
      %v1299 = vld [vmem:[#allocation2 + $0xb4] sm:$0xf]
      %v1300 = vld [vmem:[#allocation2 + $0xb8] sm:$0xf]
      %v1301 = vld [vmem:[#allocation2 + $0xbc] sm:$0xf]
      %v1302 = vld [vmem:[#allocation2 + $0xc0] sm:$0xf]
      %v1303 = vld [vmem:[#allocation2 + $0xc4] sm:$0xf]
      %v1304 = vld [vmem:[#allocation2 + $0xc8] sm:$0xf]
      %v1305 = vld [vmem:[#allocation2 + $0xcc] sm:$0xf]
      %v1306 = vld [vmem:[#allocation2 + $0xd0] sm:$0xf]
      %v1307 = vld [vmem:[#allocation2 + $0xd4] sm:$0xf]
      %v1308 = vld [vmem:[#allocation2 + $0xd8] sm:$0xf]
      %v1309 = vld [vmem:[%s4] sm:$0x1]
      %s1310 = scalar_lea.vmem %s4, 3
      %v1311 = vld [vmem:[%s1310] sm:$0x1]
      %v1360 = vunpack.c.l.b16 %v1257
      %v1361 = vunpack.c.l.b16 %v1258
      %v1362 = vunpack.c.l.b16 %v1259
      %v1363 = vunpack.c.l.b16 %v1260
      %v1364 = vunpack.c.l.b16 %v1261
      %v1365 = vunpack.c.l.b16 %v1262
      %v1366 = vunpack.c.l.b16 %v1263
      %v1367 = vunpack.c.l.b16 %v1264
      %v1368 = vunpack.c.l.b16 %v1265
      %v1369 = vunpack.c.l.b16 %v1266
      %v1370 = vunpack.c.l.b16 %v1267
      %v1371 = vunpack.c.l.b16 %v1268
      %v1372 = vunpack.c.l.b16 %v1269
      %v1373 = vunpack.c.l.b16 %v1270
      %v1374 = vunpack.c.l.b16 %v1271
      %v1375 = vunpack.c.l.b16 %v1272
      %v1376 = vunpack.c.l.b16 %v1273
      %v1377 = vunpack.c.l.b16 %v1274
      %v1378 = vunpack.c.l.b16 %v1275
      %v1379 = vunpack.c.l.b16 %v1276
      %v1380 = vunpack.c.l.b16 %v1277
      %v1381 = vunpack.c.l.b16 %v1278
      %v1382 = vunpack.c.l.b16 %v1279
      %v1383 = vunpack.c.l.b16 %v1280
      %v1384 = vunpack.c.l.b16 %v1281
      %v1385 = vunpack.c.l.b16 %v1282
      %v1386 = vunpack.c.l.b16 %v1283
      %v1387 = vunpack.c.l.b16 %v1284
      %v1388 = vunpack.c.l.b16 %v1285
      %v1389 = vunpack.c.l.b16 %v1286
      %v1390 = vunpack.c.l.b16 %v1287
      %v1391 = vunpack.c.l.b16 %v1288
      %v1392 = vunpack.c.l.b16 %v1289
      %v1393 = vunpack.c.l.b16 %v1290
      %v1394 = vunpack.c.l.b16 %v1291
      %v1395 = vunpack.c.l.b16 %v1292
      %v1396 = vunpack.c.l.b16 %v1293
      %v1397 = vunpack.c.l.b16 %v1294
      %v1398 = vunpack.c.l.b16 %v1295
      %v1399 = vunpack.c.l.b16 %v1296
      %v1400 = vunpack.c.l.b16 %v1297
      %v1401 = vunpack.c.l.b16 %v1298
      %v1402 = vunpack.c.l.b16 %v1299
      %v1403 = vunpack.c.l.b16 %v1300
      %v1404 = vunpack.c.l.b16 %v1301
      %v1405 = vunpack.c.l.b16 %v1302
      %v1406 = vunpack.c.l.b16 %v1303
      %v1407 = vunpack.c.l.b16 %v1304
      %v1408 = vpack.c.b16 %v1361, %v1360
      %v1409 = vpack.c.b16 %v1363, %v1362
      %v1410 = vpack.c.b16 %v1365, %v1364
      %v1411 = vpack.c.b16 %v1367, %v1366
      %v1412 = vpack.c.b16 %v1369, %v1368
      %v1413 = vpack.c.b16 %v1371, %v1370
      %v1414 = vpack.c.b16 %v1373, %v1372
      %v1415 = vpack.c.b16 %v1375, %v1374
      %v1416 = vpack.c.b16 %v1377, %v1376
      %v1417 = vpack.c.b16 %v1379, %v1378
      %v1418 = vpack.c.b16 %v1381, %v1380
      %v1419 = vpack.c.b16 %v1383, %v1382
      %v1420 = vpack.c.b16 %v1385, %v1384
      %v1421 = vpack.c.b16 %v1387, %v1386
      %v1422 = vpack.c.b16 %v1389, %v1388
      %v1423 = vpack.c.b16 %v1391, %v1390
      %v1424 = vpack.c.b16 %v1393, %v1392
      %v1425 = vpack.c.b16 %v1395, %v1394
      %v1426 = vpack.c.b16 %v1397, %v1396
      %v1427 = vpack.c.b16 %v1399, %v1398
      %v1428 = vpack.c.b16 %v1401, %v1400
      %v1429 = vpack.c.b16 %v1403, %v1402
      %v1430 = vpack.c.b16 %v1405, %v1404
      %v1431 = vpack.c.b16 %v1407, %v1406
      %vm1432 = vcmask 15360
      %v1434 = vsel %vm1432, %v1408, 0
      %v1437 = vsel %vm1432, %v1409, 0
      %v1440 = vsel %vm1432, %v1410, 0
      %v1443 = vsel %vm1432, %v1411, 0
      %v1446 = vsel %vm1432, %v1412, 0
      %v1449 = vsel %vm1432, %v1413, 0
      %v1452 = vsel %vm1432, %v1414, 0
      %v1455 = vsel %vm1432, %v1415, 0
      %v1458 = vsel %vm1432, %v1416, 0
      %v1461 = vsel %vm1432, %v1417, 0
      %v1464 = vsel %vm1432, %v1418, 0
      %v1467 = vsel %vm1432, %v1419, 0
      %v1470 = vsel %vm1432, %v1420, 0
      %v1473 = vsel %vm1432, %v1421, 0
      %v1476 = vsel %vm1432, %v1422, 0
      %v1479 = vsel %vm1432, %v1423, 0
      %v1482 = vsel %vm1432, %v1424, 0
      %v1485 = vsel %vm1432, %v1425, 0
      %v1488 = vsel %vm1432, %v1426, 0
      %v1491 = vsel %vm1432, %v1427, 0
      %v1494 = vsel %vm1432, %v1428, 0
      %v1497 = vsel %vm1432, %v1429, 0
      %v1500 = vsel %vm1432, %v1430, 0
      %v1503 = vsel %vm1432, %v1431, 0
      %vm1505 = vcmask 1040384
      %v1507 = vsel %vm1505, %v1311, 0
      %1509 = vmatpush.bf16.msra.mxu0 0
      %1510 = vmatpush.bf16.msra.mxu0 0
      %1511 = vmatpush.bf16.msra.mxu0 0
      %1512 = vmatpush.bf16.msra.mxu0 0
      %1513 = vmatpush.bf16.msra.mxu0 0
      %1514 = vmatpush.bf16.msra.mxu0 0
      %1515 = vmatpush.bf16.msra.mxu0 0
      %1516 = vmatpush.bf16.msra.mxu0 %v1507
      %1517 = vmatmul.bf16.gmra.mxu0 %v1434
      %v1518 = vpop.f32.mrf.mxu0
      %v1519 = vadd.f32 0.0, %v1518
      %v1520 = vpop.f32.mrf.mxu0
      %v1521 = vadd.f32 0.0, %v1520
      %1522 = vmatmul.bf16.gmra.mxu0 %v1437
      %v1523 = vpop.f32.mrf.mxu0
      %v1524 = vpop.f32.mrf.mxu0
      %v1525 = vadd.f32 0.0, %v1524
      %1526 = vmatmul.bf16.gmra.mxu0 %v1440
      %v1527 = vpop.f32.mrf.mxu0
      %v1528 = vadd.f32 0.0, %v1527
      %v1529 = vpop.f32.mrf.mxu0
      %1530 = vmatmul.bf16.gmra.mxu0 %v1443
      %v1531 = vpop.f32.mrf.mxu0
      %v1532 = vadd.f32 0.0, %v1531
      %v1533 = vpop.f32.mrf.mxu0
      %v1534 = vadd.f32 0.0, %v1533
      %1535 = vmatmul.bf16.gmra.mxu0 %v1446
      %v1536 = vpop.f32.mrf.mxu0
      %v1537 = vpop.f32.mrf.mxu0
      %v1538 = vadd.f32 0.0, %v1537
      %1539 = vmatmul.bf16.gmra.mxu0 %v1449
      %v1540 = vpop.f32.mrf.mxu0
      %v1541 = vadd.f32 0.0, %v1540
      %v1542 = vpop.f32.mrf.mxu0
      %1543 = vmatmul.bf16.gmra.mxu0 %v1452
      %v1544 = vpop.f32.mrf.mxu0
      %v1545 = vadd.f32 0.0, %v1544
      %v1546 = vpop.f32.mrf.mxu0
      %v1547 = vadd.f32 0.0, %v1546
      %1548 = vmatmul.bf16.gmra.mxu0 %v1455
      %v1549 = vpop.f32.mrf.mxu0
      %v1550 = vpop.f32.mrf.mxu0
      %v1551 = vadd.f32 0.0, %v1550
      %1552 = vmatmul.bf16.gmra.mxu0 %v1458
      %v1553 = vpop.f32.mrf.mxu0
      %v1554 = vadd.f32 0.0, %v1553
      %v1555 = vpop.f32.mrf.mxu0
      %1556 = vmatmul.bf16.gmra.mxu0 %v1461
      %v1557 = vpop.f32.mrf.mxu0
      %v1558 = vadd.f32 0.0, %v1557
      %v1559 = vpop.f32.mrf.mxu0
      %v1560 = vadd.f32 0.0, %v1559
      %1561 = vmatmul.bf16.gmra.mxu0 %v1464
      %v1562 = vpop.f32.mrf.mxu0
      %v1563 = vpop.f32.mrf.mxu0
      %v1564 = vadd.f32 0.0, %v1563
      %1565 = vmatmul.bf16.gmra.mxu0 %v1467
      %v1566 = vpop.f32.mrf.mxu0
      %v1567 = vadd.f32 0.0, %v1566
      %v1568 = vpop.f32.mrf.mxu0
      %1569 = vmatmul.bf16.gmra.mxu0 %v1470
      %v1570 = vpop.f32.mrf.mxu0
      %v1571 = vadd.f32 0.0, %v1570
      %v1572 = vpop.f32.mrf.mxu0
      %v1573 = vadd.f32 0.0, %v1572
      %1574 = vmatmul.bf16.gmra.mxu0 %v1473
      %v1575 = vpop.f32.mrf.mxu0
      %v1576 = vpop.f32.mrf.mxu0
      %v1577 = vadd.f32 0.0, %v1576
      %1578 = vmatmul.bf16.gmra.mxu0 %v1476
      %v1579 = vpop.f32.mrf.mxu0
      %v1580 = vadd.f32 0.0, %v1579
      %v1581 = vpop.f32.mrf.mxu0
      %1582 = vmatmul.bf16.gmra.mxu0 %v1479
      %v1583 = vpop.f32.mrf.mxu0
      %v1584 = vadd.f32 0.0, %v1583
      %v1585 = vpop.f32.mrf.mxu0
      %v1586 = vadd.f32 0.0, %v1585
      %1587 = vmatmul.bf16.gmra.mxu0 %v1482
      %v1588 = vpop.f32.mrf.mxu0
      %v1589 = vpop.f32.mrf.mxu0
      %v1590 = vadd.f32 0.0, %v1589
      %1591 = vmatmul.bf16.gmra.mxu0 %v1485
      %v1592 = vpop.f32.mrf.mxu0
      %v1593 = vadd.f32 0.0, %v1592
      %v1594 = vpop.f32.mrf.mxu0
      %1595 = vmatmul.bf16.gmra.mxu0 %v1488
      %v1596 = vpop.f32.mrf.mxu0
      %v1597 = vadd.f32 0.0, %v1596
      %v1598 = vpop.f32.mrf.mxu0
      %v1599 = vadd.f32 0.0, %v1598
      %1600 = vmatmul.bf16.gmra.mxu0 %v1491
      %v1601 = vpop.f32.mrf.mxu0
      %v1602 = vpop.f32.mrf.mxu0
      %v1603 = vadd.f32 0.0, %v1602
      %1604 = vmatmul.bf16.gmra.mxu0 %v1494
      %v1605 = vpop.f32.mrf.mxu0
      %v1606 = vadd.f32 0.0, %v1605
      %v1607 = vpop.f32.mrf.mxu0
      %1608 = vmatmul.bf16.gmra.mxu0 %v1497
      %v1609 = vpop.f32.mrf.mxu0
      %v1610 = vadd.f32 0.0, %v1609
      %v1611 = vpop.f32.mrf.mxu0
      %v1612 = vadd.f32 0.0, %v1611
      %1613 = vmatmul.bf16.gmra.mxu0 %v1500
      %v1614 = vpop.f32.mrf.mxu0
      %v1615 = vpop.f32.mrf.mxu0
      %v1616 = vadd.f32 0.0, %v1615
      %1617 = vmatmul.bf16.gmra.mxu0 %v1503
      %v1618 = vpop.f32.mrf.mxu0
      %v1619 = vadd.f32 0.0, %v1618
      %v1620 = vpop.f32.mrf.mxu0
      %1621 = vdwg.mxu0
      %v1625 = vunpack.c.l.b16 %v1254
      %v1626 = vunpack.c.l.b16 %v1255
      %v1627 = vunpack.c.l.b16 %v1256
      %v1628 = vpack.c.b16 %v1626, %v1625
      %v1629 = vpack.c.b16 %v1360, %v1627
      %v1630 = vpack.c.b16 %v1362, %v1361
      %v1631 = vpack.c.b16 %v1364, %v1363
      %v1632 = vpack.c.b16 %v1366, %v1365
      %v1633 = vpack.c.b16 %v1368, %v1367
      %v1634 = vpack.c.b16 %v1370, %v1369
      %v1635 = vpack.c.b16 %v1372, %v1371
      %v1636 = vpack.c.b16 %v1374, %v1373
      %v1637 = vpack.c.b16 %v1376, %v1375
      %v1638 = vpack.c.b16 %v1378, %v1377
      %v1639 = vpack.c.b16 %v1380, %v1379
      %v1640 = vpack.c.b16 %v1382, %v1381
      %v1641 = vpack.c.b16 %v1384, %v1383
      %v1642 = vpack.c.b16 %v1386, %v1385
      %v1643 = vpack.c.b16 %v1388, %v1387
      %v1644 = vpack.c.b16 %v1390, %v1389
      %v1645 = vpack.c.b16 %v1392, %v1391
      %v1646 = vpack.c.b16 %v1394, %v1393
      %v1647 = vpack.c.b16 %v1396, %v1395
      %v1648 = vpack.c.b16 %v1398, %v1397
      %v1649 = vpack.c.b16 %v1400, %v1399
      %v1650 = vpack.c.b16 %v1402, %v1401
      %v1651 = vpack.c.b16 %v1404, %v1403
      %v1653 = vsel %vm1432, %v1628, 0
      %v1656 = vsel %vm1432, %v1629, 0
      %v1659 = vsel %vm1432, %v1630, 0
      %v1662 = vsel %vm1432, %v1631, 0
      %v1665 = vsel %vm1432, %v1632, 0
      %v1668 = vsel %vm1432, %v1633, 0
      %v1671 = vsel %vm1432, %v1634, 0
      %v1674 = vsel %vm1432, %v1635, 0
      %v1677 = vsel %vm1432, %v1636, 0
      %v1680 = vsel %vm1432, %v1637, 0
      %v1683 = vsel %vm1432, %v1638, 0
      %v1686 = vsel %vm1432, %v1639, 0
      %v1689 = vsel %vm1432, %v1640, 0
      %v1692 = vsel %vm1432, %v1641, 0
      %v1695 = vsel %vm1432, %v1642, 0
      %v1698 = vsel %vm1432, %v1643, 0
      %v1701 = vsel %vm1432, %v1644, 0
      %v1704 = vsel %vm1432, %v1645, 0
      %v1707 = vsel %vm1432, %v1646, 0
      %v1710 = vsel %vm1432, %v1647, 0
      %v1713 = vsel %vm1432, %v1648, 0
      %v1716 = vsel %vm1432, %v1649, 0
      %v1719 = vsel %vm1432, %v1650, 0
      %v1722 = vsel %vm1432, %v1651, 0
      %v1725 = vsel %vm1505, %v1309, 0
      %1727 = vmatpush.bf16.msra.mxu0 0
      %1728 = vmatpush.bf16.msra.mxu0 0
      %1729 = vmatpush.bf16.msra.mxu0 0
      %1730 = vmatpush.bf16.msra.mxu0 0
      %1731 = vmatpush.bf16.msra.mxu0 0
      %1732 = vmatpush.bf16.msra.mxu0 0
      %1733 = vmatpush.bf16.msra.mxu0 0
      %1734 = vmatpush.bf16.msra.mxu0 %v1725
      %1735 = vmatmul.bf16.gmra.mxu0 %v1653
      %v1736 = vpop.f32.mrf.mxu0
      %v1737 = vadd.f32 %v1519, %v1736
      %v1738 = vpop.f32.mrf.mxu0
      %v1739 = vadd.f32 %v1521, %v1738
      %1740 = vmatmul.bf16.gmra.mxu0 %v1656
      %v1741 = vpop.f32.mrf.mxu0
      %v1742 = vpop.f32.mrf.mxu0
      %v1743 = vadd.f32 %v1525, %v1742
      %1744 = vmatmul.bf16.gmra.mxu0 %v1659
      %v1745 = vpop.f32.mrf.mxu0
      %v1746 = vadd.f32 %v1528, %v1745
      %v1747 = vpop.f32.mrf.mxu0
      %1748 = vmatmul.bf16.gmra.mxu0 %v1662
      %v1749 = vpop.f32.mrf.mxu0
      %v1750 = vadd.f32 %v1532, %v1749
      %v1751 = vpop.f32.mrf.mxu0
      %v1752 = vadd.f32 %v1534, %v1751
      %1753 = vmatmul.bf16.gmra.mxu0 %v1665
      %v1754 = vpop.f32.mrf.mxu0
      %v1755 = vpop.f32.mrf.mxu0
      %v1756 = vadd.f32 %v1538, %v1755
      %1757 = vmatmul.bf16.gmra.mxu0 %v1668
      %v1758 = vpop.f32.mrf.mxu0
      %v1759 = vadd.f32 %v1541, %v1758
      %v1760 = vpop.f32.mrf.mxu0
      %1761 = vmatmul.bf16.gmra.mxu0 %v1671
      %v1762 = vpop.f32.mrf.mxu0
      %v1763 = vadd.f32 %v1545, %v1762
      %v1764 = vpop.f32.mrf.mxu0
      %v1765 = vadd.f32 %v1547, %v1764
      %1766 = vmatmul.bf16.gmra.mxu0 %v1674
      %v1767 = vpop.f32.mrf.mxu0
      %v1768 = vpop.f32.mrf.mxu0
      %v1769 = vadd.f32 %v1551, %v1768
      %1770 = vmatmul.bf16.gmra.mxu0 %v1677
      %v1771 = vpop.f32.mrf.mxu0
      %v1772 = vadd.f32 %v1554, %v1771
      %v1773 = vpop.f32.mrf.mxu0
      %1774 = vmatmul.bf16.gmra.mxu0 %v1680
      %v1775 = vpop.f32.mrf.mxu0
      %v1776 = vadd.f32 %v1558, %v1775
      %v1777 = vpop.f32.mrf.mxu0
      %v1778 = vadd.f32 %v1560, %v1777
      %1779 = vmatmul.bf16.gmra.mxu0 %v1683
      %v1780 = vpop.f32.mrf.mxu0
      %v1781 = vpop.f32.mrf.mxu0
      %v1782 = vadd.f32 %v1564, %v1781
      %1783 = vmatmul.bf16.gmra.mxu0 %v1686
      %v1784 = vpop.f32.mrf.mxu0
      %v1785 = vadd.f32 %v1567, %v1784
      %v1786 = vpop.f32.mrf.mxu0
      %1787 = vmatmul.bf16.gmra.mxu0 %v1689
      %v1788 = vpop.f32.mrf.mxu0
      %v1789 = vadd.f32 %v1571, %v1788
      %v1790 = vpop.f32.mrf.mxu0
      %v1791 = vadd.f32 %v1573, %v1790
      %1792 = vmatmul.bf16.gmra.mxu0 %v1692
      %v1793 = vpop.f32.mrf.mxu0
      %v1794 = vpop.f32.mrf.mxu0
      %v1795 = vadd.f32 %v1577, %v1794
      %1796 = vmatmul.bf16.gmra.mxu0 %v1695
      %v1797 = vpop.f32.mrf.mxu0
      %v1798 = vadd.f32 %v1580, %v1797
      %v1799 = vpop.f32.mrf.mxu0
      %1800 = vmatmul.bf16.gmra.mxu0 %v1698
      %v1801 = vpop.f32.mrf.mxu0
      %v1802 = vadd.f32 %v1584, %v1801
      %v1803 = vpop.f32.mrf.mxu0
      %v1804 = vadd.f32 %v1586, %v1803
      %1805 = vmatmul.bf16.gmra.mxu0 %v1701
      %v1806 = vpop.f32.mrf.mxu0
      %v1807 = vpop.f32.mrf.mxu0
      %v1808 = vadd.f32 %v1590, %v1807
      %1809 = vmatmul.bf16.gmra.mxu0 %v1704
      %v1810 = vpop.f32.mrf.mxu0
      %v1811 = vadd.f32 %v1593, %v1810
      %v1812 = vpop.f32.mrf.mxu0
      %1813 = vmatmul.bf16.gmra.mxu0 %v1707
      %v1814 = vpop.f32.mrf.mxu0
      %v1815 = vadd.f32 %v1597, %v1814
      %v1816 = vpop.f32.mrf.mxu0
      %v1817 = vadd.f32 %v1599, %v1816
      %1818 = vmatmul.bf16.gmra.mxu0 %v1710
      %v1819 = vpop.f32.mrf.mxu0
      %v1820 = vpop.f32.mrf.mxu0
      %v1821 = vadd.f32 %v1603, %v1820
      %1822 = vmatmul.bf16.gmra.mxu0 %v1713
      %v1823 = vpop.f32.mrf.mxu0
      %v1824 = vadd.f32 %v1606, %v1823
      %v1825 = vpop.f32.mrf.mxu0
      %1826 = vmatmul.bf16.gmra.mxu0 %v1716
      %v1827 = vpop.f32.mrf.mxu0
      %v1828 = vadd.f32 %v1610, %v1827
      %v1829 = vpop.f32.mrf.mxu0
      %v1830 = vadd.f32 %v1612, %v1829
      %1831 = vmatmul.bf16.gmra.mxu0 %v1719
      %v1832 = vpop.f32.mrf.mxu0
      %v1833 = vpop.f32.mrf.mxu0
      %v1834 = vadd.f32 %v1616, %v1833
      %1835 = vmatmul.bf16.gmra.mxu0 %v1722
      %v1836 = vpop.f32.mrf.mxu0
      %v1837 = vadd.f32 %v1619, %v1836
      %v1838 = vpop.f32.mrf.mxu0
      %1839 = vdwg.mxu0
      %s1840 = scalar_lea.vmem %s4, 6
      %v1841 = vld [vmem:[%s1840] sm:$0x1]
      %v1845 = vunpack.c.l.b16 %v1305
      %v1846 = vunpack.c.l.b16 %v1306
      %v1847 = vunpack.c.l.b16 %v1307
      %v1848 = vpack.c.b16 %v1406, %v1405
      %v1849 = vpack.c.b16 %v1845, %v1407
      %v1850 = vpack.c.b16 %v1847, %v1846
      %v1852 = vsel %vm1432, %v1848, 0
      %v1855 = vsel %vm1432, %v1849, 0
      %v1858 = vsel %vm1432, %v1850, 0
      %v1861 = vsel %vm1505, %v1841, 0
      %1863 = vmatpush.bf16.msra.mxu0 0
      %1864 = vmatpush.bf16.msra.mxu0 0
      %1865 = vmatpush.bf16.msra.mxu0 0
      %1866 = vmatpush.bf16.msra.mxu0 0
      %1867 = vmatpush.bf16.msra.mxu0 0
      %1868 = vmatpush.bf16.msra.mxu0 0
      %1869 = vmatpush.bf16.msra.mxu0 0
      %1870 = vmatpush.bf16.msra.mxu0 %v1861
      %1871 = vmatmul.bf16.gmra.mxu0 %v1662
      %v1872 = vpop.f32.mrf.mxu0
      %v1873 = vadd.f32 0.0, %v1872
      %v1874 = vpop.f32.mrf.mxu0
      %v1875 = vadd.f32 0.0, %v1874
      %1876 = vmatmul.bf16.gmra.mxu0 %v1665
      %v1877 = vpop.f32.mrf.mxu0
      %v1878 = vpop.f32.mrf.mxu0
      %v1879 = vadd.f32 0.0, %v1878
      %1880 = vmatmul.bf16.gmra.mxu0 %v1668
      %v1881 = vpop.f32.mrf.mxu0
      %v1882 = vadd.f32 0.0, %v1881
      %v1883 = vpop.f32.mrf.mxu0
      %1884 = vmatmul.bf16.gmra.mxu0 %v1671
      %v1885 = vpop.f32.mrf.mxu0
      %v1886 = vadd.f32 0.0, %v1885
      %v1887 = vpop.f32.mrf.mxu0
      %v1888 = vadd.f32 0.0, %v1887
      %1889 = vmatmul.bf16.gmra.mxu0 %v1674
      %v1890 = vpop.f32.mrf.mxu0
      %v1891 = vpop.f32.mrf.mxu0
      %v1892 = vadd.f32 0.0, %v1891
      %1893 = vmatmul.bf16.gmra.mxu0 %v1677
      %v1894 = vpop.f32.mrf.mxu0
      %v1895 = vadd.f32 0.0, %v1894
      %v1896 = vpop.f32.mrf.mxu0
      %1897 = vmatmul.bf16.gmra.mxu0 %v1680
      %v1898 = vpop.f32.mrf.mxu0
      %v1899 = vadd.f32 0.0, %v1898
      %v1900 = vpop.f32.mrf.mxu0
      %v1901 = vadd.f32 0.0, %v1900
      %1902 = vmatmul.bf16.gmra.mxu0 %v1683
      %v1903 = vpop.f32.mrf.mxu0
      %v1904 = vpop.f32.mrf.mxu0
      %v1905 = vadd.f32 0.0, %v1904
      %1906 = vmatmul.bf16.gmra.mxu0 %v1686
      %v1907 = vpop.f32.mrf.mxu0
      %v1908 = vadd.f32 0.0, %v1907
      %v1909 = vpop.f32.mrf.mxu0
      %1910 = vmatmul.bf16.gmra.mxu0 %v1689
      %v1911 = vpop.f32.mrf.mxu0
      %v1912 = vadd.f32 0.0, %v1911
      %v1913 = vpop.f32.mrf.mxu0
      %v1914 = vadd.f32 0.0, %v1913
      %1915 = vmatmul.bf16.gmra.mxu0 %v1692
      %v1916 = vpop.f32.mrf.mxu0
      %v1917 = vpop.f32.mrf.mxu0
      %v1918 = vadd.f32 0.0, %v1917
      %1919 = vmatmul.bf16.gmra.mxu0 %v1695
      %v1920 = vpop.f32.mrf.mxu0
      %v1921 = vadd.f32 0.0, %v1920
      %v1922 = vpop.f32.mrf.mxu0
      %1923 = vmatmul.bf16.gmra.mxu0 %v1698
      %v1924 = vpop.f32.mrf.mxu0
      %v1925 = vadd.f32 0.0, %v1924
      %v1926 = vpop.f32.mrf.mxu0
      %v1927 = vadd.f32 0.0, %v1926
      %1928 = vmatmul.bf16.gmra.mxu0 %v1701
      %v1929 = vpop.f32.mrf.mxu0
      %v1930 = vpop.f32.mrf.mxu0
      %v1931 = vadd.f32 0.0, %v1930
      %1932 = vmatmul.bf16.gmra.mxu0 %v1704
      %v1933 = vpop.f32.mrf.mxu0
      %v1934 = vadd.f32 0.0, %v1933
      %v1935 = vpop.f32.mrf.mxu0
      %1936 = vmatmul.bf16.gmra.mxu0 %v1707
      %v1937 = vpop.f32.mrf.mxu0
      %v1938 = vadd.f32 0.0, %v1937
      %v1939 = vpop.f32.mrf.mxu0
      %v1940 = vadd.f32 0.0, %v1939
      %1941 = vmatmul.bf16.gmra.mxu0 %v1710
      %v1942 = vpop.f32.mrf.mxu0
      %v1943 = vpop.f32.mrf.mxu0
      %v1944 = vadd.f32 0.0, %v1943
      %1945 = vmatmul.bf16.gmra.mxu0 %v1713
      %v1946 = vpop.f32.mrf.mxu0
      %v1947 = vadd.f32 0.0, %v1946
      %v1948 = vpop.f32.mrf.mxu0
      %1949 = vmatmul.bf16.gmra.mxu0 %v1716
      %v1950 = vpop.f32.mrf.mxu0
      %v1951 = vadd.f32 0.0, %v1950
      %v1952 = vpop.f32.mrf.mxu0
      %v1953 = vadd.f32 0.0, %v1952
      %1954 = vmatmul.bf16.gmra.mxu0 %v1719
      %v1955 = vpop.f32.mrf.mxu0
      %v1956 = vpop.f32.mrf.mxu0
      %v1957 = vadd.f32 0.0, %v1956
      %1958 = vmatmul.bf16.gmra.mxu0 %v1722
      %v1959 = vpop.f32.mrf.mxu0
      %v1960 = vadd.f32 0.0, %v1959
      %v1961 = vpop.f32.mrf.mxu0
      %1962 = vmatmul.bf16.gmra.mxu0 %v1852
      %v1963 = vpop.f32.mrf.mxu0
      %v1964 = vadd.f32 0.0, %v1963
      %v1965 = vpop.f32.mrf.mxu0
      %v1966 = vadd.f32 0.0, %v1965
      %1967 = vmatmul.bf16.gmra.mxu0 %v1855
      %v1968 = vpop.f32.mrf.mxu0
      %v1969 = vpop.f32.mrf.mxu0
      %v1970 = vadd.f32 0.0, %v1969
      %1971 = vmatmul.bf16.gmra.mxu0 %v1858
      %v1972 = vpop.f32.mrf.mxu0
      %v1973 = vadd.f32 0.0, %v1972
      %v1974 = vpop.f32.mrf.mxu0
      %1975 = vdwg.mxu0
      %v1976 = vadd.f32 %v1737, %v1873
      %v1977 = vadd.f32 %v1739, %v1875
      %v1978 = vadd.f32 %v1743, %v1879
      %v1979 = vadd.f32 %v1746, %v1882
      %v1980 = vadd.f32 %v1750, %v1886
      %v1981 = vadd.f32 %v1752, %v1888
      %v1982 = vadd.f32 %v1756, %v1892
      %v1983 = vadd.f32 %v1759, %v1895
      %v1984 = vadd.f32 %v1763, %v1899
      %v1985 = vadd.f32 %v1765, %v1901
      %v1986 = vadd.f32 %v1769, %v1905
      %v1987 = vadd.f32 %v1772, %v1908
      %v1988 = vadd.f32 %v1776, %v1912
      %v1989 = vadd.f32 %v1778, %v1914
      %v1990 = vadd.f32 %v1782, %v1918
      %v1991 = vadd.f32 %v1785, %v1921
      %v1992 = vadd.f32 %v1789, %v1925
      %v1993 = vadd.f32 %v1791, %v1927
      %v1994 = vadd.f32 %v1795, %v1931
      %v1995 = vadd.f32 %v1798, %v1934
      %v1996 = vadd.f32 %v1802, %v1938
      %v1997 = vadd.f32 %v1804, %v1940
      %v1998 = vadd.f32 %v1808, %v1944
      %v1999 = vadd.f32 %v1811, %v1947
      %v2000 = vadd.f32 %v1815, %v1951
      %v2001 = vadd.f32 %v1817, %v1953
      %v2002 = vadd.f32 %v1821, %v1957
      %v2003 = vadd.f32 %v1824, %v1960
      %v2004 = vadd.f32 %v1828, %v1964
      %v2005 = vadd.f32 %v1830, %v1966
      %v2006 = vadd.f32 %v1834, %v1970
      %v2007 = vadd.f32 %v1837, %v1973
      %s2008 = scalar_lea.vmem %s4, 1
      %v2009 = vld [vmem:[%s2008] sm:$0x1]
      %v2010 = vpack.c.b16 %v1405, %v1405
      %vm2011 = vsmask.f32 7424
      %v2012 = vshrl.u32 %v1628, 16
      %v2014 = vshll.u32 %v1628, 16
      %v2016 = vrot.slane %v2014, 1
      %v2017 = vor.u32 %v2012, %v2016
      %v2018 = vshll.u32 %v1629, 16
      %v2020 = vrot.slane %v2018, 1
      %v2021 = vsel %vm2011, %v2017, %v2020
      %v2022 = vshrl.u32 %v1629, 16
      %v2024 = vor.u32 %v2022, %v2020
      %v2025 = vshll.u32 %v1630, 16
      %v2027 = vrot.slane %v2025, 1
      %v2028 = vsel %vm2011, %v2024, %v2027
      %v2029 = vshrl.u32 %v1630, 16
      %v2031 = vor.u32 %v2029, %v2027
      %v2032 = vshll.u32 %v1631, 16
      %v2034 = vrot.slane %v2032, 1
      %v2035 = vsel %vm2011, %v2031, %v2034
      %v2036 = vshrl.u32 %v1631, 16
      %v2038 = vor.u32 %v2036, %v2034
      %v2039 = vshll.u32 %v1632, 16
      %v2041 = vrot.slane %v2039, 1
      %v2042 = vsel %vm2011, %v2038, %v2041
      %v2043 = vshrl.u32 %v1632, 16
      %v2045 = vor.u32 %v2043, %v2041
      %v2046 = vshll.u32 %v1633, 16
      %v2048 = vrot.slane %v2046, 1
      %v2049 = vsel %vm2011, %v2045, %v2048
      %v2050 = vshrl.u32 %v1633, 16
      %v2052 = vor.u32 %v2050, %v2048
      %v2053 = vshll.u32 %v1634, 16
      %v2055 = vrot.slane %v2053, 1
      %v2056 = vsel %vm2011, %v2052, %v2055
      %v2057 = vshrl.u32 %v1634, 16
      %v2059 = vor.u32 %v2057, %v2055
      %v2060 = vshll.u32 %v1635, 16
      %v2062 = vrot.slane %v2060, 1
      %v2063 = vsel %vm2011, %v2059, %v2062
      %v2064 = vshrl.u32 %v1635, 16
      %v2066 = vor.u32 %v2064, %v2062
      %v2067 = vshll.u32 %v1636, 16
      %v2069 = vrot.slane %v2067, 1
      %v2070 = vsel %vm2011, %v2066, %v2069
      %v2071 = vshrl.u32 %v1636, 16
      %v2073 = vor.u32 %v2071, %v2069
      %v2074 = vshll.u32 %v1637, 16
      %v2076 = vrot.slane %v2074, 1
      %v2077 = vsel %vm2011, %v2073, %v2076
      %v2078 = vshrl.u32 %v1637, 16
      %v2080 = vor.u32 %v2078, %v2076
      %v2081 = vshll.u32 %v1638, 16
      %v2083 = vrot.slane %v2081, 1
      %v2084 = vsel %vm2011, %v2080, %v2083
      %v2085 = vshrl.u32 %v1638, 16
      %v2087 = vor.u32 %v2085, %v2083
      %v2088 = vshll.u32 %v1639, 16
      %v2090 = vrot.slane %v2088, 1
      %v2091 = vsel %vm2011, %v2087, %v2090
      %v2092 = vshrl.u32 %v1639, 16
      %v2094 = vor.u32 %v2092, %v2090
      %v2095 = vshll.u32 %v1640, 16
      %v2097 = vrot.slane %v2095, 1
      %v2098 = vsel %vm2011, %v2094, %v2097
      %v2099 = vshrl.u32 %v1640, 16
      %v2101 = vor.u32 %v2099, %v2097
      %v2102 = vshll.u32 %v1641, 16
      %v2104 = vrot.slane %v2102, 1
      %v2105 = vsel %vm2011, %v2101, %v2104
      %v2106 = vshrl.u32 %v1641, 16
      %v2108 = vor.u32 %v2106, %v2104
      %v2109 = vshll.u32 %v1642, 16
      %v2111 = vrot.slane %v2109, 1
      %v2112 = vsel %vm2011, %v2108, %v2111
      %v2113 = vshrl.u32 %v1642, 16
      %v2115 = vor.u32 %v2113, %v2111
      %v2116 = vshll.u32 %v1643, 16
      %v2118 = vrot.slane %v2116, 1
      %v2119 = vsel %vm2011, %v2115, %v2118
      %v2120 = vshrl.u32 %v1643, 16
      %v2122 = vor.u32 %v2120, %v2118
      %v2123 = vshll.u32 %v1644, 16
      %v2125 = vrot.slane %v2123, 1
      %v2126 = vsel %vm2011, %v2122, %v2125
      %v2127 = vshrl.u32 %v1644, 16
      %v2129 = vor.u32 %v2127, %v2125
      %v2130 = vshll.u32 %v1645, 16
      %v2132 = vrot.slane %v2130, 1
      %v2133 = vsel %vm2011, %v2129, %v2132
      %v2134 = vshrl.u32 %v1645, 16
      %v2136 = vor.u32 %v2134, %v2132
      %v2137 = vshll.u32 %v1646, 16
      %v2139 = vrot.slane %v2137, 1
      %v2140 = vsel %vm2011, %v2136, %v2139
      %v2141 = vshrl.u32 %v1646, 16
      %v2143 = vor.u32 %v2141, %v2139
      %v2144 = vshll.u32 %v1647, 16
      %v2146 = vrot.slane %v2144, 1
      %v2147 = vsel %vm2011, %v2143, %v2146
      %v2148 = vshrl.u32 %v1647, 16
      %v2150 = vor.u32 %v2148, %v2146
      %v2151 = vshll.u32 %v1648, 16
      %v2153 = vrot.slane %v2151, 1
      %v2154 = vsel %vm2011, %v2150, %v2153
      %v2155 = vshrl.u32 %v1648, 16
      %v2157 = vor.u32 %v2155, %v2153
      %v2158 = vshll.u32 %v1649, 16
      %v2160 = vrot.slane %v2158, 1
      %v2161 = vsel %vm2011, %v2157, %v2160
      %v2162 = vshrl.u32 %v1649, 16
      %v2164 = vor.u32 %v2162, %v2160
      %v2165 = vshll.u32 %v1650, 16
      %v2167 = vrot.slane %v2165, 1
      %v2168 = vsel %vm2011, %v2164, %v2167
      %v2169 = vshrl.u32 %v1650, 16
      %v2171 = vor.u32 %v2169, %v2167
      %v2172 = vshll.u32 %v1651, 16
      %v2174 = vrot.slane %v2172, 1
      %v2175 = vsel %vm2011, %v2171, %v2174
      %v2176 = vshrl.u32 %v1651, 16
      %v2178 = vor.u32 %v2176, %v2174
      %v2180 = vshll.u32 %v2010, 16
      %v2182 = vrot.slane %v2180, 1
      %v2183 = vsel %vm2011, %v2178, %v2182
      %v2185 = vsel %vm1432, %v2021, 0
      %v2188 = vsel %vm1432, %v2028, 0
      %v2191 = vsel %vm1432, %v2035, 0
      %v2194 = vsel %vm1432, %v2042, 0
      %v2197 = vsel %vm1432, %v2049, 0
      %v2200 = vsel %vm1432, %v2056, 0
      %v2203 = vsel %vm1432, %v2063, 0
      %v2206 = vsel %vm1432, %v2070, 0
      %v2209 = vsel %vm1432, %v2077, 0
      %v2212 = vsel %vm1432, %v2084, 0
      %v2215 = vsel %vm1432, %v2091, 0
      %v2218 = vsel %vm1432, %v2098, 0
      %v2221 = vsel %vm1432, %v2105, 0
      %v2224 = vsel %vm1432, %v2112, 0
      %v2227 = vsel %vm1432, %v2119, 0
      %v2230 = vsel %vm1432, %v2126, 0
      %v2233 = vsel %vm1432, %v2133, 0
      %v2236 = vsel %vm1432, %v2140, 0
      %v2239 = vsel %vm1432, %v2147, 0
      %v2242 = vsel %vm1432, %v2154, 0
      %v2245 = vsel %vm1432, %v2161, 0
      %v2248 = vsel %vm1432, %v2168, 0
      %v2251 = vsel %vm1432, %v2175, 0
      %v2254 = vsel %vm1432, %v2183, 0
      %v2257 = vsel %vm1505, %v2009, 0
      %2259 = vmatpush.bf16.msra.mxu0 0
      %2260 = vmatpush.bf16.msra.mxu0 0
      %2261 = vmatpush.bf16.msra.mxu0 0
      %2262 = vmatpush.bf16.msra.mxu0 0
      %2263 = vmatpush.bf16.msra.mxu0 0
      %2264 = vmatpush.bf16.msra.mxu0 0
      %2265 = vmatpush.bf16.msra.mxu0 0
      %2266 = vmatpush.bf16.msra.mxu0 %v2257
      %2267 = vmatmul.bf16.gmra.mxu0 %v2185
      %v2268 = vpop.f32.mrf.mxu0
      %v2269 = vadd.f32 0.0, %v2268
      %v2270 = vpop.f32.mrf.mxu0
      %v2271 = vadd.f32 0.0, %v2270
      %2272 = vmatmul.bf16.gmra.mxu0 %v2188
      %v2273 = vpop.f32.mrf.mxu0
      %v2274 = vpop.f32.mrf.mxu0
      %v2275 = vadd.f32 0.0, %v2274
      %2276 = vmatmul.bf16.gmra.mxu0 %v2191
      %v2277 = vpop.f32.mrf.mxu0
      %v2278 = vadd.f32 0.0, %v2277
      %v2279 = vpop.f32.mrf.mxu0
      %2280 = vmatmul.bf16.gmra.mxu0 %v2194
      %v2281 = vpop.f32.mrf.mxu0
      %v2282 = vadd.f32 0.0, %v2281
      %v2283 = vpop.f32.mrf.mxu0
      %v2284 = vadd.f32 0.0, %v2283
      %2285 = vmatmul.bf16.gmra.mxu0 %v2197
      %v2286 = vpop.f32.mrf.mxu0
      %v2287 = vpop.f32.mrf.mxu0
      %v2288 = vadd.f32 0.0, %v2287
      %2289 = vmatmul.bf16.gmra.mxu0 %v2200
      %v2290 = vpop.f32.mrf.mxu0
      %v2291 = vadd.f32 0.0, %v2290
      %v2292 = vpop.f32.mrf.mxu0
      %2293 = vmatmul.bf16.gmra.mxu0 %v2203
      %v2294 = vpop.f32.mrf.mxu0
      %v2295 = vadd.f32 0.0, %v2294
      %v2296 = vpop.f32.mrf.mxu0
      %v2297 = vadd.f32 0.0, %v2296
      %2298 = vmatmul.bf16.gmra.mxu0 %v2206
      %v2299 = vpop.f32.mrf.mxu0
      %v2300 = vpop.f32.mrf.mxu0
      %v2301 = vadd.f32 0.0, %v2300
      %2302 = vmatmul.bf16.gmra.mxu0 %v2209
      %v2303 = vpop.f32.mrf.mxu0
      %v2304 = vadd.f32 0.0, %v2303
      %v2305 = vpop.f32.mrf.mxu0
      %2306 = vmatmul.bf16.gmra.mxu0 %v2212
      %v2307 = vpop.f32.mrf.mxu0
      %v2308 = vadd.f32 0.0, %v2307
      %v2309 = vpop.f32.mrf.mxu0
      %v2310 = vadd.f32 0.0, %v2309
      %2311 = vmatmul.bf16.gmra.mxu0 %v2215
      %v2312 = vpop.f32.mrf.mxu0
      %v2313 = vpop.f32.mrf.mxu0
      %v2314 = vadd.f32 0.0, %v2313
      %2315 = vmatmul.bf16.gmra.mxu0 %v2218
      %v2316 = vpop.f32.mrf.mxu0
      %v2317 = vadd.f32 0.0, %v2316
      %v2318 = vpop.f32.mrf.mxu0
      %2319 = vmatmul.bf16.gmra.mxu0 %v2221
      %v2320 = vpop.f32.mrf.mxu0
      %v2321 = vadd.f32 0.0, %v2320
      %v2322 = vpop.f32.mrf.mxu0
      %v2323 = vadd.f32 0.0, %v2322
      %2324 = vmatmul.bf16.gmra.mxu0 %v2224
      %v2325 = vpop.f32.mrf.mxu0
      %v2326 = vpop.f32.mrf.mxu0
      %v2327 = vadd.f32 0.0, %v2326
      %2328 = vmatmul.bf16.gmra.mxu0 %v2227
      %v2329 = vpop.f32.mrf.mxu0
      %v2330 = vadd.f32 0.0, %v2329
      %v2331 = vpop.f32.mrf.mxu0
      %2332 = vmatmul.bf16.gmra.mxu0 %v2230
      %v2333 = vpop.f32.mrf.mxu0
      %v2334 = vadd.f32 0.0, %v2333
      %v2335 = vpop.f32.mrf.mxu0
      %v2336 = vadd.f32 0.0, %v2335
      %2337 = vmatmul.bf16.gmra.mxu0 %v2233
      %v2338 = vpop.f32.mrf.mxu0
      %v2339 = vpop.f32.mrf.mxu0
      %v2340 = vadd.f32 0.0, %v2339
      %2341 = vmatmul.bf16.gmra.mxu0 %v2236
      %v2342 = vpop.f32.mrf.mxu0
      %v2343 = vadd.f32 0.0, %v2342
      %v2344 = vpop.f32.mrf.mxu0
      %2345 = vmatmul.bf16.gmra.mxu0 %v2239
      %v2346 = vpop.f32.mrf.mxu0
      %v2347 = vadd.f32 0.0, %v2346
      %v2348 = vpop.f32.mrf.mxu0
      %v2349 = vadd.f32 0.0, %v2348
      %2350 = vmatmul.bf16.gmra.mxu0 %v2242
      %v2351 = vpop.f32.mrf.mxu0
      %v2352 = vpop.f32.mrf.mxu0
      %v2353 = vadd.f32 0.0, %v2352
      %2354 = vmatmul.bf16.gmra.mxu0 %v2245
      %v2355 = vpop.f32.mrf.mxu0
      %v2356 = vadd.f32 0.0, %v2355
      %v2357 = vpop.f32.mrf.mxu0
      %2358 = vmatmul.bf16.gmra.mxu0 %v2248
      %v2359 = vpop.f32.mrf.mxu0
      %v2360 = vadd.f32 0.0, %v2359
      %v2361 = vpop.f32.mrf.mxu0
      %v2362 = vadd.f32 0.0, %v2361
      %2363 = vmatmul.bf16.gmra.mxu0 %v2251
      %v2364 = vpop.f32.mrf.mxu0
      %v2365 = vpop.f32.mrf.mxu0
      %v2366 = vadd.f32 0.0, %v2365
      %2367 = vmatmul.bf16.gmra.mxu0 %v2254
      %v2368 = vpop.f32.mrf.mxu0
      %v2369 = vadd.f32 0.0, %v2368
      %v2370 = vpop.f32.mrf.mxu0
      %2371 = vdwg.mxu0
      %v2372 = vadd.f32 %v1976, %v2269
      %v2373 = vadd.f32 %v1977, %v2271
      %v2374 = vadd.f32 %v1978, %v2275
      %v2375 = vadd.f32 %v1979, %v2278
      %v2376 = vadd.f32 %v1980, %v2282
      %v2377 = vadd.f32 %v1981, %v2284
      %v2378 = vadd.f32 %v1982, %v2288
      %v2379 = vadd.f32 %v1983, %v2291
      %v2380 = vadd.f32 %v1984, %v2295
      %v2381 = vadd.f32 %v1985, %v2297
      %v2382 = vadd.f32 %v1986, %v2301
      %v2383 = vadd.f32 %v1987, %v2304
      %v2384 = vadd.f32 %v1988, %v2308
      %v2385 = vadd.f32 %v1989, %v2310
      %v2386 = vadd.f32 %v1990, %v2314
      %v2387 = vadd.f32 %v1991, %v2317
      %v2388 = vadd.f32 %v1992, %v2321
      %v2389 = vadd.f32 %v1993, %v2323
      %v2390 = vadd.f32 %v1994, %v2327
      %v2391 = vadd.f32 %v1995, %v2330
      %v2392 = vadd.f32 %v1996, %v2334
      %v2393 = vadd.f32 %v1997, %v2336
      %v2394 = vadd.f32 %v1998, %v2340
      %v2395 = vadd.f32 %v1999, %v2343
      %v2396 = vadd.f32 %v2000, %v2347
      %v2397 = vadd.f32 %v2001, %v2349
      %v2398 = vadd.f32 %v2002, %v2353
      %v2399 = vadd.f32 %v2003, %v2356
      %v2400 = vadd.f32 %v2004, %v2360
      %v2401 = vadd.f32 %v2005, %v2362
      %v2402 = vadd.f32 %v2006, %v2366
      %v2403 = vadd.f32 %v2007, %v2369
      %s2404 = scalar_lea.vmem %s4, 4
      %v2405 = vld [vmem:[%s2404] sm:$0x1]
      %v2406 = vpack.c.b16 %v1845, %v1845
      %v2407 = vshrl.u32 %v1408, 16
      %v2409 = vshll.u32 %v1408, 16
      %v2411 = vrot.slane %v2409, 1
      %v2412 = vor.u32 %v2407, %v2411
      %v2413 = vshll.u32 %v1409, 16
      %v2415 = vrot.slane %v2413, 1
      %v2416 = vsel %vm2011, %v2412, %v2415
      %v2417 = vshrl.u32 %v1409, 16
      %v2419 = vor.u32 %v2417, %v2415
      %v2420 = vshll.u32 %v1410, 16
      %v2422 = vrot.slane %v2420, 1
      %v2423 = vsel %vm2011, %v2419, %v2422
      %v2424 = vshrl.u32 %v1410, 16
      %v2426 = vor.u32 %v2424, %v2422
      %v2427 = vshll.u32 %v1411, 16
      %v2429 = vrot.slane %v2427, 1
      %v2430 = vsel %vm2011, %v2426, %v2429
      %v2431 = vshrl.u32 %v1411, 16
      %v2433 = vor.u32 %v2431, %v2429
      %v2434 = vshll.u32 %v1412, 16
      %v2436 = vrot.slane %v2434, 1
      %v2437 = vsel %vm2011, %v2433, %v2436
      %v2438 = vshrl.u32 %v1412, 16
      %v2440 = vor.u32 %v2438, %v2436
      %v2441 = vshll.u32 %v1413, 16
      %v2443 = vrot.slane %v2441, 1
      %v2444 = vsel %vm2011, %v2440, %v2443
      %v2445 = vshrl.u32 %v1413, 16
      %v2447 = vor.u32 %v2445, %v2443
      %v2448 = vshll.u32 %v1414, 16
      %v2450 = vrot.slane %v2448, 1
      %v2451 = vsel %vm2011, %v2447, %v2450
      %v2452 = vshrl.u32 %v1414, 16
      %v2454 = vor.u32 %v2452, %v2450
      %v2455 = vshll.u32 %v1415, 16
      %v2457 = vrot.slane %v2455, 1
      %v2458 = vsel %vm2011, %v2454, %v2457
      %v2459 = vshrl.u32 %v1415, 16
      %v2461 = vor.u32 %v2459, %v2457
      %v2462 = vshll.u32 %v1416, 16
      %v2464 = vrot.slane %v2462, 1
      %v2465 = vsel %vm2011, %v2461, %v2464
      %v2466 = vshrl.u32 %v1416, 16
      %v2468 = vor.u32 %v2466, %v2464
      %v2469 = vshll.u32 %v1417, 16
      %v2471 = vrot.slane %v2469, 1
      %v2472 = vsel %vm2011, %v2468, %v2471
      %v2473 = vshrl.u32 %v1417, 16
      %v2475 = vor.u32 %v2473, %v2471
      %v2476 = vshll.u32 %v1418, 16
      %v2478 = vrot.slane %v2476, 1
      %v2479 = vsel %vm2011, %v2475, %v2478
      %v2480 = vshrl.u32 %v1418, 16
      %v2482 = vor.u32 %v2480, %v2478
      %v2483 = vshll.u32 %v1419, 16
      %v2485 = vrot.slane %v2483, 1
      %v2486 = vsel %vm2011, %v2482, %v2485
      %v2487 = vshrl.u32 %v1419, 16
      %v2489 = vor.u32 %v2487, %v2485
      %v2490 = vshll.u32 %v1420, 16
      %v2492 = vrot.slane %v2490, 1
      %v2493 = vsel %vm2011, %v2489, %v2492
      %v2494 = vshrl.u32 %v1420, 16
      %v2496 = vor.u32 %v2494, %v2492
      %v2497 = vshll.u32 %v1421, 16
      %v2499 = vrot.slane %v2497, 1
      %v2500 = vsel %vm2011, %v2496, %v2499
      %v2501 = vshrl.u32 %v1421, 16
      %v2503 = vor.u32 %v2501, %v2499
      %v2504 = vshll.u32 %v1422, 16
      %v2506 = vrot.slane %v2504, 1
      %v2507 = vsel %vm2011, %v2503, %v2506
      %v2508 = vshrl.u32 %v1422, 16
      %v2510 = vor.u32 %v2508, %v2506
      %v2511 = vshll.u32 %v1423, 16
      %v2513 = vrot.slane %v2511, 1
      %v2514 = vsel %vm2011, %v2510, %v2513
      %v2515 = vshrl.u32 %v1423, 16
      %v2517 = vor.u32 %v2515, %v2513
      %v2518 = vshll.u32 %v1424, 16
      %v2520 = vrot.slane %v2518, 1
      %v2521 = vsel %vm2011, %v2517, %v2520
      %v2522 = vshrl.u32 %v1424, 16
      %v2524 = vor.u32 %v2522, %v2520
      %v2525 = vshll.u32 %v1425, 16
      %v2527 = vrot.slane %v2525, 1
      %v2528 = vsel %vm2011, %v2524, %v2527
      %v2529 = vshrl.u32 %v1425, 16
      %v2531 = vor.u32 %v2529, %v2527
      %v2532 = vshll.u32 %v1426, 16
      %v2534 = vrot.slane %v2532, 1
      %v2535 = vsel %vm2011, %v2531, %v2534
      %v2536 = vshrl.u32 %v1426, 16
      %v2538 = vor.u32 %v2536, %v2534
      %v2539 = vshll.u32 %v1427, 16
      %v2541 = vrot.slane %v2539, 1
      %v2542 = vsel %vm2011, %v2538, %v2541
      %v2543 = vshrl.u32 %v1427, 16
      %v2545 = vor.u32 %v2543, %v2541
      %v2546 = vshll.u32 %v1428, 16
      %v2548 = vrot.slane %v2546, 1
      %v2549 = vsel %vm2011, %v2545, %v2548
      %v2550 = vshrl.u32 %v1428, 16
      %v2552 = vor.u32 %v2550, %v2548
      %v2553 = vshll.u32 %v1429, 16
      %v2555 = vrot.slane %v2553, 1
      %v2556 = vsel %vm2011, %v2552, %v2555
      %v2557 = vshrl.u32 %v1429, 16
      %v2559 = vor.u32 %v2557, %v2555
      %v2560 = vshll.u32 %v1430, 16
      %v2562 = vrot.slane %v2560, 1
      %v2563 = vsel %vm2011, %v2559, %v2562
      %v2564 = vshrl.u32 %v1430, 16
      %v2566 = vor.u32 %v2564, %v2562
      %v2567 = vshll.u32 %v1431, 16
      %v2569 = vrot.slane %v2567, 1
      %v2570 = vsel %vm2011, %v2566, %v2569
      %v2571 = vshrl.u32 %v1431, 16
      %v2573 = vor.u32 %v2571, %v2569
      %v2575 = vshll.u32 %v2406, 16
      %v2577 = vrot.slane %v2575, 1
      %v2578 = vsel %vm2011, %v2573, %v2577
      %v2580 = vsel %vm1432, %v2416, 0
      %v2583 = vsel %vm1432, %v2423, 0
      %v2586 = vsel %vm1432, %v2430, 0
      %v2589 = vsel %vm1432, %v2437, 0
      %v2592 = vsel %vm1432, %v2444, 0
      %v2595 = vsel %vm1432, %v2451, 0
      %v2598 = vsel %vm1432, %v2458, 0
      %v2601 = vsel %vm1432, %v2465, 0
      %v2604 = vsel %vm1432, %v2472, 0
      %v2607 = vsel %vm1432, %v2479, 0
      %v2610 = vsel %vm1432, %v2486, 0
      %v2613 = vsel %vm1432, %v2493, 0
      %v2616 = vsel %vm1432, %v2500, 0
      %v2619 = vsel %vm1432, %v2507, 0
      %v2622 = vsel %vm1432, %v2514, 0
      %v2625 = vsel %vm1432, %v2521, 0
      %v2628 = vsel %vm1432, %v2528, 0
      %v2631 = vsel %vm1432, %v2535, 0
      %v2634 = vsel %vm1432, %v2542, 0
      %v2637 = vsel %vm1432, %v2549, 0
      %v2640 = vsel %vm1432, %v2556, 0
      %v2643 = vsel %vm1432, %v2563, 0
      %v2646 = vsel %vm1432, %v2570, 0
      %v2649 = vsel %vm1432, %v2578, 0
      %v2652 = vsel %vm1505, %v2405, 0
      %2654 = vmatpush.bf16.msra.mxu0 0
      %2655 = vmatpush.bf16.msra.mxu0 0
      %2656 = vmatpush.bf16.msra.mxu0 0
      %2657 = vmatpush.bf16.msra.mxu0 0
      %2658 = vmatpush.bf16.msra.mxu0 0
      %2659 = vmatpush.bf16.msra.mxu0 0
      %2660 = vmatpush.bf16.msra.mxu0 0
      %2661 = vmatpush.bf16.msra.mxu0 %v2652
      %2662 = vmatmul.bf16.gmra.mxu0 %v2580
      %v2663 = vpop.f32.mrf.mxu0
      %v2664 = vadd.f32 0.0, %v2663
      %v2665 = vpop.f32.mrf.mxu0
      %v2666 = vadd.f32 0.0, %v2665
      %2667 = vmatmul.bf16.gmra.mxu0 %v2583
      %v2668 = vpop.f32.mrf.mxu0
      %v2669 = vpop.f32.mrf.mxu0
      %v2670 = vadd.f32 0.0, %v2669
      %2671 = vmatmul.bf16.gmra.mxu0 %v2586
      %v2672 = vpop.f32.mrf.mxu0
      %v2673 = vadd.f32 0.0, %v2672
      %v2674 = vpop.f32.mrf.mxu0
      %2675 = vmatmul.bf16.gmra.mxu0 %v2589
      %v2676 = vpop.f32.mrf.mxu0
      %v2677 = vadd.f32 0.0, %v2676
      %v2678 = vpop.f32.mrf.mxu0
      %v2679 = vadd.f32 0.0, %v2678
      %2680 = vmatmul.bf16.gmra.mxu0 %v2592
      %v2681 = vpop.f32.mrf.mxu0
      %v2682 = vpop.f32.mrf.mxu0
      %v2683 = vadd.f32 0.0, %v2682
      %2684 = vmatmul.bf16.gmra.mxu0 %v2595
      %v2685 = vpop.f32.mrf.mxu0
      %v2686 = vadd.f32 0.0, %v2685
      %v2687 = vpop.f32.mrf.mxu0
      %2688 = vmatmul.bf16.gmra.mxu0 %v2598
      %v2689 = vpop.f32.mrf.mxu0
      %v2690 = vadd.f32 0.0, %v2689
      %v2691 = vpop.f32.mrf.mxu0
      %v2692 = vadd.f32 0.0, %v2691
      %2693 = vmatmul.bf16.gmra.mxu0 %v2601
      %v2694 = vpop.f32.mrf.mxu0
      %v2695 = vpop.f32.mrf.mxu0
      %v2696 = vadd.f32 0.0, %v2695
      %2697 = vmatmul.bf16.gmra.mxu0 %v2604
      %v2698 = vpop.f32.mrf.mxu0
      %v2699 = vadd.f32 0.0, %v2698
      %v2700 = vpop.f32.mrf.mxu0
      %2701 = vmatmul.bf16.gmra.mxu0 %v2607
      %v2702 = vpop.f32.mrf.mxu0
      %v2703 = vadd.f32 0.0, %v2702
      %v2704 = vpop.f32.mrf.mxu0
      %v2705 = vadd.f32 0.0, %v2704
      %2706 = vmatmul.bf16.gmra.mxu0 %v2610
      %v2707 = vpop.f32.mrf.mxu0
      %v2708 = vpop.f32.mrf.mxu0
      %v2709 = vadd.f32 0.0, %v2708
      %2710 = vmatmul.bf16.gmra.mxu0 %v2613
      %v2711 = vpop.f32.mrf.mxu0
      %v2712 = vadd.f32 0.0, %v2711
      %v2713 = vpop.f32.mrf.mxu0
      %2714 = vmatmul.bf16.gmra.mxu0 %v2616
      %v2715 = vpop.f32.mrf.mxu0
      %v2716 = vadd.f32 0.0, %v2715
      %v2717 = vpop.f32.mrf.mxu0
      %v2718 = vadd.f32 0.0, %v2717
      %2719 = vmatmul.bf16.gmra.mxu0 %v2619
      %v2720 = vpop.f32.mrf.mxu0
      %v2721 = vpop.f32.mrf.mxu0
      %v2722 = vadd.f32 0.0, %v2721
      %2723 = vmatmul.bf16.gmra.mxu0 %v2622
      %v2724 = vpop.f32.mrf.mxu0
      %v2725 = vadd.f32 0.0, %v2724
      %v2726 = vpop.f32.mrf.mxu0
      %2727 = vmatmul.bf16.gmra.mxu0 %v2625
      %v2728 = vpop.f32.mrf.mxu0
      %v2729 = vadd.f32 0.0, %v2728
      %v2730 = vpop.f32.mrf.mxu0
      %v2731 = vadd.f32 0.0, %v2730
      %2732 = vmatmul.bf16.gmra.mxu0 %v2628
      %v2733 = vpop.f32.mrf.mxu0
      %v2734 = vpop.f32.mrf.mxu0
      %v2735 = vadd.f32 0.0, %v2734
      %2736 = vmatmul.bf16.gmra.mxu0 %v2631
      %v2737 = vpop.f32.mrf.mxu0
      %v2738 = vadd.f32 0.0, %v2737
      %v2739 = vpop.f32.mrf.mxu0
      %2740 = vmatmul.bf16.gmra.mxu0 %v2634
      %v2741 = vpop.f32.mrf.mxu0
      %v2742 = vadd.f32 0.0, %v2741
      %v2743 = vpop.f32.mrf.mxu0
      %v2744 = vadd.f32 0.0, %v2743
      %2745 = vmatmul.bf16.gmra.mxu0 %v2637
      %v2746 = vpop.f32.mrf.mxu0
      %v2747 = vpop.f32.mrf.mxu0
      %v2748 = vadd.f32 0.0, %v2747
      %2749 = vmatmul.bf16.gmra.mxu0 %v2640
      %v2750 = vpop.f32.mrf.mxu0
      %v2751 = vadd.f32 0.0, %v2750
      %v2752 = vpop.f32.mrf.mxu0
      %2753 = vmatmul.bf16.gmra.mxu0 %v2643
      %v2754 = vpop.f32.mrf.mxu0
      %v2755 = vadd.f32 0.0, %v2754
      %v2756 = vpop.f32.mrf.mxu0
      %v2757 = vadd.f32 0.0, %v2756
      %2758 = vmatmul.bf16.gmra.mxu0 %v2646
      %v2759 = vpop.f32.mrf.mxu0
      %v2760 = vpop.f32.mrf.mxu0
      %v2761 = vadd.f32 0.0, %v2760
      %2762 = vmatmul.bf16.gmra.mxu0 %v2649
      %v2763 = vpop.f32.mrf.mxu0
      %v2764 = vadd.f32 0.0, %v2763
      %v2765 = vpop.f32.mrf.mxu0
      %2766 = vdwg.mxu0
      %v2767 = vadd.f32 %v2372, %v2664
      %v2768 = vadd.f32 %v2373, %v2666
      %v2769 = vadd.f32 %v2374, %v2670
      %v2770 = vadd.f32 %v2375, %v2673
      %v2771 = vadd.f32 %v2376, %v2677
      %v2772 = vadd.f32 %v2377, %v2679
      %v2773 = vadd.f32 %v2378, %v2683
      %v2774 = vadd.f32 %v2379, %v2686
      %v2775 = vadd.f32 %v2380, %v2690
      %v2776 = vadd.f32 %v2381, %v2692
      %v2777 = vadd.f32 %v2382, %v2696
      %v2778 = vadd.f32 %v2383, %v2699
      %v2779 = vadd.f32 %v2384, %v2703
      %v2780 = vadd.f32 %v2385, %v2705
      %v2781 = vadd.f32 %v2386, %v2709
      %v2782 = vadd.f32 %v2387, %v2712
      %v2783 = vadd.f32 %v2388, %v2716
      %v2784 = vadd.f32 %v2389, %v2718
      %v2785 = vadd.f32 %v2390, %v2722
      %v2786 = vadd.f32 %v2391, %v2725
      %v2787 = vadd.f32 %v2392, %v2729
      %v2788 = vadd.f32 %v2393, %v2731
      %v2789 = vadd.f32 %v2394, %v2735
      %v2790 = vadd.f32 %v2395, %v2738
      %v2791 = vadd.f32 %v2396, %v2742
      %v2792 = vadd.f32 %v2397, %v2744
      %v2793 = vadd.f32 %v2398, %v2748
      %v2794 = vadd.f32 %v2399, %v2751
      %v2795 = vadd.f32 %v2400, %v2755
      %v2796 = vadd.f32 %v2401, %v2757
      %v2797 = vadd.f32 %v2402, %v2761
      %v2798 = vadd.f32 %v2403, %v2764
      %s2799 = scalar_lea.vmem %s4, 7
      %v2800 = vld [vmem:[%s2799] sm:$0x1]
      %v2802 = vunpack.c.l.b16 %v1308
      %v2803 = vpack.c.b16 %v2802, %v2802
      %v2804 = vshll.u32 %v1848, 16
      %v2806 = vrot.slane %v2804, 1
      %v2807 = vsel %vm2011, %v2178, %v2806
      %v2808 = vshrl.u32 %v1848, 16
      %v2810 = vor.u32 %v2808, %v2806
      %v2811 = vshll.u32 %v1849, 16
      %v2813 = vrot.slane %v2811, 1
      %v2814 = vsel %vm2011, %v2810, %v2813
      %v2815 = vshrl.u32 %v1849, 16
      %v2817 = vor.u32 %v2815, %v2813
      %v2818 = vshll.u32 %v1850, 16
      %v2820 = vrot.slane %v2818, 1
      %v2821 = vsel %vm2011, %v2817, %v2820
      %v2822 = vshrl.u32 %v1850, 16
      %v2824 = vor.u32 %v2822, %v2820
      %v2826 = vshll.u32 %v2803, 16
      %v2828 = vrot.slane %v2826, 1
      %v2829 = vsel %vm2011, %v2824, %v2828
      %v2831 = vsel %vm1432, %v2807, 0
      %v2834 = vsel %vm1432, %v2814, 0
      %v2837 = vsel %vm1432, %v2821, 0
      %v2840 = vsel %vm1432, %v2829, 0
      %v2843 = vsel %vm1505, %v2800, 0
      %2845 = vmatpush.bf16.msra.mxu0 0
      %2846 = vmatpush.bf16.msra.mxu0 0
      %2847 = vmatpush.bf16.msra.mxu0 0
      %2848 = vmatpush.bf16.msra.mxu0 0
      %2849 = vmatpush.bf16.msra.mxu0 0
      %2850 = vmatpush.bf16.msra.mxu0 0
      %2851 = vmatpush.bf16.msra.mxu0 0
      %2852 = vmatpush.bf16.msra.mxu0 %v2843
      %2853 = vmatmul.bf16.gmra.mxu0 %v2194
      %v2854 = vpop.f32.mrf.mxu0
      %v2855 = vadd.f32 0.0, %v2854
      %v2856 = vpop.f32.mrf.mxu0
      %v2857 = vadd.f32 0.0, %v2856
      %2858 = vmatmul.bf16.gmra.mxu0 %v2197
      %v2859 = vpop.f32.mrf.mxu0
      %v2860 = vpop.f32.mrf.mxu0
      %v2861 = vadd.f32 0.0, %v2860
      %2862 = vmatmul.bf16.gmra.mxu0 %v2200
      %v2863 = vpop.f32.mrf.mxu0
      %v2864 = vadd.f32 0.0, %v2863
      %v2865 = vpop.f32.mrf.mxu0
      %2866 = vmatmul.bf16.gmra.mxu0 %v2203
      %v2867 = vpop.f32.mrf.mxu0
      %v2868 = vadd.f32 0.0, %v2867
      %v2869 = vpop.f32.mrf.mxu0
      %v2870 = vadd.f32 0.0, %v2869
      %2871 = vmatmul.bf16.gmra.mxu0 %v2206
      %v2872 = vpop.f32.mrf.mxu0
      %v2873 = vpop.f32.mrf.mxu0
      %v2874 = vadd.f32 0.0, %v2873
      %2875 = vmatmul.bf16.gmra.mxu0 %v2209
      %v2876 = vpop.f32.mrf.mxu0
      %v2877 = vadd.f32 0.0, %v2876
      %v2878 = vpop.f32.mrf.mxu0
      %2879 = vmatmul.bf16.gmra.mxu0 %v2212
      %v2880 = vpop.f32.mrf.mxu0
      %v2881 = vadd.f32 0.0, %v2880
      %v2882 = vpop.f32.mrf.mxu0
      %v2883 = vadd.f32 0.0, %v2882
      %2884 = vmatmul.bf16.gmra.mxu0 %v2215
      %v2885 = vpop.f32.mrf.mxu0
      %v2886 = vpop.f32.mrf.mxu0
      %v2887 = vadd.f32 0.0, %v2886
      %2888 = vmatmul.bf16.gmra.mxu0 %v2218
      %v2889 = vpop.f32.mrf.mxu0
      %v2890 = vadd.f32 0.0, %v2889
      %v2891 = vpop.f32.mrf.mxu0
      %2892 = vmatmul.bf16.gmra.mxu0 %v2221
      %v2893 = vpop.f32.mrf.mxu0
      %v2894 = vadd.f32 0.0, %v2893
      %v2895 = vpop.f32.mrf.mxu0
      %v2896 = vadd.f32 0.0, %v2895
      %2897 = vmatmul.bf16.gmra.mxu0 %v2224
      %v2898 = vpop.f32.mrf.mxu0
      %v2899 = vpop.f32.mrf.mxu0
      %v2900 = vadd.f32 0.0, %v2899
      %2901 = vmatmul.bf16.gmra.mxu0 %v2227
      %v2902 = vpop.f32.mrf.mxu0
      %v2903 = vadd.f32 0.0, %v2902
      %v2904 = vpop.f32.mrf.mxu0
      %2905 = vmatmul.bf16.gmra.mxu0 %v2230
      %v2906 = vpop.f32.mrf.mxu0
      %v2907 = vadd.f32 0.0, %v2906
      %v2908 = vpop.f32.mrf.mxu0
      %v2909 = vadd.f32 0.0, %v2908
      %2910 = vmatmul.bf16.gmra.mxu0 %v2233
      %v2911 = vpop.f32.mrf.mxu0
      %v2912 = vpop.f32.mrf.mxu0
      %v2913 = vadd.f32 0.0, %v2912
      %2914 = vmatmul.bf16.gmra.mxu0 %v2236
      %v2915 = vpop.f32.mrf.mxu0
      %v2916 = vadd.f32 0.0, %v2915
      %v2917 = vpop.f32.mrf.mxu0
      %2918 = vmatmul.bf16.gmra.mxu0 %v2239
      %v2919 = vpop.f32.mrf.mxu0
      %v2920 = vadd.f32 0.0, %v2919
      %v2921 = vpop.f32.mrf.mxu0
      %v2922 = vadd.f32 0.0, %v2921
      %2923 = vmatmul.bf16.gmra.mxu0 %v2242
      %v2924 = vpop.f32.mrf.mxu0
      %v2925 = vpop.f32.mrf.mxu0
      %v2926 = vadd.f32 0.0, %v2925
      %2927 = vmatmul.bf16.gmra.mxu0 %v2245
      %v2928 = vpop.f32.mrf.mxu0
      %v2929 = vadd.f32 0.0, %v2928
      %v2930 = vpop.f32.mrf.mxu0
      %2931 = vmatmul.bf16.gmra.mxu0 %v2248
      %v2932 = vpop.f32.mrf.mxu0
      %v2933 = vadd.f32 0.0, %v2932
      %v2934 = vpop.f32.mrf.mxu0
      %v2935 = vadd.f32 0.0, %v2934
      %2936 = vmatmul.bf16.gmra.mxu0 %v2251
      %v2937 = vpop.f32.mrf.mxu0
      %v2938 = vpop.f32.mrf.mxu0
      %v2939 = vadd.f32 0.0, %v2938
      %2940 = vmatmul.bf16.gmra.mxu0 %v2831
      %v2941 = vpop.f32.mrf.mxu0
      %v2942 = vadd.f32 0.0, %v2941
      %v2943 = vpop.f32.mrf.mxu0
      %2944 = vmatmul.bf16.gmra.mxu0 %v2834
      %v2945 = vpop.f32.mrf.mxu0
      %v2946 = vadd.f32 0.0, %v2945
      %v2947 = vpop.f32.mrf.mxu0
      %v2948 = vadd.f32 0.0, %v2947
      %2949 = vmatmul.bf16.gmra.mxu0 %v2837
      %v2950 = vpop.f32.mrf.mxu0
      %v2951 = vpop.f32.mrf.mxu0
      %v2952 = vadd.f32 0.0, %v2951
      %2953 = vmatmul.bf16.gmra.mxu0 %v2840
      %v2954 = vpop.f32.mrf.mxu0
      %v2955 = vadd.f32 0.0, %v2954
      %v2956 = vpop.f32.mrf.mxu0
      %2957 = vdwg.mxu0
      %v2958 = vadd.f32 %v2767, %v2855
      %v2959 = vadd.f32 %v2768, %v2857
      %v2960 = vadd.f32 %v2769, %v2861
      %v2961 = vadd.f32 %v2770, %v2864
      %v2962 = vadd.f32 %v2771, %v2868
      %v2963 = vadd.f32 %v2772, %v2870
      %v2964 = vadd.f32 %v2773, %v2874
      %v2965 = vadd.f32 %v2774, %v2877
      %v2966 = vadd.f32 %v2775, %v2881
      %v2967 = vadd.f32 %v2776, %v2883
      %v2968 = vadd.f32 %v2777, %v2887
      %v2969 = vadd.f32 %v2778, %v2890
      %v2970 = vadd.f32 %v2779, %v2894
      %v2971 = vadd.f32 %v2780, %v2896
      %v2972 = vadd.f32 %v2781, %v2900
      %v2973 = vadd.f32 %v2782, %v2903
      %v2974 = vadd.f32 %v2783, %v2907
      %v2975 = vadd.f32 %v2784, %v2909
      %v2976 = vadd.f32 %v2785, %v2913
      %v2977 = vadd.f32 %v2786, %v2916
      %v2978 = vadd.f32 %v2787, %v2920
      %v2979 = vadd.f32 %v2788, %v2922
      %v2980 = vadd.f32 %v2789, %v2926
      %v2981 = vadd.f32 %v2790, %v2929
      %v2982 = vadd.f32 %v2791, %v2933
      %v2983 = vadd.f32 %v2792, %v2935
      %v2984 = vadd.f32 %v2793, %v2939
      %v2985 = vadd.f32 %v2794, %v2942
      %v2986 = vadd.f32 %v2795, %v2946
      %v2987 = vadd.f32 %v2796, %v2948
      %v2988 = vadd.f32 %v2797, %v2952
      %v2989 = vadd.f32 %v2798, %v2955
      %s2990 = scalar_lea.vmem %s4, 2
      %v2991 = vld [vmem:[%s2990] sm:$0x1]
      %vm2992 = vcmask 1046528
      %v2993 = vrot.slane %v1628, 1
      %v2994 = vrot.slane %v1629, 1
      %v2995 = vsel %vm2992, %v2993, %v2994
      %v2996 = vrot.slane %v1630, 1
      %v2997 = vsel %vm2992, %v2994, %v2996
      %v2998 = vrot.slane %v1631, 1
      %v2999 = vsel %vm2992, %v2996, %v2998
      %v3000 = vrot.slane %v1632, 1
      %v3001 = vsel %vm2992, %v2998, %v3000
      %v3002 = vrot.slane %v1633, 1
      %v3003 = vsel %vm2992, %v3000, %v3002
      %v3004 = vrot.slane %v1634, 1
      %v3005 = vsel %vm2992, %v3002, %v3004
      %v3006 = vrot.slane %v1635, 1
      %v3007 = vsel %vm2992, %v3004, %v3006
      %v3008 = vrot.slane %v1636, 1
      %v3009 = vsel %vm2992, %v3006, %v3008
      %v3010 = vrot.slane %v1637, 1
      %v3011 = vsel %vm2992, %v3008, %v3010
      %v3012 = vrot.slane %v1638, 1
      %v3013 = vsel %vm2992, %v3010, %v3012
      %v3014 = vrot.slane %v1639, 1
      %v3015 = vsel %vm2992, %v3012, %v3014
      %v3016 = vrot.slane %v1640, 1
      %v3017 = vsel %vm2992, %v3014, %v3016
      %v3018 = vrot.slane %v1641, 1
      %v3019 = vsel %vm2992, %v3016, %v3018
      %v3020 = vrot.slane %v1642, 1
      %v3021 = vsel %vm2992, %v3018, %v3020
      %v3022 = vrot.slane %v1643, 1
      %v3023 = vsel %vm2992, %v3020, %v3022
      %v3024 = vrot.slane %v1644, 1
      %v3025 = vsel %vm2992, %v3022, %v3024
      %v3026 = vrot.slane %v1645, 1
      %v3027 = vsel %vm2992, %v3024, %v3026
      %v3028 = vrot.slane %v1646, 1
      %v3029 = vsel %vm2992, %v3026, %v3028
      %v3030 = vrot.slane %v1647, 1
      %v3031 = vsel %vm2992, %v3028, %v3030
      %v3032 = vrot.slane %v1648, 1
      %v3033 = vsel %vm2992, %v3030, %v3032
      %v3034 = vrot.slane %v1649, 1
      %v3035 = vsel %vm2992, %v3032, %v3034
      %v3036 = vrot.slane %v1650, 1
      %v3037 = vsel %vm2992, %v3034, %v3036
      %v3038 = vrot.slane %v1651, 1
      %v3039 = vsel %vm2992, %v3036, %v3038
      %v3040 = vrot.slane %v2010, 1
      %v3041 = vsel %vm2992, %v3038, %v3040
      %v3043 = vsel %vm1432, %v2995, 0
      %v3046 = vsel %vm1432, %v2997, 0
      %v3049 = vsel %vm1432, %v2999, 0
      %v3052 = vsel %vm1432, %v3001, 0
      %v3055 = vsel %vm1432, %v3003, 0
      %v3058 = vsel %vm1432, %v3005, 0
      %v3061 = vsel %vm1432, %v3007, 0
      %v3064 = vsel %vm1432, %v3009, 0
      %v3067 = vsel %vm1432, %v3011, 0
      %v3070 = vsel %vm1432, %v3013, 0
      %v3073 = vsel %vm1432, %v3015, 0
      %v3076 = vsel %vm1432, %v3017, 0
      %v3079 = vsel %vm1432, %v3019, 0
      %v3082 = vsel %vm1432, %v3021, 0
      %v3085 = vsel %vm1432, %v3023, 0
      %v3088 = vsel %vm1432, %v3025, 0
      %v3091 = vsel %vm1432, %v3027, 0
      %v3094 = vsel %vm1432, %v3029, 0
      %v3097 = vsel %vm1432, %v3031, 0
      %v3100 = vsel %vm1432, %v3033, 0
      %v3103 = vsel %vm1432, %v3035, 0
      %v3106 = vsel %vm1432, %v3037, 0
      %v3109 = vsel %vm1432, %v3039, 0
      %v3112 = vsel %vm1432, %v3041, 0
      %v3115 = vsel %vm1505, %v2991, 0
      %3117 = vmatpush.bf16.msra.mxu0 0
      %3118 = vmatpush.bf16.msra.mxu0 0
      %3119 = vmatpush.bf16.msra.mxu0 0
      %3120 = vmatpush.bf16.msra.mxu0 0
      %3121 = vmatpush.bf16.msra.mxu0 0
      %3122 = vmatpush.bf16.msra.mxu0 0
      %3123 = vmatpush.bf16.msra.mxu0 0
      %3124 = vmatpush.bf16.msra.mxu0 %v3115
      %3125 = vmatmul.bf16.gmra.mxu0 %v3043
      %v3126 = vpop.f32.mrf.mxu0
      %v3127 = vadd.f32 0.0, %v3126
      %v3128 = vpop.f32.mrf.mxu0
      %v3129 = vadd.f32 0.0, %v3128
      %3130 = vmatmul.bf16.gmra.mxu0 %v3046
      %v3131 = vpop.f32.mrf.mxu0
      %v3132 = vpop.f32.mrf.mxu0
      %v3133 = vadd.f32 0.0, %v3132
      %3134 = vmatmul.bf16.gmra.mxu0 %v3049
      %v3135 = vpop.f32.mrf.mxu0
      %v3136 = vadd.f32 0.0, %v3135
      %v3137 = vpop.f32.mrf.mxu0
      %3138 = vmatmul.bf16.gmra.mxu0 %v3052
      %v3139 = vpop.f32.mrf.mxu0
      %v3140 = vadd.f32 0.0, %v3139
      %v3141 = vpop.f32.mrf.mxu0
      %v3142 = vadd.f32 0.0, %v3141
      %3143 = vmatmul.bf16.gmra.mxu0 %v3055
      %v3144 = vpop.f32.mrf.mxu0
      %v3145 = vpop.f32.mrf.mxu0
      %v3146 = vadd.f32 0.0, %v3145
      %3147 = vmatmul.bf16.gmra.mxu0 %v3058
      %v3148 = vpop.f32.mrf.mxu0
      %v3149 = vadd.f32 0.0, %v3148
      %v3150 = vpop.f32.mrf.mxu0
      %3151 = vmatmul.bf16.gmra.mxu0 %v3061
      %v3152 = vpop.f32.mrf.mxu0
      %v3153 = vadd.f32 0.0, %v3152
      %v3154 = vpop.f32.mrf.mxu0
      %v3155 = vadd.f32 0.0, %v3154
      %3156 = vmatmul.bf16.gmra.mxu0 %v3064
      %v3157 = vpop.f32.mrf.mxu0
      %v3158 = vpop.f32.mrf.mxu0
      %v3159 = vadd.f32 0.0, %v3158
      %3160 = vmatmul.bf16.gmra.mxu0 %v3067
      %v3161 = vpop.f32.mrf.mxu0
      %v3162 = vadd.f32 0.0, %v3161
      %v3163 = vpop.f32.mrf.mxu0
      %3164 = vmatmul.bf16.gmra.mxu0 %v3070
      %v3165 = vpop.f32.mrf.mxu0
      %v3166 = vadd.f32 0.0, %v3165
      %v3167 = vpop.f32.mrf.mxu0
      %v3168 = vadd.f32 0.0, %v3167
      %3169 = vmatmul.bf16.gmra.mxu0 %v3073
      %v3170 = vpop.f32.mrf.mxu0
      %v3171 = vpop.f32.mrf.mxu0
      %v3172 = vadd.f32 0.0, %v3171
      %3173 = vmatmul.bf16.gmra.mxu0 %v3076
      %v3174 = vpop.f32.mrf.mxu0
      %v3175 = vadd.f32 0.0, %v3174
      %v3176 = vpop.f32.mrf.mxu0
      %3177 = vmatmul.bf16.gmra.mxu0 %v3079
      %v3178 = vpop.f32.mrf.mxu0
      %v3179 = vadd.f32 0.0, %v3178
      %v3180 = vpop.f32.mrf.mxu0
      %v3181 = vadd.f32 0.0, %v3180
      %3182 = vmatmul.bf16.gmra.mxu0 %v3082
      %v3183 = vpop.f32.mrf.mxu0
      %v3184 = vpop.f32.mrf.mxu0
      %v3185 = vadd.f32 0.0, %v3184
      %3186 = vmatmul.bf16.gmra.mxu0 %v3085
      %v3187 = vpop.f32.mrf.mxu0
      %v3188 = vadd.f32 0.0, %v3187
      %v3189 = vpop.f32.mrf.mxu0
      %3190 = vmatmul.bf16.gmra.mxu0 %v3088
      %v3191 = vpop.f32.mrf.mxu0
      %v3192 = vadd.f32 0.0, %v3191
      %v3193 = vpop.f32.mrf.mxu0
      %v3194 = vadd.f32 0.0, %v3193
      %3195 = vmatmul.bf16.gmra.mxu0 %v3091
      %v3196 = vpop.f32.mrf.mxu0
      %v3197 = vpop.f32.mrf.mxu0
      %v3198 = vadd.f32 0.0, %v3197
      %3199 = vmatmul.bf16.gmra.mxu0 %v3094
      %v3200 = vpop.f32.mrf.mxu0
      %v3201 = vadd.f32 0.0, %v3200
      %v3202 = vpop.f32.mrf.mxu0
      %3203 = vmatmul.bf16.gmra.mxu0 %v3097
      %v3204 = vpop.f32.mrf.mxu0
      %v3205 = vadd.f32 0.0, %v3204
      %v3206 = vpop.f32.mrf.mxu0
      %v3207 = vadd.f32 0.0, %v3206
      %3208 = vmatmul.bf16.gmra.mxu0 %v3100
      %v3209 = vpop.f32.mrf.mxu0
      %v3210 = vpop.f32.mrf.mxu0
      %v3211 = vadd.f32 0.0, %v3210
      %3212 = vmatmul.bf16.gmra.mxu0 %v3103
      %v3213 = vpop.f32.mrf.mxu0
      %v3214 = vadd.f32 0.0, %v3213
      %v3215 = vpop.f32.mrf.mxu0
      %3216 = vmatmul.bf16.gmra.mxu0 %v3106
      %v3217 = vpop.f32.mrf.mxu0
      %v3218 = vadd.f32 0.0, %v3217
      %v3219 = vpop.f32.mrf.mxu0
      %v3220 = vadd.f32 0.0, %v3219
      %3221 = vmatmul.bf16.gmra.mxu0 %v3109
      %v3222 = vpop.f32.mrf.mxu0
      %v3223 = vpop.f32.mrf.mxu0
      %v3224 = vadd.f32 0.0, %v3223
      %3225 = vmatmul.bf16.gmra.mxu0 %v3112
      %v3226 = vpop.f32.mrf.mxu0
      %v3227 = vadd.f32 0.0, %v3226
      %v3228 = vpop.f32.mrf.mxu0
      %3229 = vdwg.mxu0
      %v3230 = vadd.f32 %v2958, %v3127
      %v3231 = vadd.f32 %v2959, %v3129
      %v3232 = vadd.f32 %v2960, %v3133
      %v3233 = vadd.f32 %v2961, %v3136
      %v3234 = vadd.f32 %v2962, %v3140
      %v3235 = vadd.f32 %v2963, %v3142
      %v3236 = vadd.f32 %v2964, %v3146
      %v3237 = vadd.f32 %v2965, %v3149
      %v3238 = vadd.f32 %v2966, %v3153
      %v3239 = vadd.f32 %v2967, %v3155
      %v3240 = vadd.f32 %v2968, %v3159
      %v3241 = vadd.f32 %v2969, %v3162
      %v3242 = vadd.f32 %v2970, %v3166
      %v3243 = vadd.f32 %v2971, %v3168
      %v3244 = vadd.f32 %v2972, %v3172
      %v3245 = vadd.f32 %v2973, %v3175
      %v3246 = vadd.f32 %v2974, %v3179
      %v3247 = vadd.f32 %v2975, %v3181
      %v3248 = vadd.f32 %v2976, %v3185
      %v3249 = vadd.f32 %v2977, %v3188
      %v3250 = vadd.f32 %v2978, %v3192
      %v3251 = vadd.f32 %v2979, %v3194
      %v3252 = vadd.f32 %v2980, %v3198
      %v3253 = vadd.f32 %v2981, %v3201
      %v3254 = vadd.f32 %v2982, %v3205
      %v3255 = vadd.f32 %v2983, %v3207
      %v3256 = vadd.f32 %v2984, %v3211
      %v3257 = vadd.f32 %v2985, %v3214
      %v3258 = vadd.f32 %v2986, %v3218
      %v3259 = vadd.f32 %v2987, %v3220
      %v3260 = vadd.f32 %v2988, %v3224
      %v3261 = vadd.f32 %v2989, %v3227
      %s3262 = scalar_lea.vmem %s4, 5
      %v3263 = vld [vmem:[%s3262] sm:$0x1]
      %v3264 = vrot.slane %v1408, 1
      %v3265 = vrot.slane %v1409, 1
      %v3266 = vsel %vm2992, %v3264, %v3265
      %v3267 = vrot.slane %v1410, 1
      %v3268 = vsel %vm2992, %v3265, %v3267
      %v3269 = vrot.slane %v1411, 1
      %v3270 = vsel %vm2992, %v3267, %v3269
      %v3271 = vrot.slane %v1412, 1
      %v3272 = vsel %vm2992, %v3269, %v3271
      %v3273 = vrot.slane %v1413, 1
      %v3274 = vsel %vm2992, %v3271, %v3273
      %v3275 = vrot.slane %v1414, 1
      %v3276 = vsel %vm2992, %v3273, %v3275
      %v3277 = vrot.slane %v1415, 1
      %v3278 = vsel %vm2992, %v3275, %v3277
      %v3279 = vrot.slane %v1416, 1
      %v3280 = vsel %vm2992, %v3277, %v3279
      %v3281 = vrot.slane %v1417, 1
      %v3282 = vsel %vm2992, %v3279, %v3281
      %v3283 = vrot.slane %v1418, 1
      %v3284 = vsel %vm2992, %v3281, %v3283
      %v3285 = vrot.slane %v1419, 1
      %v3286 = vsel %vm2992, %v3283, %v3285
      %v3287 = vrot.slane %v1420, 1
      %v3288 = vsel %vm2992, %v3285, %v3287
      %v3289 = vrot.slane %v1421, 1
      %v3290 = vsel %vm2992, %v3287, %v3289
      %v3291 = vrot.slane %v1422, 1
      %v3292 = vsel %vm2992, %v3289, %v3291
      %v3293 = vrot.slane %v1423, 1
      %v3294 = vsel %vm2992, %v3291, %v3293
      %v3295 = vrot.slane %v1424, 1
      %v3296 = vsel %vm2992, %v3293, %v3295
      %v3297 = vrot.slane %v1425, 1
      %v3298 = vsel %vm2992, %v3295, %v3297
      %v3299 = vrot.slane %v1426, 1
      %v3300 = vsel %vm2992, %v3297, %v3299
      %v3301 = vrot.slane %v1427, 1
      %v3302 = vsel %vm2992, %v3299, %v3301
      %v3303 = vrot.slane %v1428, 1
      %v3304 = vsel %vm2992, %v3301, %v3303
      %v3305 = vrot.slane %v1429, 1
      %v3306 = vsel %vm2992, %v3303, %v3305
      %v3307 = vrot.slane %v1430, 1
      %v3308 = vsel %vm2992, %v3305, %v3307
      %v3309 = vrot.slane %v1431, 1
      %v3310 = vsel %vm2992, %v3307, %v3309
      %v3311 = vrot.slane %v2406, 1
      %v3312 = vsel %vm2992, %v3309, %v3311
      %v3314 = vsel %vm1432, %v3266, 0
      %v3317 = vsel %vm1432, %v3268, 0
      %v3320 = vsel %vm1432, %v3270, 0
      %v3323 = vsel %vm1432, %v3272, 0
      %v3326 = vsel %vm1432, %v3274, 0
      %v3329 = vsel %vm1432, %v3276, 0
      %v3332 = vsel %vm1432, %v3278, 0
      %v3335 = vsel %vm1432, %v3280, 0
      %v3338 = vsel %vm1432, %v3282, 0
      %v3341 = vsel %vm1432, %v3284, 0
      %v3344 = vsel %vm1432, %v3286, 0
      %v3347 = vsel %vm1432, %v3288, 0
      %v3350 = vsel %vm1432, %v3290, 0
      %v3353 = vsel %vm1432, %v3292, 0
      %v3356 = vsel %vm1432, %v3294, 0
      %v3359 = vsel %vm1432, %v3296, 0
      %v3362 = vsel %vm1432, %v3298, 0
      %v3365 = vsel %vm1432, %v3300, 0
      %v3368 = vsel %vm1432, %v3302, 0
      %v3371 = vsel %vm1432, %v3304, 0
      %v3374 = vsel %vm1432, %v3306, 0
      %v3377 = vsel %vm1432, %v3308, 0
      %v3380 = vsel %vm1432, %v3310, 0
      %v3383 = vsel %vm1432, %v3312, 0
      %v3386 = vsel %vm1505, %v3263, 0
      %3388 = vmatpush.bf16.msra.mxu0 0
      %3389 = vmatpush.bf16.msra.mxu0 0
      %3390 = vmatpush.bf16.msra.mxu0 0
      %3391 = vmatpush.bf16.msra.mxu0 0
      %3392 = vmatpush.bf16.msra.mxu0 0
      %3393 = vmatpush.bf16.msra.mxu0 0
      %3394 = vmatpush.bf16.msra.mxu0 0
      %3395 = vmatpush.bf16.msra.mxu0 %v3386
      %3396 = vmatmul.bf16.gmra.mxu0 %v3314
      %v3397 = vpop.f32.mrf.mxu0
      %v3398 = vadd.f32 0.0, %v3397
      %v3399 = vpop.f32.mrf.mxu0
      %v3400 = vadd.f32 0.0, %v3399
      %3401 = vmatmul.bf16.gmra.mxu0 %v3317
      %v3402 = vpop.f32.mrf.mxu0
      %v3403 = vpop.f32.mrf.mxu0
      %v3404 = vadd.f32 0.0, %v3403
      %3405 = vmatmul.bf16.gmra.mxu0 %v3320
      %v3406 = vpop.f32.mrf.mxu0
      %v3407 = vadd.f32 0.0, %v3406
      %v3408 = vpop.f32.mrf.mxu0
      %3409 = vmatmul.bf16.gmra.mxu0 %v3323
      %v3410 = vpop.f32.mrf.mxu0
      %v3411 = vadd.f32 0.0, %v3410
      %v3412 = vpop.f32.mrf.mxu0
      %v3413 = vadd.f32 0.0, %v3412
      %3414 = vmatmul.bf16.gmra.mxu0 %v3326
      %v3415 = vpop.f32.mrf.mxu0
      %v3416 = vpop.f32.mrf.mxu0
      %v3417 = vadd.f32 0.0, %v3416
      %3418 = vmatmul.bf16.gmra.mxu0 %v3329
      %v3419 = vpop.f32.mrf.mxu0
      %v3420 = vadd.f32 0.0, %v3419
      %v3421 = vpop.f32.mrf.mxu0
      %3422 = vmatmul.bf16.gmra.mxu0 %v3332
      %v3423 = vpop.f32.mrf.mxu0
      %v3424 = vadd.f32 0.0, %v3423
      %v3425 = vpop.f32.mrf.mxu0
      %v3426 = vadd.f32 0.0, %v3425
      %3427 = vmatmul.bf16.gmra.mxu0 %v3335
      %v3428 = vpop.f32.mrf.mxu0
      %v3429 = vpop.f32.mrf.mxu0
      %v3430 = vadd.f32 0.0, %v3429
      %3431 = vmatmul.bf16.gmra.mxu0 %v3338
      %v3432 = vpop.f32.mrf.mxu0
      %v3433 = vadd.f32 0.0, %v3432
      %v3434 = vpop.f32.mrf.mxu0
      %3435 = vmatmul.bf16.gmra.mxu0 %v3341
      %v3436 = vpop.f32.mrf.mxu0
      %v3437 = vadd.f32 0.0, %v3436
      %v3438 = vpop.f32.mrf.mxu0
      %v3439 = vadd.f32 0.0, %v3438
      %3440 = vmatmul.bf16.gmra.mxu0 %v3344
      %v3441 = vpop.f32.mrf.mxu0
      %v3442 = vpop.f32.mrf.mxu0
      %v3443 = vadd.f32 0.0, %v3442
      %3444 = vmatmul.bf16.gmra.mxu0 %v3347
      %v3445 = vpop.f32.mrf.mxu0
      %v3446 = vadd.f32 0.0, %v3445
      %v3447 = vpop.f32.mrf.mxu0
      %3448 = vmatmul.bf16.gmra.mxu0 %v3350
      %v3449 = vpop.f32.mrf.mxu0
      %v3450 = vadd.f32 0.0, %v3449
      %v3451 = vpop.f32.mrf.mxu0
      %v3452 = vadd.f32 0.0, %v3451
      %3453 = vmatmul.bf16.gmra.mxu0 %v3353
      %v3454 = vpop.f32.mrf.mxu0
      %v3455 = vpop.f32.mrf.mxu0
      %v3456 = vadd.f32 0.0, %v3455
      %3457 = vmatmul.bf16.gmra.mxu0 %v3356
      %v3458 = vpop.f32.mrf.mxu0
      %v3459 = vadd.f32 0.0, %v3458
      %v3460 = vpop.f32.mrf.mxu0
      %3461 = vmatmul.bf16.gmra.mxu0 %v3359
      %v3462 = vpop.f32.mrf.mxu0
      %v3463 = vadd.f32 0.0, %v3462
      %v3464 = vpop.f32.mrf.mxu0
      %v3465 = vadd.f32 0.0, %v3464
      %3466 = vmatmul.bf16.gmra.mxu0 %v3362
      %v3467 = vpop.f32.mrf.mxu0
      %v3468 = vpop.f32.mrf.mxu0
      %v3469 = vadd.f32 0.0, %v3468
      %3470 = vmatmul.bf16.gmra.mxu0 %v3365
      %v3471 = vpop.f32.mrf.mxu0
      %v3472 = vadd.f32 0.0, %v3471
      %v3473 = vpop.f32.mrf.mxu0
      %3474 = vmatmul.bf16.gmra.mxu0 %v3368
      %v3475 = vpop.f32.mrf.mxu0
      %v3476 = vadd.f32 0.0, %v3475
      %v3477 = vpop.f32.mrf.mxu0
      %v3478 = vadd.f32 0.0, %v3477
      %3479 = vmatmul.bf16.gmra.mxu0 %v3371
      %v3480 = vpop.f32.mrf.mxu0
      %v3481 = vpop.f32.mrf.mxu0
      %v3482 = vadd.f32 0.0, %v3481
      %3483 = vmatmul.bf16.gmra.mxu0 %v3374
      %v3484 = vpop.f32.mrf.mxu0
      %v3485 = vadd.f32 0.0, %v3484
      %v3486 = vpop.f32.mrf.mxu0
      %3487 = vmatmul.bf16.gmra.mxu0 %v3377
      %v3488 = vpop.f32.mrf.mxu0
      %v3489 = vadd.f32 0.0, %v3488
      %v3490 = vpop.f32.mrf.mxu0
      %v3491 = vadd.f32 0.0, %v3490
      %3492 = vmatmul.bf16.gmra.mxu0 %v3380
      %v3493 = vpop.f32.mrf.mxu0
      %v3494 = vpop.f32.mrf.mxu0
      %v3495 = vadd.f32 0.0, %v3494
      %3496 = vmatmul.bf16.gmra.mxu0 %v3383
      %v3497 = vpop.f32.mrf.mxu0
      %v3498 = vadd.f32 0.0, %v3497
      %v3499 = vpop.f32.mrf.mxu0
      %3500 = vdwg.mxu0
      %v3501 = vadd.f32 %v3230, %v3398
      %v3502 = vadd.f32 %v3231, %v3400
      %v3503 = vadd.f32 %v3232, %v3404
      %v3504 = vadd.f32 %v3233, %v3407
      %v3505 = vadd.f32 %v3234, %v3411
      %v3506 = vadd.f32 %v3235, %v3413
      %v3507 = vadd.f32 %v3236, %v3417
      %v3508 = vadd.f32 %v3237, %v3420
      %v3509 = vadd.f32 %v3238, %v3424
      %v3510 = vadd.f32 %v3239, %v3426
      %v3511 = vadd.f32 %v3240, %v3430
      %v3512 = vadd.f32 %v3241, %v3433
      %v3513 = vadd.f32 %v3242, %v3437
      %v3514 = vadd.f32 %v3243, %v3439
      %v3515 = vadd.f32 %v3244, %v3443
      %v3516 = vadd.f32 %v3245, %v3446
      %v3517 = vadd.f32 %v3246, %v3450
      %v3518 = vadd.f32 %v3247, %v3452
      %v3519 = vadd.f32 %v3248, %v3456
      %v3520 = vadd.f32 %v3249, %v3459
      %v3521 = vadd.f32 %v3250, %v3463
      %v3522 = vadd.f32 %v3251, %v3465
      %v3523 = vadd.f32 %v3252, %v3469
      %v3524 = vadd.f32 %v3253, %v3472
      %v3525 = vadd.f32 %v3254, %v3476
      %v3526 = vadd.f32 %v3255, %v3478
      %v3527 = vadd.f32 %v3256, %v3482
      %v3528 = vadd.f32 %v3257, %v3485
      %v3529 = vadd.f32 %v3258, %v3489
      %v3530 = vadd.f32 %v3259, %v3491
      %v3531 = vadd.f32 %v3260, %v3495
      %v3532 = vadd.f32 %v3261, %v3498
      %s3533 = scalar_lea.vmem %s4, 8
      %v3534 = vld [vmem:[%s3533] sm:$0x1]
      %v3535 = vrot.slane %v1848, 1
      %v3536 = vsel %vm2992, %v3038, %v3535
      %v3537 = vrot.slane %v1849, 1
      %v3538 = vsel %vm2992, %v3535, %v3537
      %v3539 = vrot.slane %v1850, 1
      %v3540 = vsel %vm2992, %v3537, %v3539
      %v3541 = vrot.slane %v2803, 1
      %v3542 = vsel %vm2992, %v3539, %v3541
      %v3544 = vsel %vm1432, %v3536, 0
      %v3547 = vsel %vm1432, %v3538, 0
      %v3550 = vsel %vm1432, %v3540, 0
      %v3553 = vsel %vm1432, %v3542, 0
      %v3556 = vsel %vm1505, %v3534, 0
      %3558 = vmatpush.bf16.msra.mxu0 0
      %3559 = vmatpush.bf16.msra.mxu0 0
      %3560 = vmatpush.bf16.msra.mxu0 0
      %3561 = vmatpush.bf16.msra.mxu0 0
      %3562 = vmatpush.bf16.msra.mxu0 0
      %3563 = vmatpush.bf16.msra.mxu0 0
      %3564 = vmatpush.bf16.msra.mxu0 0
      %3565 = vmatpush.bf16.msra.mxu0 %v3556
      %3566 = vmatmul.bf16.gmra.mxu0 %v3052
      %v3567 = vpop.f32.mrf.mxu0
      %v3568 = vadd.f32 0.0, %v3567
      %v3569 = vpop.f32.mrf.mxu0
      %v3570 = vadd.f32 0.0, %v3569
      %3571 = vmatmul.bf16.gmra.mxu0 %v3055
      %v3572 = vpop.f32.mrf.mxu0
      %v3573 = vpop.f32.mrf.mxu0
      %v3574 = vadd.f32 0.0, %v3573
      %3575 = vmatmul.bf16.gmra.mxu0 %v3058
      %v3576 = vpop.f32.mrf.mxu0
      %v3577 = vadd.f32 0.0, %v3576
      %v3578 = vpop.f32.mrf.mxu0
      %3579 = vmatmul.bf16.gmra.mxu0 %v3061
      %v3580 = vpop.f32.mrf.mxu0
      %v3581 = vadd.f32 0.0, %v3580
      %v3582 = vpop.f32.mrf.mxu0
      %v3583 = vadd.f32 0.0, %v3582
      %3584 = vmatmul.bf16.gmra.mxu0 %v3064
      %v3585 = vpop.f32.mrf.mxu0
      %v3586 = vpop.f32.mrf.mxu0
      %v3587 = vadd.f32 0.0, %v3586
      %3588 = vmatmul.bf16.gmra.mxu0 %v3067
      %v3589 = vpop.f32.mrf.mxu0
      %v3590 = vadd.f32 0.0, %v3589
      %v3591 = vpop.f32.mrf.mxu0
      %3592 = vmatmul.bf16.gmra.mxu0 %v3070
      %v3593 = vpop.f32.mrf.mxu0
      %v3594 = vadd.f32 0.0, %v3593
      %v3595 = vpop.f32.mrf.mxu0
      %v3596 = vadd.f32 0.0, %v3595
      %3597 = vmatmul.bf16.gmra.mxu0 %v3073
      %v3598 = vpop.f32.mrf.mxu0
      %v3599 = vpop.f32.mrf.mxu0
      %v3600 = vadd.f32 0.0, %v3599
      %3601 = vmatmul.bf16.gmra.mxu0 %v3076
      %v3602 = vpop.f32.mrf.mxu0
      %v3603 = vadd.f32 0.0, %v3602
      %v3604 = vpop.f32.mrf.mxu0
      %3605 = vmatmul.bf16.gmra.mxu0 %v3079
      %v3606 = vpop.f32.mrf.mxu0
      %v3607 = vadd.f32 0.0, %v3606
      %v3608 = vpop.f32.mrf.mxu0
      %v3609 = vadd.f32 0.0, %v3608
      %3610 = vmatmul.bf16.gmra.mxu0 %v3082
      %v3611 = vpop.f32.mrf.mxu0
      %v3612 = vpop.f32.mrf.mxu0
      %v3613 = vadd.f32 0.0, %v3612
      %3614 = vmatmul.bf16.gmra.mxu0 %v3085
      %v3615 = vpop.f32.mrf.mxu0
      %v3616 = vadd.f32 0.0, %v3615
      %v3617 = vpop.f32.mrf.mxu0
      %3618 = vmatmul.bf16.gmra.mxu0 %v3088
      %v3619 = vpop.f32.mrf.mxu0
      %v3620 = vadd.f32 0.0, %v3619
      %v3621 = vpop.f32.mrf.mxu0
      %v3622 = vadd.f32 0.0, %v3621
      %3623 = vmatmul.bf16.gmra.mxu0 %v3091
      %v3624 = vpop.f32.mrf.mxu0
      %v3625 = vpop.f32.mrf.mxu0
      %v3626 = vadd.f32 0.0, %v3625
      %3627 = vmatmul.bf16.gmra.mxu0 %v3094
      %v3628 = vpop.f32.mrf.mxu0
      %v3629 = vadd.f32 0.0, %v3628
      %v3630 = vpop.f32.mrf.mxu0
      %3631 = vmatmul.bf16.gmra.mxu0 %v3097
      %v3632 = vpop.f32.mrf.mxu0
      %v3633 = vadd.f32 0.0, %v3632
      %v3634 = vpop.f32.mrf.mxu0
      %v3635 = vadd.f32 0.0, %v3634
      %3636 = vmatmul.bf16.gmra.mxu0 %v3100
      %v3637 = vpop.f32.mrf.mxu0
      %v3638 = vpop.f32.mrf.mxu0
      %v3639 = vadd.f32 0.0, %v3638
      %3640 = vmatmul.bf16.gmra.mxu0 %v3103
      %v3641 = vpop.f32.mrf.mxu0
      %v3642 = vadd.f32 0.0, %v3641
      %v3643 = vpop.f32.mrf.mxu0
      %3644 = vmatmul.bf16.gmra.mxu0 %v3106
      %v3645 = vpop.f32.mrf.mxu0
      %v3646 = vadd.f32 0.0, %v3645
      %v3647 = vpop.f32.mrf.mxu0
      %v3648 = vadd.f32 0.0, %v3647
      %3649 = vmatmul.bf16.gmra.mxu0 %v3109
      %v3650 = vpop.f32.mrf.mxu0
      %v3651 = vpop.f32.mrf.mxu0
      %v3652 = vadd.f32 0.0, %v3651
      %3653 = vmatmul.bf16.gmra.mxu0 %v3544
      %v3654 = vpop.f32.mrf.mxu0
      %v3655 = vadd.f32 0.0, %v3654
      %v3656 = vpop.f32.mrf.mxu0
      %3657 = vmatmul.bf16.gmra.mxu0 %v3547
      %v3658 = vpop.f32.mrf.mxu0
      %v3659 = vadd.f32 0.0, %v3658
      %v3660 = vpop.f32.mrf.mxu0
      %v3661 = vadd.f32 0.0, %v3660
      %3662 = vmatmul.bf16.gmra.mxu0 %v3550
      %v3663 = vpop.f32.mrf.mxu0
      %v3664 = vpop.f32.mrf.mxu0
      %v3665 = vadd.f32 0.0, %v3664
      %3666 = vmatmul.bf16.gmra.mxu0 %v3553
      %v3667 = vpop.f32.mrf.mxu0
      %v3668 = vadd.f32 0.0, %v3667
      %v3669 = vpop.f32.mrf.mxu0
      %3670 = vdwg.mxu0
      %v3671 = vadd.f32 %v3501, %v3568
      %v3672 = vadd.f32 %v3502, %v3570
      %v3673 = vadd.f32 %v3503, %v3574
      %v3674 = vadd.f32 %v3504, %v3577
      %v3675 = vadd.f32 %v3505, %v3581
      %v3676 = vadd.f32 %v3506, %v3583
      %v3677 = vadd.f32 %v3507, %v3587
      %v3678 = vadd.f32 %v3508, %v3590
      %v3679 = vadd.f32 %v3509, %v3594
      %v3680 = vadd.f32 %v3510, %v3596
      %v3681 = vadd.f32 %v3511, %v3600
      %v3682 = vadd.f32 %v3512, %v3603
      %v3683 = vadd.f32 %v3513, %v3607
      %v3684 = vadd.f32 %v3514, %v3609
      %v3685 = vadd.f32 %v3515, %v3613
      %v3686 = vadd.f32 %v3516, %v3616
      %v3687 = vadd.f32 %v3517, %v3620
      %v3688 = vadd.f32 %v3518, %v3622
      %v3689 = vadd.f32 %v3519, %v3626
      %v3690 = vadd.f32 %v3520, %v3629
      %v3691 = vadd.f32 %v3521, %v3633
      %v3692 = vadd.f32 %v3522, %v3635
      %v3693 = vadd.f32 %v3523, %v3639
      %v3694 = vadd.f32 %v3524, %v3642
      %v3695 = vadd.f32 %v3525, %v3646
      %v3696 = vadd.f32 %v3526, %v3648
      %v3697 = vadd.f32 %v3527, %v3652
      %v3698 = vadd.f32 %v3528, %v3655
      %v3699 = vadd.f32 %v3529, %v3659
      %v3700 = vadd.f32 %v3530, %v3661
      %v3701 = vadd.f32 %v3531, %v3665
      %v3702 = vadd.f32 %v3532, %v3668
      %v3703 = vld [vmem:[%s5] sm:$0x1]
      %v3705 = vperm.slane %v3703, 0
      %v3707 = vmul.f32 %v3671, %v3705
      %v3708 = vmul.f32 %v3672, %v3705
      %v3709 = vmul.f32 %v3673, %v3705
      %v3710 = vmul.f32 %v3674, %v3705
      %v3711 = vmul.f32 %v3675, %v3705
      %v3712 = vmul.f32 %v3676, %v3705
      %v3713 = vmul.f32 %v3677, %v3705
      %v3714 = vmul.f32 %v3678, %v3705
      %v3715 = vmul.f32 %v3679, %v3705
      %v3716 = vmul.f32 %v3680, %v3705
      %v3717 = vmul.f32 %v3681, %v3705
      %v3718 = vmul.f32 %v3682, %v3705
      %v3719 = vmul.f32 %v3683, %v3705
      %v3720 = vmul.f32 %v3684, %v3705
      %v3721 = vmul.f32 %v3685, %v3705
      %v3722 = vmul.f32 %v3686, %v3705
      %v3723 = vmul.f32 %v3687, %v3705
      %v3724 = vmul.f32 %v3688, %v3705
      %v3725 = vmul.f32 %v3689, %v3705
      %v3726 = vmul.f32 %v3690, %v3705
      %v3727 = vmul.f32 %v3691, %v3705
      %v3728 = vmul.f32 %v3692, %v3705
      %v3729 = vmul.f32 %v3693, %v3705
      %v3730 = vmul.f32 %v3694, %v3705
      %v3731 = vmul.f32 %v3695, %v3705
      %v3732 = vmul.f32 %v3696, %v3705
      %v3733 = vmul.f32 %v3697, %v3705
      %v3734 = vmul.f32 %v3698, %v3705
      %v3735 = vmul.f32 %v3699, %v3705
      %v3736 = vmul.f32 %v3700, %v3705
      %v3737 = vmul.f32 %v3701, %v3705
      %v3738 = vmul.f32 %v3702, %v3705
      %v3739 = vld [vmem:[%s6] sm:$0x1]
      %v3741 = vperm.slane %v3739, 0
      %v3743 = vadd.f32 %v3707, %v3741
      %v3744 = vadd.f32 %v3708, %v3741
      %v3745 = vadd.f32 %v3709, %v3741
      %v3746 = vadd.f32 %v3710, %v3741
      %v3747 = vadd.f32 %v3711, %v3741
      %v3748 = vadd.f32 %v3712, %v3741
      %v3749 = vadd.f32 %v3713, %v3741
      %v3750 = vadd.f32 %v3714, %v3741
      %v3751 = vadd.f32 %v3715, %v3741
      %v3752 = vadd.f32 %v3716, %v3741
      %v3753 = vadd.f32 %v3717, %v3741
      %v3754 = vadd.f32 %v3718, %v3741
      %v3755 = vadd.f32 %v3719, %v3741
      %v3756 = vadd.f32 %v3720, %v3741
      %v3757 = vadd.f32 %v3721, %v3741
      %v3758 = vadd.f32 %v3722, %v3741
      %v3759 = vadd.f32 %v3723, %v3741
      %v3760 = vadd.f32 %v3724, %v3741
      %v3761 = vadd.f32 %v3725, %v3741
      %v3762 = vadd.f32 %v3726, %v3741
      %v3763 = vadd.f32 %v3727, %v3741
      %v3764 = vadd.f32 %v3728, %v3741
      %v3765 = vadd.f32 %v3729, %v3741
      %v3766 = vadd.f32 %v3730, %v3741
      %v3767 = vadd.f32 %v3731, %v3741
      %v3768 = vadd.f32 %v3732, %v3741
      %v3769 = vadd.f32 %v3733, %v3741
      %v3770 = vadd.f32 %v3734, %v3741
      %v3771 = vadd.f32 %v3735, %v3741
      %v3772 = vadd.f32 %v3736, %v3741
      %v3773 = vadd.f32 %v3737, %v3741
      %v3774 = vadd.f32 %v3738, %v3741
      %v3775 = vmax.f32 %v3743, 0.0
      %v3776 = vmax.f32 %v3744, 0.0
      %v3777 = vmax.f32 %v3745, 0.0
      %v3778 = vmax.f32 %v3746, 0.0
      %v3779 = vmax.f32 %v3747, 0.0
      %v3780 = vmax.f32 %v3748, 0.0
      %v3781 = vmax.f32 %v3749, 0.0
      %v3782 = vmax.f32 %v3750, 0.0
      %v3783 = vmax.f32 %v3751, 0.0
      %v3784 = vmax.f32 %v3752, 0.0
      %v3785 = vmax.f32 %v3753, 0.0
      %v3786 = vmax.f32 %v3754, 0.0
      %v3787 = vmax.f32 %v3755, 0.0
      %v3788 = vmax.f32 %v3756, 0.0
      %v3789 = vmax.f32 %v3757, 0.0
      %v3790 = vmax.f32 %v3758, 0.0
      %v3791 = vmax.f32 %v3759, 0.0
      %v3792 = vmax.f32 %v3760, 0.0
      %v3793 = vmax.f32 %v3761, 0.0
      %v3794 = vmax.f32 %v3762, 0.0
      %v3795 = vmax.f32 %v3763, 0.0
      %v3796 = vmax.f32 %v3764, 0.0
      %v3797 = vmax.f32 %v3765, 0.0
      %v3798 = vmax.f32 %v3766, 0.0
      %v3799 = vmax.f32 %v3767, 0.0
      %v3800 = vmax.f32 %v3768, 0.0
      %v3801 = vmax.f32 %v3769, 0.0
      %v3802 = vmax.f32 %v3770, 0.0
      %v3803 = vmax.f32 %v3771, 0.0
      %v3804 = vmax.f32 %v3772, 0.0
      %v3805 = vmax.f32 %v3773, 0.0
      %v3806 = vmax.f32 %v3774, 0.0
      %v3807 = vpack.c.bf16 %v3776, %v3775
      %v3808 = vpack.c.bf16 %v3778, %v3777
      %v3809 = vpack.c.bf16 %v3780, %v3779
      %v3810 = vpack.c.bf16 %v3782, %v3781
      %v3811 = vpack.c.bf16 %v3784, %v3783
      %v3812 = vpack.c.bf16 %v3786, %v3785
      %v3813 = vpack.c.bf16 %v3788, %v3787
      %v3814 = vpack.c.bf16 %v3790, %v3789
      %v3815 = vpack.c.bf16 %v3792, %v3791
      %v3816 = vpack.c.bf16 %v3794, %v3793
      %v3817 = vpack.c.bf16 %v3796, %v3795
      %v3818 = vpack.c.bf16 %v3798, %v3797
      %v3819 = vpack.c.bf16 %v3800, %v3799
      %v3820 = vpack.c.bf16 %v3802, %v3801
      %v3821 = vpack.c.bf16 %v3804, %v3803
      %v3822 = vpack.c.bf16 %v3806, %v3805
      %v3823 = vld [vmem:[%s7] sm:$0x1]
      %v3825 = vsel %vm1432, %v3807, 0
      %v3828 = vsel %vm1432, %v3808, 0
      %v3831 = vsel %vm1432, %v3809, 0
      %v3834 = vsel %vm1432, %v3810, 0
      %v3837 = vsel %vm1432, %v3811, 0
      %v3840 = vsel %vm1432, %v3812, 0
      %v3843 = vsel %vm1432, %v3813, 0
      %v3846 = vsel %vm1432, %v3814, 0
      %v3849 = vsel %vm1432, %v3815, 0
      %v3852 = vsel %vm1432, %v3816, 0
      %v3855 = vsel %vm1432, %v3817, 0
      %v3858 = vsel %vm1432, %v3818, 0
      %v3861 = vsel %vm1432, %v3819, 0
      %v3864 = vsel %vm1432, %v3820, 0
      %v3867 = vsel %vm1432, %v3821, 0
      %v3870 = vsel %vm1432, %v3822, 0
      %v3873 = vsel %vm1505, %v3823, 0
      %3875 = vmatpush.bf16.msra.mxu0 0
      %3876 = vmatpush.bf16.msra.mxu0 0
      %3877 = vmatpush.bf16.msra.mxu0 0
      %3878 = vmatpush.bf16.msra.mxu0 0
      %3879 = vmatpush.bf16.msra.mxu0 0
      %3880 = vmatpush.bf16.msra.mxu0 0
      %3881 = vmatpush.bf16.msra.mxu0 0
      %3882 = vmatpush.bf16.msra.mxu0 %v3873
      %3883 = vmatmul.bf16.gmra.mxu0 %v3825
      %v3884 = vpop.f32.mrf.mxu0
      %v3885 = vadd.f32 0.0, %v3884
      %v3886 = vpop.f32.mrf.mxu0
      %v3887 = vadd.f32 0.0, %v3886
      %3888 = vmatmul.bf16.gmra.mxu0 %v3828
      %v3889 = vpop.f32.mrf.mxu0
      %v3890 = vadd.f32 0.0, %v3889
      %v3891 = vpop.f32.mrf.mxu0
      %v3892 = vadd.f32 0.0, %v3891
      %3893 = vmatmul.bf16.gmra.mxu0 %v3831
      %v3894 = vpop.f32.mrf.mxu0
      %v3895 = vadd.f32 0.0, %v3894
      %v3896 = vpop.f32.mrf.mxu0
      %v3897 = vadd.f32 0.0, %v3896
      %3898 = vmatmul.bf16.gmra.mxu0 %v3834
      %v3899 = vpop.f32.mrf.mxu0
      %v3900 = vadd.f32 0.0, %v3899
      %v3901 = vpop.f32.mrf.mxu0
      %v3902 = vadd.f32 0.0, %v3901
      %3903 = vmatmul.bf16.gmra.mxu0 %v3837
      %v3904 = vpop.f32.mrf.mxu0
      %v3905 = vadd.f32 0.0, %v3904
      %v3906 = vpop.f32.mrf.mxu0
      %v3907 = vadd.f32 0.0, %v3906
      %3908 = vmatmul.bf16.gmra.mxu0 %v3840
      %v3909 = vpop.f32.mrf.mxu0
      %v3910 = vadd.f32 0.0, %v3909
      %v3911 = vpop.f32.mrf.mxu0
      %v3912 = vadd.f32 0.0, %v3911
      %3913 = vmatmul.bf16.gmra.mxu0 %v3843
      %v3914 = vpop.f32.mrf.mxu0
      %v3915 = vadd.f32 0.0, %v3914
      %v3916 = vpop.f32.mrf.mxu0
      %v3917 = vadd.f32 0.0, %v3916
      %3918 = vmatmul.bf16.gmra.mxu0 %v3846
      %v3919 = vpop.f32.mrf.mxu0
      %v3920 = vadd.f32 0.0, %v3919
      %v3921 = vpop.f32.mrf.mxu0
      %v3922 = vadd.f32 0.0, %v3921
      %3923 = vmatmul.bf16.gmra.mxu0 %v3849
      %v3924 = vpop.f32.mrf.mxu0
      %v3925 = vadd.f32 0.0, %v3924
      %v3926 = vpop.f32.mrf.mxu0
      %v3927 = vadd.f32 0.0, %v3926
      %3928 = vmatmul.bf16.gmra.mxu0 %v3852
      %v3929 = vpop.f32.mrf.mxu0
      %v3930 = vadd.f32 0.0, %v3929
      %v3931 = vpop.f32.mrf.mxu0
      %v3932 = vadd.f32 0.0, %v3931
      %3933 = vmatmul.bf16.gmra.mxu0 %v3855
      %v3934 = vpop.f32.mrf.mxu0
      %v3935 = vadd.f32 0.0, %v3934
      %v3936 = vpop.f32.mrf.mxu0
      %v3937 = vadd.f32 0.0, %v3936
      %3938 = vmatmul.bf16.gmra.mxu0 %v3858
      %v3939 = vpop.f32.mrf.mxu0
      %v3940 = vadd.f32 0.0, %v3939
      %v3941 = vpop.f32.mrf.mxu0
      %v3942 = vadd.f32 0.0, %v3941
      %3943 = vmatmul.bf16.gmra.mxu0 %v3861
      %v3944 = vpop.f32.mrf.mxu0
      %v3945 = vadd.f32 0.0, %v3944
      %v3946 = vpop.f32.mrf.mxu0
      %v3947 = vadd.f32 0.0, %v3946
      %3948 = vmatmul.bf16.gmra.mxu0 %v3864
      %v3949 = vpop.f32.mrf.mxu0
      %v3950 = vadd.f32 0.0, %v3949
      %v3951 = vpop.f32.mrf.mxu0
      %v3952 = vadd.f32 0.0, %v3951
      %3953 = vmatmul.bf16.gmra.mxu0 %v3867
      %v3954 = vpop.f32.mrf.mxu0
      %v3955 = vadd.f32 0.0, %v3954
      %v3956 = vpop.f32.mrf.mxu0
      %v3957 = vadd.f32 0.0, %v3956
      %3958 = vmatmul.bf16.gmra.mxu0 %v3870
      %v3959 = vpop.f32.mrf.mxu0
      %v3960 = vadd.f32 0.0, %v3959
      %v3961 = vpop.f32.mrf.mxu0
      %v3962 = vadd.f32 0.0, %v3961
      %3963 = vdwg.mxu0
      %v3964 = vld [vmem:[%s8] sm:$0x1]
      %v3966 = vperm.slane %v3964, 0
      %v3968 = vmul.f32 %v3885, %v3966
      %v3969 = vmul.f32 %v3887, %v3966
      %v3970 = vmul.f32 %v3890, %v3966
      %v3971 = vmul.f32 %v3892, %v3966
      %v3972 = vmul.f32 %v3895, %v3966
      %v3973 = vmul.f32 %v3897, %v3966
      %v3974 = vmul.f32 %v3900, %v3966
      %v3975 = vmul.f32 %v3902, %v3966
      %v3976 = vmul.f32 %v3905, %v3966
      %v3977 = vmul.f32 %v3907, %v3966
      %v3978 = vmul.f32 %v3910, %v3966
      %v3979 = vmul.f32 %v3912, %v3966
      %v3980 = vmul.f32 %v3915, %v3966
      %v3981 = vmul.f32 %v3917, %v3966
      %v3982 = vmul.f32 %v3920, %v3966
      %v3983 = vmul.f32 %v3922, %v3966
      %v3984 = vmul.f32 %v3925, %v3966
      %v3985 = vmul.f32 %v3927, %v3966
      %v3986 = vmul.f32 %v3930, %v3966
      %v3987 = vmul.f32 %v3932, %v3966
      %v3988 = vmul.f32 %v3935, %v3966
      %v3989 = vmul.f32 %v3937, %v3966
      %v3990 = vmul.f32 %v3940, %v3966
      %v3991 = vmul.f32 %v3942, %v3966
      %v3992 = vmul.f32 %v3945, %v3966
      %v3993 = vmul.f32 %v3947, %v3966
      %v3994 = vmul.f32 %v3950, %v3966
      %v3995 = vmul.f32 %v3952, %v3966
      %v3996 = vmul.f32 %v3955, %v3966
      %v3997 = vmul.f32 %v3957, %v3966
      %v3998 = vmul.f32 %v3960, %v3966
      %v3999 = vmul.f32 %v3962, %v3966
      %v4000 = vld [vmem:[%s9] sm:$0x1]
      %v4002 = vperm.slane %v4000, 0
      %v4004 = vadd.f32 %v3968, %v4002
      %v4005 = vadd.f32 %v3969, %v4002
      %v4006 = vadd.f32 %v3970, %v4002
      %v4007 = vadd.f32 %v3971, %v4002
      %v4008 = vadd.f32 %v3972, %v4002
      %v4009 = vadd.f32 %v3973, %v4002
      %v4010 = vadd.f32 %v3974, %v4002
      %v4011 = vadd.f32 %v3975, %v4002
      %v4012 = vadd.f32 %v3976, %v4002
      %v4013 = vadd.f32 %v3977, %v4002
      %v4014 = vadd.f32 %v3978, %v4002
      %v4015 = vadd.f32 %v3979, %v4002
      %v4016 = vadd.f32 %v3980, %v4002
      %v4017 = vadd.f32 %v3981, %v4002
      %v4018 = vadd.f32 %v3982, %v4002
      %v4019 = vadd.f32 %v3983, %v4002
      %v4020 = vadd.f32 %v3984, %v4002
      %v4021 = vadd.f32 %v3985, %v4002
      %v4022 = vadd.f32 %v3986, %v4002
      %v4023 = vadd.f32 %v3987, %v4002
      %v4024 = vadd.f32 %v3988, %v4002
      %v4025 = vadd.f32 %v3989, %v4002
      %v4026 = vadd.f32 %v3990, %v4002
      %v4027 = vadd.f32 %v3991, %v4002
      %v4028 = vadd.f32 %v3992, %v4002
      %v4029 = vadd.f32 %v3993, %v4002
      %v4030 = vadd.f32 %v3994, %v4002
      %v4031 = vadd.f32 %v3995, %v4002
      %v4032 = vadd.f32 %v3996, %v4002
      %v4033 = vadd.f32 %v3997, %v4002
      %v4034 = vadd.f32 %v3998, %v4002
      %v4035 = vadd.f32 %v3999, %v4002
      %v4036 = vadd.f32 %v4004, %v361
      %v4037 = vadd.f32 %v4005, %v362
      %v4038 = vadd.f32 %v4006, %v363
      %v4039 = vadd.f32 %v4007, %v364
      %v4040 = vadd.f32 %v4008, %v365
      %v4041 = vadd.f32 %v4009, %v366
      %v4042 = vadd.f32 %v4010, %v367
      %v4043 = vadd.f32 %v4011, %v368
      %v4044 = vadd.f32 %v4012, %v369
      %v4045 = vadd.f32 %v4013, %v370
      %v4046 = vadd.f32 %v4014, %v371
      %v4047 = vadd.f32 %v4015, %v372
      %v4048 = vadd.f32 %v4016, %v373
      %v4049 = vadd.f32 %v4017, %v374
      %v4050 = vadd.f32 %v4018, %v375
      %v4051 = vadd.f32 %v4019, %v376
      %v4052 = vadd.f32 %v4020, %v377
      %v4053 = vadd.f32 %v4021, %v378
      %v4054 = vadd.f32 %v4022, %v379
      %v4055 = vadd.f32 %v4023, %v380
      %v4056 = vadd.f32 %v4024, %v381
      %v4057 = vadd.f32 %v4025, %v382
      %v4058 = vadd.f32 %v4026, %v383
      %v4059 = vadd.f32 %v4027, %v384
      %v4060 = vadd.f32 %v4028, %v385
      %v4061 = vadd.f32 %v4029, %v386
      %v4062 = vadd.f32 %v4030, %v387
      %v4063 = vadd.f32 %v4031, %v388
      %v4064 = vadd.f32 %v4032, %v389
      %v4065 = vadd.f32 %v4033, %v390
      %v4066 = vadd.f32 %v4034, %v391
      %v4067 = vadd.f32 %v4035, %v392
      %v4068 = vmax.f32 %v4036, 0.0
      %v4069 = vmax.f32 %v4037, 0.0
      %v4070 = vmax.f32 %v4038, 0.0
      %v4071 = vmax.f32 %v4039, 0.0
      %v4072 = vmax.f32 %v4040, 0.0
      %v4073 = vmax.f32 %v4041, 0.0
      %v4074 = vmax.f32 %v4042, 0.0
      %v4075 = vmax.f32 %v4043, 0.0
      %v4076 = vmax.f32 %v4044, 0.0
      %v4077 = vmax.f32 %v4045, 0.0
      %v4078 = vmax.f32 %v4046, 0.0
      %v4079 = vmax.f32 %v4047, 0.0
      %v4080 = vmax.f32 %v4048, 0.0
      %v4081 = vmax.f32 %v4049, 0.0
      %v4082 = vmax.f32 %v4050, 0.0
      %v4083 = vmax.f32 %v4051, 0.0
      %v4084 = vmax.f32 %v4052, 0.0
      %v4085 = vmax.f32 %v4053, 0.0
      %v4086 = vmax.f32 %v4054, 0.0
      %v4087 = vmax.f32 %v4055, 0.0
      %v4088 = vmax.f32 %v4056, 0.0
      %v4089 = vmax.f32 %v4057, 0.0
      %v4090 = vmax.f32 %v4058, 0.0
      %v4091 = vmax.f32 %v4059, 0.0
      %v4092 = vmax.f32 %v4060, 0.0
      %v4093 = vmax.f32 %v4061, 0.0
      %v4094 = vmax.f32 %v4062, 0.0
      %v4095 = vmax.f32 %v4063, 0.0
      %v4096 = vmax.f32 %v4064, 0.0
      %v4097 = vmax.f32 %v4065, 0.0
      %v4098 = vmax.f32 %v4066, 0.0
      %v4099 = vmax.f32 %v4067, 0.0
      %4100 = vst.msk [vmem:[%s359] sm:$0xff] %vm410, %v4068
      %4101 = vst.msk [vmem:[%s359 + $0x8] sm:$0xff] %vm410, %v4069
      %4102 = vst.msk [vmem:[%s359 + $0x10] sm:$0xff] %vm410, %v4070
      %4103 = vst.msk [vmem:[%s359 + $0x18] sm:$0xff] %vm410, %v4071
      %4104 = vst.msk [vmem:[%s359 + $0x20] sm:$0xff] %vm410, %v4072
      %4105 = vst.msk [vmem:[%s359 + $0x28] sm:$0xff] %vm410, %v4073
      %4106 = vst.msk [vmem:[%s359 + $0x30] sm:$0xff] %vm410, %v4074
      %4107 = vst.msk [vmem:[%s359 + $0x38] sm:$0xff] %vm410, %v4075
      %4108 = vst.msk [vmem:[%s359 + $0x40] sm:$0xff] %vm410, %v4076
      %4109 = vst.msk [vmem:[%s359 + $0x48] sm:$0xff] %vm410, %v4077
      %4110 = vst.msk [vmem:[%s359 + $0x50] sm:$0xff] %vm410, %v4078
      %4111 = vst.msk [vmem:[%s359 + $0x58] sm:$0xff] %vm410, %v4079
      %4112 = vst.msk [vmem:[%s359 + $0x60] sm:$0xff] %vm410, %v4080
      %4113 = vst.msk [vmem:[%s359 + $0x68] sm:$0xff] %vm410, %v4081
      %4114 = vst.msk [vmem:[%s359 + $0x70] sm:$0xff] %vm410, %v4082
      %4115 = vst.msk [vmem:[%s359 + $0x78] sm:$0xff] %vm410, %v4083
      %4116 = vst.msk [vmem:[%s359 + $0x80] sm:$0xff] %vm410, %v4084
      %4117 = vst.msk [vmem:[%s359 + $0x88] sm:$0xff] %vm410, %v4085
      %4118 = vst.msk [vmem:[%s359 + $0x90] sm:$0xff] %vm410, %v4086
      %4119 = vst.msk [vmem:[%s359 + $0x98] sm:$0xff] %vm410, %v4087
      %4120 = vst.msk [vmem:[%s359 + $0xa0] sm:$0xff] %vm410, %v4088
      %4121 = vst.msk [vmem:[%s359 + $0xa8] sm:$0xff] %vm410, %v4089
      %4122 = vst.msk [vmem:[%s359 + $0xb0] sm:$0xff] %vm410, %v4090
      %4123 = vst.msk [vmem:[%s359 + $0xb8] sm:$0xff] %vm410, %v4091
      %4124 = vst.msk [vmem:[%s359 + $0xc0] sm:$0xff] %vm410, %v4092
      %4125 = vst.msk [vmem:[%s359 + $0xc8] sm:$0xff] %vm410, %v4093
      %4126 = vst.msk [vmem:[%s359 + $0xd0] sm:$0xff] %vm410, %v4094
      %4127 = vst.msk [vmem:[%s359 + $0xd8] sm:$0xff] %vm410, %v4095
      %4128 = vst.msk [vmem:[%s359 + $0xe0] sm:$0xff] %vm410, %v4096
      %4129 = vst.msk [vmem:[%s359 + $0xe8] sm:$0xff] %vm410, %v4097
      %4130 = vst.msk [vmem:[%s359 + $0xf0] sm:$0xff] %vm410, %v4098
      %4131 = vst.msk [vmem:[%s359 + $0xf8] sm:$0xff] %vm410, %v4099
      %p4132 = scmp.lt.s32.totalorder %s21, 1
      %s4133 = scalar_select %p4132, %s21, 1
      %s4134 = smul.addr %s4133, 32
      %s4135 = smul.addr %s4134, 8
      %s4136 = scalar_lea.vmem %s10, %s4135
      // Predicated region
      $region61: #{tpu_custom_call.1} parent=59 // pred_check
        %p4137 = pneg %p254
      $region62: #{tpu_custom_call.1} parent=59 // pred_check_branch
        %4139 = sbr.rel (%p4137) target = $region64
      $region63: #{tpu_custom_call.1} parent=59 // pred_region
        _
      $region64: #{tpu_custom_call.1} parent=59 // pred_fallthru
        _
    $region60: #{tpu_custom_call.1} parent=5 // pred_fallthru
      _
    %p4140 = scmp.le.s32.totalorder 2, %s16
    // Predicated region
    $region65: #{tpu_custom_call.1} parent=5 // pred_check
      %p4141 = pneg %p4140
    $region66: #{tpu_custom_call.1} parent=5 // pred_check_branch
      %4143 = sbr.rel (%p4141) target = $region68
    $region67: #{tpu_custom_call.1} parent=5 // pred_region
      %s4144 = ssub.s32 %s16, 2
      // Predicated region
      $region69: #{tpu_custom_call.1} parent=67 // pred_check
        %p4145 = pneg %p260
      $region70: #{tpu_custom_call.1} parent=67 // pred_check_branch
        %4147 = sbr.rel (%p4145) target = $region72
      $region71: #{tpu_custom_call.1} parent=67 // pred_region
        %p4148 = scmp.lt.s32.totalorder %s22, 1
        %s4149 = scalar_select %p4148, %s22, 1
        %s4150 = smul.addr %s4149, 32
        %s4151 = smul.addr %s4150, 8
        %s4152 = scalar_lea.vmem %s10, %s4151
      $region72: #{tpu_custom_call.1} parent=67 // pred_fallthru
        _
    $region68: #{tpu_custom_call.1} parent=5 // pred_fallthru
      _
  $region6: #{tpu_custom_call.1} parent=0 // loop_footer
    %s20 = sadd.s32 1, %s16
  $region7: #{tpu_custom_call.1} parent=0 // loop_footer_branch
    %15 = sbr.rel target = $region3
  $region8: #{tpu_custom_call.1} parent=0 // loop_exit
    _

</llo_original>
